<compile_context>
chip_gen: v6e
topology: v6e:2x2x1
jax: 0.10.0
libtpu: 0.0.40
codegen_flags: <defaults>
</compile_context>

<pallas_src>
import math
import numpy as np
import jax
import jax.numpy as jnp
from jax import lax
from jax.experimental import pallas as pl
from jax.experimental.pallas import tpu as pltpu

# ----------------------------- config -----------------------------
ACTION_DIM  = 4
STATE_DIM   = 16
N_ACTIONS   = 8
HIDDEN      = 32
T_EMB_DIM   = 16
N_TIMESTEPS = 10
BATCH       = 2

# lane-dense padded feature widths (last dim -> 128 lanes)
A_PAD = 128
H_PAD = 128

# ------------- diffusion schedule (numpy, matches torch buffers) -------------
betas = np.linspace(1e-4, 0.02, N_TIMESTEPS).astype(np.float64)
alphas = 1.0 - betas
alphas_cumprod = np.cumprod(alphas, axis=0)
alphas_cumprod_prev = np.concatenate([np.ones(1), alphas_cumprod[:-1]])

sqrt_recip_alphas_cumprod   = np.sqrt(1.0 / alphas_cumprod)
sqrt_recipm1_alphas_cumprod = np.sqrt(1.0 / alphas_cumprod - 1.0)
posterior_variance = betas * (1.0 - alphas_cumprod_prev) / (1.0 - alphas_cumprod)
posterior_log_variance_clipped = np.log(np.clip(posterior_variance, 1e-20, None))
posterior_mean_coef1 = betas * np.sqrt(alphas_cumprod_prev) / (1.0 - alphas_cumprod)
posterior_mean_coef2 = (1.0 - alphas_cumprod_prev) * np.sqrt(alphas) / (1.0 - alphas_cumprod)

# Per-step fused coefficients in GRID/LOOP-STEP order s (timestep t = T-1-s),
# broadcast across 128 lanes so the in-kernel epilogue is pure vector FMAs.
#   row 0: a_t = c_pm1*c_recip + c_pm2
#   row 1: b_t = c_pm1*c_recipm1                         (rows 2..7 = padding)
# std_t = nonzero_mask * exp(0.5*log_var) is folded into the noise table on host.
_coef_np = np.zeros((N_TIMESTEPS, 8, A_PAD), np.float32)
_std_np  = np.zeros((N_TIMESTEPS,), np.float32)
for _s in range(N_TIMESTEPS):
    _t = N_TIMESTEPS - 1 - _s
    _coef_np[_s, 0, :] = (posterior_mean_coef1[_t] * sqrt_recip_alphas_cumprod[_t]
                          + posterior_mean_coef2[_t])
    _coef_np[_s, 1, :] = posterior_mean_coef1[_t] * sqrt_recipm1_alphas_cumprod[_t]
    _std_np[_s] = ((0.0 if _t == 0 else 1.0)
                   * math.exp(0.5 * posterior_log_variance_clipped[_t]))
COEF_TABLE = jnp.asarray(_coef_np)   # (T, 8, A_PAD) float32
STD_TABLE  = jnp.asarray(_std_np)    # (T,)          float32


# ----------------------------- Pallas kernel -----------------------------
def fused_ddpm_kernel(x0_ref, stproj_ref, bias1_ref, coef_ref, noise_ref,
                      w1x_ref, w2_ref, b2_ref, w3_ref, b3_ref, out_ref):
    # Everything is fully resident in VMEM; load loop-invariant operands once.
    w1x    = w1x_ref[...]
    w2     = w2_ref[...]
    b2     = b2_ref[...]
    w3     = w3_ref[...]
    b3     = b3_ref[...]
    stproj = stproj_ref[...]

    def step(s, x):
        # eps = MLP([x, t_emb, state]); state & time-embedding terms hoisted:
        #   layer1 = x @ w1x + (state @ w1s) + (t_emb(t) @ w1t + b1)
        h = jnp.dot(x, w1x, preferred_element_type=jnp.float32)
        h = jnp.maximum(h + stproj + bias1_ref[s], 0.0)
        h = jnp.maximum(jnp.dot(h, w2, preferred_element_type=jnp.float32) + b2, 0.0)
        eps = jnp.dot(h, w3, preferred_element_type=jnp.float32) + b3

        coef = coef_ref[s]                 # (8, A_PAD)
        a_t  = coef[0:1, :]                # broadcast rows
        b_t  = coef[1:2, :]
        # x_next = mean + std_t*noise; std_t pre-multiplied into noise table.
        return a_t * x - b_t * eps + noise_ref[s]

    x_final = lax.fori_loop(0, N_TIMESTEPS, step, x0_ref[...], unroll=True)
    out_ref[...] = x_final


# ----------------------------- glue (plain JAX) -----------------------------
def time_embedding(t, dim=T_EMB_DIM):
    half = dim // 2
    freqs = jnp.exp(-math.log(10000.0) * jnp.arange(half, dtype=jnp.float32) / (half - 1))
    args = jnp.float32(t) * freqs
    return jnp.concatenate([jnp.sin(args), jnp.cos(args)])[None, :]   # (1, dim)


def init_params(key):
    ks = jax.random.split(key, 7)
    s = 0.1
    return {
        "w1x": s * jax.random.normal(ks[0], (ACTION_DIM, HIDDEN), jnp.float32),
        "w1t": s * jax.random.normal(ks[1], (T_EMB_DIM, HIDDEN), jnp.float32),
        "w1s": s * jax.random.normal(ks[2], (STATE_DIM, HIDDEN), jnp.float32),
        "b1":  jnp.zeros((1, HIDDEN), jnp.float32),
        "w2":  s * jax.random.normal(ks[3], (HIDDEN, HIDDEN), jnp.float32),
        "b2":  jnp.zeros((1, HIDDEN), jnp.float32),
        "w3":  s * jax.random.normal(ks[4], (HIDDEN, ACTION_DIM), jnp.float32),
        "b3":  jnp.zeros((1, ACTION_DIM), jnp.float32),
    }


def prepare_tables(params):
    """One-time prep: pad weights to lane-dense (...,128) slabs and fold the
    time-embedding branch into a per-timestep layer-1 bias table."""
    def pad2(a, rows, cols):
        return jnp.zeros((rows, cols), jnp.float32).at[:a.shape[0], :a.shape[1]].set(a)

    # bias1[s] = time_embedding(t) @ w1t + b1, with t = T-1-s (loop-step order)
    temb = jnp.stack([time_embedding(N_TIMESTEPS - 1 - s)[0] for s in range(N_TIMESTEPS)])
    bias1 = jnp.dot(temb, params["w1t"], precision="highest") + params["b1"]   # (T, HIDDEN)
    bias1_tab = jnp.zeros((N_TIMESTEPS, 1, H_PAD), jnp.float32).at[:, 0, :HIDDEN].set(bias1)

    return {
        "w1x": pad2(params["w1x"], A_PAD, H_PAD),
        "w2":  pad2(params["w2"],  H_PAD, H_PAD),
        "b2":  pad2(params["b2"],  1,     H_PAD),
        "w3":  pad2(params["w3"],  H_PAD, A_PAD),
        "b3":  pad2(params["b3"],  1,     A_PAD),
        "w1s": params["w1s"],         # for the loop-invariant state projection
        "bias1": bias1_tab,           # (T, 1, H_PAD)
        "coef": COEF_TABLE,           # (T, 8, A_PAD): rows 0=a_t, 1=b_t
        "std":  STD_TABLE,            # (T,): folded into the noise table
    }


@jax.jit
def sample_pallas(state, x_init, noise, prep):
    """Equivalent of Diffusion_Policy.forward(state): (B, n_actions, action_dim)."""
    B = state.shape[0]
    M = B * N_ACTIONS

    # state.unsqueeze(1).expand(-1, n_actions, -1), flattened to 2-D rows
    state2d = jnp.broadcast_to(state[:, None, :], (B, N_ACTIONS, STATE_DIM)
                               ).reshape(M, STATE_DIM).astype(jnp.float32)

    # loop-invariant hoist: state projection done once per forward
    st_proj = jnp.zeros((M, H_PAD), jnp.float32).at[:, :HIDDEN].set(
        jnp.dot(state2d, prep["w1s"], precision="highest"))
    x0 = jnp.zeros((M, A_PAD), jnp.float32).at[:, :ACTION_DIM].set(x_init)
    # fold std_t into the noise table once per forward (10x-amortized hoist)
    noise_scaled = noise * prep["std"][:, None, None]
    noise_p = jnp.zeros((N_TIMESTEPS, M, A_PAD), jnp.float32
                        ).at[:, :, :ACTION_DIM].set(noise_scaled)

    vmem = pl.BlockSpec(memory_space=pltpu.MemorySpace.VMEM)
    out = pl.pallas_call(
        fused_ddpm_kernel,
        out_shape=jax.ShapeDtypeStruct((M, A_PAD), jnp.float32),
        in_specs=[vmem] * 10,     # whole arrays resident in VMEM, single invocation
        out_specs=vmem,
    )(x0, st_proj, prep["bias1"], prep["coef"], noise_p,
      prep["w1x"], prep["w2"], prep["b2"], prep["w3"], prep["b3"])

    return out[:, :ACTION_DIM].reshape(B, N_ACTIONS, ACTION_DIM)


# TODO(synk): the denoising `model` is an injected constructor argument in the PyTorch
# code (architecture unspecified); a deterministic 3-layer ReLU MLP with sinusoidal
# time embedding is used as the synthetic stand-in.

# ----------------------------- pure-JAX reference -----------------------------
def sample_reference(state, x_init, noise, params):
    B = state.shape[0]
    M = B * N_ACTIONS
    state2d = jnp.broadcast_to(state[:, None, :], (B, N_ACTIONS, STATE_DIM)
                               ).reshape(M, STATE_DIM).astype(jnp.float32)
    hp = "highest"
    x = x_init
    for s in range(N_TIMESTEPS):
        t = N_TIMESTEPS - 1 - s
        temb = time_embedding(t)
        h = (jnp.dot(x, params["w1x"], precision=hp)
             + jnp.dot(temb, params["w1t"], precision=hp)
             + jnp.dot(state2d, params["w1s"], precision=hp)
             + params["b1"])
        h = jnp.maximum(h, 0.0)
        h = jnp.maximum(jnp.dot(h, params["w2"], precision=hp) + params["b2"], 0.0)
        eps = jnp.dot(h, params["w3"], precision=hp) + params["b3"]

        x_recon = (float(sqrt_recip_alphas_cumprod[t]) * x
                   - float(sqrt_recipm1_alphas_cumprod[t]) * eps)
        mean = (float(posterior_mean_coef1[t]) * x_recon
                + float(posterior_mean_coef2[t]) * x)
        nz = 0.0 if t == 0 else 1.0
        x = mean + nz * math.exp(0.5 * posterior_log_variance_clipped[t]) * noise[s]
    return x.reshape(B, N_ACTIONS, ACTION_DIM)


if __name__ == "__main__":
    key = jax.random.PRNGKey(0)
    k_param, k_state, k_x, k_noise = jax.random.split(key, 4)
    params = init_params(k_param)
    state = jax.random.normal(k_state, (BATCH, STATE_DIM), jnp.float32)

    M = BATCH * N_ACTIONS
    x_init = jax.random.normal(k_x, (M, ACTION_DIM), jnp.float32)
    noise = jax.random.normal(k_noise, (N_TIMESTEPS, M, ACTION_DIM), jnp.float32)

    prep = prepare_tables(params)
    actions = sample_pallas(state, x_init, noise, prep)
    jax.block_until_ready(actions)

    ref = sample_reference(state, x_init, noise, params)
    assert actions.shape == (BATCH, N_ACTIONS, ACTION_DIM)
    assert bool(jnp.all(jnp.isfinite(actions)))
    err = float(jnp.max(jnp.abs(actions - ref)))
    assert bool(jnp.allclose(actions, ref, atol=1e-3, rtol=1e-3)), f"max abs err {err}"
    print("KERNEL_OK")
</pallas_src>

<mosaic_0001>
module attributes {stable_mosaic.version = 11 : i64} {
  func.func @fused_ddpm_kernel(%arg0: memref<16x128xf32, #tpu.memory_space<vmem>>, %arg1: memref<16x128xf32, #tpu.memory_space<vmem>>, %arg2: memref<10x1x128xf32, #tpu.memory_space<vmem>>, %arg3: memref<10x8x128xf32, #tpu.memory_space<vmem>>, %arg4: memref<10x16x128xf32, #tpu.memory_space<vmem>>, %arg5: memref<128x128xf32, #tpu.memory_space<vmem>>, %arg6: memref<128x128xf32, #tpu.memory_space<vmem>>, %arg7: memref<1x128xf32, #tpu.memory_space<vmem>>, %arg8: memref<128x128xf32, #tpu.memory_space<vmem>>, %arg9: memref<1x128xf32, #tpu.memory_space<vmem>>, %arg10: memref<16x128xf32, #tpu.memory_space<vmem>>) attributes {dimension_semantics = [], scalar_prefetch = 0 : i64, scratch_operands = 0 : i64, tpu.core_type = #tpu.core_type<tc>} {
    %c0 = arith.constant 0 : index
    %c0_0 = arith.constant 0 : index
    %0 = vector.load %arg5[%c0, %c0_0] : memref<128x128xf32, #tpu.memory_space<vmem>>, vector<128x128xf32>
    %c0_1 = arith.constant 0 : index
    %c0_2 = arith.constant 0 : index
    %1 = vector.load %arg6[%c0_1, %c0_2] : memref<128x128xf32, #tpu.memory_space<vmem>>, vector<128x128xf32>
    %c0_3 = arith.constant 0 : index
    %c0_4 = arith.constant 0 : index
    %2 = vector.load %arg7[%c0_3, %c0_4] : memref<1x128xf32, #tpu.memory_space<vmem>>, vector<1x128xf32>
    %c0_5 = arith.constant 0 : index
    %c0_6 = arith.constant 0 : index
    %3 = vector.load %arg8[%c0_5, %c0_6] : memref<128x128xf32, #tpu.memory_space<vmem>>, vector<128x128xf32>
    %c0_7 = arith.constant 0 : index
    %c0_8 = arith.constant 0 : index
    %4 = vector.load %arg9[%c0_7, %c0_8] : memref<1x128xf32, #tpu.memory_space<vmem>>, vector<1x128xf32>
    %c0_9 = arith.constant 0 : index
    %c0_10 = arith.constant 0 : index
    %5 = vector.load %arg1[%c0_9, %c0_10] : memref<16x128xf32, #tpu.memory_space<vmem>>, vector<16x128xf32>
    %c0_11 = arith.constant 0 : index
    %c0_12 = arith.constant 0 : index
    %6 = vector.load %arg0[%c0_11, %c0_12] : memref<16x128xf32, #tpu.memory_space<vmem>>, vector<16x128xf32>
    %c0_i32 = arith.constant 0 : i32
    %cst = arith.constant dense<0.000000e+00> : vector<16x128xf32>
    %7 = tpu.matmul %6, %0, %cst {dimension_numbers = #tpu.dot_dimension_numbers<[1], [0], [0], [1], [0, 0, 1, 1], [], []>} : vector<16x128xf32>, vector<128x128xf32>, vector<16x128xf32> -> vector<16x128xf32>
    %8 = arith.addf %7, %5 : vector<16x128xf32>
    %9 = arith.index_cast %c0_i32 : i32 to index
    %c0_13 = arith.constant 0 : index
    %c0_14 = arith.constant 0 : index
    %10 = vector.load %arg2[%9, %c0_13, %c0_14] : memref<10x1x128xf32, #tpu.memory_space<vmem>>, vector<1x1x128xf32>
    %11 = vector.shape_cast %10 : vector<1x1x128xf32> to vector<1x128xf32>
    %12 = vector.broadcast %11 : vector<1x128xf32> to vector<16x128xf32>
    %13 = arith.addf %8, %12 : vector<16x128xf32>
    %cst_15 = arith.constant 0.000000e+00 : f32
    %14 = vector.broadcast %cst_15 : f32 to vector<16x128xf32>
    %15 = arith.maximumf %13, %14 : vector<16x128xf32>
    %cst_16 = arith.constant dense<0.000000e+00> : vector<16x128xf32>
    %16 = tpu.matmul %15, %1, %cst_16 {dimension_numbers = #tpu.dot_dimension_numbers<[1], [0], [0], [1], [0, 0, 1, 1], [], []>} : vector<16x128xf32>, vector<128x128xf32>, vector<16x128xf32> -> vector<16x128xf32>
    %17 = vector.broadcast %2 : vector<1x128xf32> to vector<16x128xf32>
    %18 = arith.addf %16, %17 : vector<16x128xf32>
    %cst_17 = arith.constant 0.000000e+00 : f32
    %19 = vector.broadcast %cst_17 : f32 to vector<16x128xf32>
    %20 = arith.maximumf %18, %19 : vector<16x128xf32>
    %cst_18 = arith.constant dense<0.000000e+00> : vector<16x128xf32>
    %21 = tpu.matmul %20, %3, %cst_18 {dimension_numbers = #tpu.dot_dimension_numbers<[1], [0], [0], [1], [0, 0, 1, 1], [], []>} : vector<16x128xf32>, vector<128x128xf32>, vector<16x128xf32> -> vector<16x128xf32>
    %22 = vector.broadcast %4 : vector<1x128xf32> to vector<16x128xf32>
    %23 = arith.addf %21, %22 : vector<16x128xf32>
    %24 = arith.index_cast %c0_i32 : i32 to index
    %c0_19 = arith.constant 0 : index
    %c0_20 = arith.constant 0 : index
    %25 = vector.load %arg3[%24, %c0_19, %c0_20] : memref<10x8x128xf32, #tpu.memory_space<vmem>>, vector<1x8x128xf32>
    %26 = vector.shape_cast %25 : vector<1x8x128xf32> to vector<8x128xf32>
    %27 = vector.extract_strided_slice %26 {offsets = [0, 0], sizes = [1, 128], strides = [1, 1]} : vector<8x128xf32> to vector<1x128xf32>
    %28 = vector.extract_strided_slice %26 {offsets = [1, 0], sizes = [1, 128], strides = [1, 1]} : vector<8x128xf32> to vector<1x128xf32>
    %29 = vector.broadcast %27 : vector<1x128xf32> to vector<16x128xf32>
    %30 = arith.mulf %29, %6 : vector<16x128xf32>
    %31 = vector.broadcast %28 : vector<1x128xf32> to vector<16x128xf32>
    %32 = arith.mulf %31, %23 : vector<16x128xf32>
    %33 = arith.subf %30, %32 : vector<16x128xf32>
    %34 = arith.index_cast %c0_i32 : i32 to index
    %c0_21 = arith.constant 0 : index
    %c0_22 = arith.constant 0 : index
    %35 = vector.load %arg4[%34, %c0_21, %c0_22] : memref<10x16x128xf32, #tpu.memory_space<vmem>>, vector<1x16x128xf32>
    %36 = vector.shape_cast %35 : vector<1x16x128xf32> to vector<16x128xf32>
    %37 = arith.addf %33, %36 : vector<16x128xf32>
    %c1_i32 = arith.constant 1 : i32
    %cst_23 = arith.constant dense<0.000000e+00> : vector<16x128xf32>
    %38 = tpu.matmul %37, %0, %cst_23 {dimension_numbers = #tpu.dot_dimension_numbers<[1], [0], [0], [1], [0, 0, 1, 1], [], []>} : vector<16x128xf32>, vector<128x128xf32>, vector<16x128xf32> -> vector<16x128xf32>
    %39 = arith.addf %38, %5 : vector<16x128xf32>
    %40 = arith.index_cast %c1_i32 : i32 to index
    %c0_24 = arith.constant 0 : index
    %c0_25 = arith.constant 0 : index
    %41 = vector.load %arg2[%40, %c0_24, %c0_25] : memref<10x1x128xf32, #tpu.memory_space<vmem>>, vector<1x1x128xf32>
    %42 = vector.shape_cast %41 : vector<1x1x128xf32> to vector<1x128xf32>
    %43 = vector.broadcast %42 : vector<1x128xf32> to vector<16x128xf32>
    %44 = arith.addf %39, %43 : vector<16x128xf32>
    %cst_26 = arith.constant 0.000000e+00 : f32
    %45 = vector.broadcast %cst_26 : f32 to vector<16x128xf32>
    %46 = arith.maximumf %44, %45 : vector<16x128xf32>
    %cst_27 = arith.constant dense<0.000000e+00> : vector<16x128xf32>
    %47 = tpu.matmul %46, %1, %cst_27 {dimension_numbers = #tpu.dot_dimension_numbers<[1], [0], [0], [1], [0, 0, 1, 1], [], []>} : vector<16x128xf32>, vector<128x128xf32>, vector<16x128xf32> -> vector<16x128xf32>
    %48 = vector.broadcast %2 : vector<1x128xf32> to vector<16x128xf32>
    %49 = arith.addf %47, %48 : vector<16x128xf32>
    %cst_28 = arith.constant 0.000000e+00 : f32
    %50 = vector.broadcast %cst_28 : f32 to vector<16x128xf32>
    %51 = arith.maximumf %49, %50 : vector<16x128xf32>
    %cst_29 = arith.constant dense<0.000000e+00> : vector<16x128xf32>
    %52 = tpu.matmul %51, %3, %cst_29 {dimension_numbers = #tpu.dot_dimension_numbers<[1], [0], [0], [1], [0, 0, 1, 1], [], []>} : vector<16x128xf32>, vector<128x128xf32>, vector<16x128xf32> -> vector<16x128xf32>
    %53 = vector.broadcast %4 : vector<1x128xf32> to vector<16x128xf32>
    %54 = arith.addf %52, %53 : vector<16x128xf32>
    %55 = arith.index_cast %c1_i32 : i32 to index
    %c0_30 = arith.constant 0 : index
    %c0_31 = arith.constant 0 : index
    %56 = vector.load %arg3[%55, %c0_30, %c0_31] : memref<10x8x128xf32, #tpu.memory_space<vmem>>, vector<1x8x128xf32>
    %57 = vector.shape_cast %56 : vector<1x8x128xf32> to vector<8x128xf32>
    %58 = vector.extract_strided_slice %57 {offsets = [0, 0], sizes = [1, 128], strides = [1, 1]} : vector<8x128xf32> to vector<1x128xf32>
    %59 = vector.extract_strided_slice %57 {offsets = [1, 0], sizes = [1, 128], strides = [1, 1]} : vector<8x128xf32> to vector<1x128xf32>
    %60 = vector.broadcast %58 : vector<1x128xf32> to vector<16x128xf32>
    %61 = arith.mulf %60, %37 : vector<16x128xf32>
    %62 = vector.broadcast %59 : vector<1x128xf32> to vector<16x128xf32>
    %63 = arith.mulf %62, %54 : vector<16x128xf32>
    %64 = arith.subf %61, %63 : vector<16x128xf32>
    %65 = arith.index_cast %c1_i32 : i32 to index
    %c0_32 = arith.constant 0 : index
    %c0_33 = arith.constant 0 : index
    %66 = vector.load %arg4[%65, %c0_32, %c0_33] : memref<10x16x128xf32, #tpu.memory_space<vmem>>, vector<1x16x128xf32>
    %67 = vector.shape_cast %66 : vector<1x16x128xf32> to vector<16x128xf32>
    %68 = arith.addf %64, %67 : vector<16x128xf32>
    %c2_i32 = arith.constant 2 : i32
    %cst_34 = arith.constant dense<0.000000e+00> : vector<16x128xf32>
    %69 = tpu.matmul %68, %0, %cst_34 {dimension_numbers = #tpu.dot_dimension_numbers<[1], [0], [0], [1], [0, 0, 1, 1], [], []>} : vector<16x128xf32>, vector<128x128xf32>, vector<16x128xf32> -> vector<16x128xf32>
    %70 = arith.addf %69, %5 : vector<16x128xf32>
    %71 = arith.index_cast %c2_i32 : i32 to index
    %c0_35 = arith.constant 0 : index
    %c0_36 = arith.constant 0 : index
    %72 = vector.load %arg2[%71, %c0_35, %c0_36] : memref<10x1x128xf32, #tpu.memory_space<vmem>>, vector<1x1x128xf32>
    %73 = vector.shape_cast %72 : vector<1x1x128xf32> to vector<1x128xf32>
    %74 = vector.broadcast %73 : vector<1x128xf32> to vector<16x128xf32>
    %75 = arith.addf %70, %74 : vector<16x128xf32>
    %cst_37 = arith.constant 0.000000e+00 : f32
    %76 = vector.broadcast %cst_37 : f32 to vector<16x128xf32>
    %77 = arith.maximumf %75, %76 : vector<16x128xf32>
    %cst_38 = arith.constant dense<0.000000e+00> : vector<16x128xf32>
    %78 = tpu.matmul %77, %1, %cst_38 {dimension_numbers = #tpu.dot_dimension_numbers<[1], [0], [0], [1], [0, 0, 1, 1], [], []>} : vector<16x128xf32>, vector<128x128xf32>, vector<16x128xf32> -> vector<16x128xf32>
    %79 = vector.broadcast %2 : vector<1x128xf32> to vector<16x128xf32>
    %80 = arith.addf %78, %79 : vector<16x128xf32>
    %cst_39 = arith.constant 0.000000e+00 : f32
    %81 = vector.broadcast %cst_39 : f32 to vector<16x128xf32>
    %82 = arith.maximumf %80, %81 : vector<16x128xf32>
    %cst_40 = arith.constant dense<0.000000e+00> : vector<16x128xf32>
    %83 = tpu.matmul %82, %3, %cst_40 {dimension_numbers = #tpu.dot_dimension_numbers<[1], [0], [0], [1], [0, 0, 1, 1], [], []>} : vector<16x128xf32>, vector<128x128xf32>, vector<16x128xf32> -> vector<16x128xf32>
    %84 = vector.broadcast %4 : vector<1x128xf32> to vector<16x128xf32>
    %85 = arith.addf %83, %84 : vector<16x128xf32>
    %86 = arith.index_cast %c2_i32 : i32 to index
    %c0_41 = arith.constant 0 : index
    %c0_42 = arith.constant 0 : index
    %87 = vector.load %arg3[%86, %c0_41, %c0_42] : memref<10x8x128xf32, #tpu.memory_space<vmem>>, vector<1x8x128xf32>
    %88 = vector.shape_cast %87 : vector<1x8x128xf32> to vector<8x128xf32>
    %89 = vector.extract_strided_slice %88 {offsets = [0, 0], sizes = [1, 128], strides = [1, 1]} : vector<8x128xf32> to vector<1x128xf32>
    %90 = vector.extract_strided_slice %88 {offsets = [1, 0], sizes = [1, 128], strides = [1, 1]} : vector<8x128xf32> to vector<1x128xf32>
    %91 = vector.broadcast %89 : vector<1x128xf32> to vector<16x128xf32>
    %92 = arith.mulf %91, %68 : vector<16x128xf32>
    %93 = vector.broadcast %90 : vector<1x128xf32> to vector<16x128xf32>
    %94 = arith.mulf %93, %85 : vector<16x128xf32>
    %95 = arith.subf %92, %94 : vector<16x128xf32>
    %96 = arith.index_cast %c2_i32 : i32 to index
    %c0_43 = arith.constant 0 : index
    %c0_44 = arith.constant 0 : index
    %97 = vector.load %arg4[%96, %c0_43, %c0_44] : memref<10x16x128xf32, #tpu.memory_space<vmem>>, vector<1x16x128xf32>
    %98 = vector.shape_cast %97 : vector<1x16x128xf32> to vector<16x128xf32>
    %99 = arith.addf %95, %98 : vector<16x128xf32>
    %c3_i32 = arith.constant 3 : i32
    %cst_45 = arith.constant dense<0.000000e+00> : vector<16x128xf32>
    %100 = tpu.matmul %99, %0, %cst_45 {dimension_numbers = #tpu.dot_dimension_numbers<[1], [0], [0], [1], [0, 0, 1, 1], [], []>} : vector<16x128xf32>, vector<128x128xf32>, vector<16x128xf32> -> vector<16x128xf32>
    %101 = arith.addf %100, %5 : vector<16x128xf32>
    %102 = arith.index_cast %c3_i32 : i32 to index
    %c0_46 = arith.constant 0 : index
    %c0_47 = arith.constant 0 : index
    %103 = vector.load %arg2[%102, %c0_46, %c0_47] : memref<10x1x128xf32, #tpu.memory_space<vmem>>, vector<1x1x128xf32>
    %104 = vector.shape_cast %103 : vector<1x1x128xf32> to vector<1x128xf32>
    %105 = vector.broadcast %104 : vector<1x128xf32> to vector<16x128xf32>
    %106 = arith.addf %101, %105 : vector<16x128xf32>
    %cst_48 = arith.constant 0.000000e+00 : f32
    %107 = vector.broadcast %cst_48 : f32 to vector<16x128xf32>
    %108 = arith.maximumf %106, %107 : vector<16x128xf32>
    %cst_49 = arith.constant dense<0.000000e+00> : vector<16x128xf32>
    %109 = tpu.matmul %108, %1, %cst_49 {dimension_numbers = #tpu.dot_dimension_numbers<[1], [0], [0], [1], [0, 0, 1, 1], [], []>} : vector<16x128xf32>, vector<128x128xf32>, vector<16x128xf32> -> vector<16x128xf32>
    %110 = vector.broadcast %2 : vector<1x128xf32> to vector<16x128xf32>
    %111 = arith.addf %109, %110 : vector<16x128xf32>
    %cst_50 = arith.constant 0.000000e+00 : f32
    %112 = vector.broadcast %cst_50 : f32 to vector<16x128xf32>
    %113 = arith.maximumf %111, %112 : vector<16x128xf32>
    %cst_51 = arith.constant dense<0.000000e+00> : vector<16x128xf32>
    %114 = tpu.matmul %113, %3, %cst_51 {dimension_numbers = #tpu.dot_dimension_numbers<[1], [0], [0], [1], [0, 0, 1, 1], [], []>} : vector<16x128xf32>, vector<128x128xf32>, vector<16x128xf32> -> vector<16x128xf32>
    %115 = vector.broadcast %4 : vector<1x128xf32> to vector<16x128xf32>
    %116 = arith.addf %114, %115 : vector<16x128xf32>
    %117 = arith.index_cast %c3_i32 : i32 to index
    %c0_52 = arith.constant 0 : index
    %c0_53 = arith.constant 0 : index
    %118 = vector.load %arg3[%117, %c0_52, %c0_53] : memref<10x8x128xf32, #tpu.memory_space<vmem>>, vector<1x8x128xf32>
    %119 = vector.shape_cast %118 : vector<1x8x128xf32> to vector<8x128xf32>
    %120 = vector.extract_strided_slice %119 {offsets = [0, 0], sizes = [1, 128], strides = [1, 1]} : vector<8x128xf32> to vector<1x128xf32>
    %121 = vector.extract_strided_slice %119 {offsets = [1, 0], sizes = [1, 128], strides = [1, 1]} : vector<8x128xf32> to vector<1x128xf32>
    %122 = vector.broadcast %120 : vector<1x128xf32> to vector<16x128xf32>
    %123 = arith.mulf %122, %99 : vector<16x128xf32>
    %124 = vector.broadcast %121 : vector<1x128xf32> to vector<16x128xf32>
    %125 = arith.mulf %124, %116 : vector<16x128xf32>
    %126 = arith.subf %123, %125 : vector<16x128xf32>
    %127 = arith.index_cast %c3_i32 : i32 to index
    %c0_54 = arith.constant 0 : index
    %c0_55 = arith.constant 0 : index
    %128 = vector.load %arg4[%127, %c0_54, %c0_55] : memref<10x16x128xf32, #tpu.memory_space<vmem>>, vector<1x16x128xf32>
    %129 = vector.shape_cast %128 : vector<1x16x128xf32> to vector<16x128xf32>
    %130 = arith.addf %126, %129 : vector<16x128xf32>
    %c4_i32 = arith.constant 4 : i32
    %cst_56 = arith.constant dense<0.000000e+00> : vector<16x128xf32>
    %131 = tpu.matmul %130, %0, %cst_56 {dimension_numbers = #tpu.dot_dimension_numbers<[1], [0], [0], [1], [0, 0, 1, 1], [], []>} : vector<16x128xf32>, vector<128x128xf32>, vector<16x128xf32> -> vector<16x128xf32>
    %132 = arith.addf %131, %5 : vector<16x128xf32>
    %133 = arith.index_cast %c4_i32 : i32 to index
    %c0_57 = arith.constant 0 : index
    %c0_58 = arith.constant 0 : index
    %134 = vector.load %arg2[%133, %c0_57, %c0_58] : memref<10x1x128xf32, #tpu.memory_space<vmem>>, vector<1x1x128xf32>
    %135 = vector.shape_cast %134 : vector<1x1x128xf32> to vector<1x128xf32>
    %136 = vector.broadcast %135 : vector<1x128xf32> to vector<16x128xf32>
    %137 = arith.addf %132, %136 : vector<16x128xf32>
    %cst_59 = arith.constant 0.000000e+00 : f32
    %138 = vector.broadcast %cst_59 : f32 to vector<16x128xf32>
    %139 = arith.maximumf %137, %138 : vector<16x128xf32>
    %cst_60 = arith.constant dense<0.000000e+00> : vector<16x128xf32>
    %140 = tpu.matmul %139, %1, %cst_60 {dimension_numbers = #tpu.dot_dimension_numbers<[1], [0], [0], [1], [0, 0, 1, 1], [], []>} : vector<16x128xf32>, vector<128x128xf32>, vector<16x128xf32> -> vector<16x128xf32>
    %141 = vector.broadcast %2 : vector<1x128xf32> to vector<16x128xf32>
    %142 = arith.addf %140, %141 : vector<16x128xf32>
    %cst_61 = arith.constant 0.000000e+00 : f32
    %143 = vector.broadcast %cst_61 : f32 to vector<16x128xf32>
    %144 = arith.maximumf %142, %143 : vector<16x128xf32>
    %cst_62 = arith.constant dense<0.000000e+00> : vector<16x128xf32>
    %145 = tpu.matmul %144, %3, %cst_62 {dimension_numbers = #tpu.dot_dimension_numbers<[1], [0], [0], [1], [0, 0, 1, 1], [], []>} : vector<16x128xf32>, vector<128x128xf32>, vector<16x128xf32> -> vector<16x128xf32>
    %146 = vector.broadcast %4 : vector<1x128xf32> to vector<16x128xf32>
    %147 = arith.addf %145, %146 : vector<16x128xf32>
    %148 = arith.index_cast %c4_i32 : i32 to index
    %c0_63 = arith.constant 0 : index
    %c0_64 = arith.constant 0 : index
    %149 = vector.load %arg3[%148, %c0_63, %c0_64] : memref<10x8x128xf32, #tpu.memory_space<vmem>>, vector<1x8x128xf32>
    %150 = vector.shape_cast %149 : vector<1x8x128xf32> to vector<8x128xf32>
    %151 = vector.extract_strided_slice %150 {offsets = [0, 0], sizes = [1, 128], strides = [1, 1]} : vector<8x128xf32> to vector<1x128xf32>
    %152 = vector.extract_strided_slice %150 {offsets = [1, 0], sizes = [1, 128], strides = [1, 1]} : vector<8x128xf32> to vector<1x128xf32>
    %153 = vector.broadcast %151 : vector<1x128xf32> to vector<16x128xf32>
    %154 = arith.mulf %153, %130 : vector<16x128xf32>
    %155 = vector.broadcast %152 : vector<1x128xf32> to vector<16x128xf32>
    %156 = arith.mulf %155, %147 : vector<16x128xf32>
    %157 = arith.subf %154, %156 : vector<16x128xf32>
    %158 = arith.index_cast %c4_i32 : i32 to index
    %c0_65 = arith.constant 0 : index
    %c0_66 = arith.constant 0 : index
    %159 = vector.load %arg4[%158, %c0_65, %c0_66] : memref<10x16x128xf32, #tpu.memory_space<vmem>>, vector<1x16x128xf32>
    %160 = vector.shape_cast %159 : vector<1x16x128xf32> to vector<16x128xf32>
    %161 = arith.addf %157, %160 : vector<16x128xf32>
    %c5_i32 = arith.constant 5 : i32
    %cst_67 = arith.constant dense<0.000000e+00> : vector<16x128xf32>
    %162 = tpu.matmul %161, %0, %cst_67 {dimension_numbers = #tpu.dot_dimension_numbers<[1], [0], [0], [1], [0, 0, 1, 1], [], []>} : vector<16x128xf32>, vector<128x128xf32>, vector<16x128xf32> -> vector<16x128xf32>
    %163 = arith.addf %162, %5 : vector<16x128xf32>
    %164 = arith.index_cast %c5_i32 : i32 to index
    %c0_68 = arith.constant 0 : index
    %c0_69 = arith.constant 0 : index
    %165 = vector.load %arg2[%164, %c0_68, %c0_69] : memref<10x1x128xf32, #tpu.memory_space<vmem>>, vector<1x1x128xf32>
    %166 = vector.shape_cast %165 : vector<1x1x128xf32> to vector<1x128xf32>
    %167 = vector.broadcast %166 : vector<1x128xf32> to vector<16x128xf32>
    %168 = arith.addf %163, %167 : vector<16x128xf32>
    %cst_70 = arith.constant 0.000000e+00 : f32
    %169 = vector.broadcast %cst_70 : f32 to vector<16x128xf32>
    %170 = arith.maximumf %168, %169 : vector<16x128xf32>
    %cst_71 = arith.constant dense<0.000000e+00> : vector<16x128xf32>
    %171 = tpu.matmul %170, %1, %cst_71 {dimension_numbers = #tpu.dot_dimension_numbers<[1], [0], [0], [1], [0, 0, 1, 1], [], []>} : vector<16x128xf32>, vector<128x128xf32>, vector<16x128xf32> -> vector<16x128xf32>
    %172 = vector.broadcast %2 : vector<1x128xf32> to vector<16x128xf32>
    %173 = arith.addf %171, %172 : vector<16x128xf32>
    %cst_72 = arith.constant 0.000000e+00 : f32
    %174 = vector.broadcast %cst_72 : f32 to vector<16x128xf32>
    %175 = arith.maximumf %173, %174 : vector<16x128xf32>
    %cst_73 = arith.constant dense<0.000000e+00> : vector<16x128xf32>
    %176 = tpu.matmul %175, %3, %cst_73 {dimension_numbers = #tpu.dot_dimension_numbers<[1], [0], [0], [1], [0, 0, 1, 1], [], []>} : vector<16x128xf32>, vector<128x128xf32>, vector<16x128xf32> -> vector<16x128xf32>
    %177 = vector.broadcast %4 : vector<1x128xf32> to vector<16x128xf32>
    %178 = arith.addf %176, %177 : vector<16x128xf32>
    %179 = arith.index_cast %c5_i32 : i32 to index
    %c0_74 = arith.constant 0 : index
    %c0_75 = arith.constant 0 : index
    %180 = vector.load %arg3[%179, %c0_74, %c0_75] : memref<10x8x128xf32, #tpu.memory_space<vmem>>, vector<1x8x128xf32>
    %181 = vector.shape_cast %180 : vector<1x8x128xf32> to vector<8x128xf32>
    %182 = vector.extract_strided_slice %181 {offsets = [0, 0], sizes = [1, 128], strides = [1, 1]} : vector<8x128xf32> to vector<1x128xf32>
    %183 = vector.extract_strided_slice %181 {offsets = [1, 0], sizes = [1, 128], strides = [1, 1]} : vector<8x128xf32> to vector<1x128xf32>
    %184 = vector.broadcast %182 : vector<1x128xf32> to vector<16x128xf32>
    %185 = arith.mulf %184, %161 : vector<16x128xf32>
    %186 = vector.broadcast %183 : vector<1x128xf32> to vector<16x128xf32>
    %187 = arith.mulf %186, %178 : vector<16x128xf32>
    %188 = arith.subf %185, %187 : vector<16x128xf32>
    %189 = arith.index_cast %c5_i32 : i32 to index
    %c0_76 = arith.constant 0 : index
    %c0_77 = arith.constant 0 : index
    %190 = vector.load %arg4[%189, %c0_76, %c0_77] : memref<10x16x128xf32, #tpu.memory_space<vmem>>, vector<1x16x128xf32>
    %191 = vector.shape_cast %190 : vector<1x16x128xf32> to vector<16x128xf32>
    %192 = arith.addf %188, %191 : vector<16x128xf32>
    %c6_i32 = arith.constant 6 : i32
    %cst_78 = arith.constant dense<0.000000e+00> : vector<16x128xf32>
    %193 = tpu.matmul %192, %0, %cst_78 {dimension_numbers = #tpu.dot_dimension_numbers<[1], [0], [0], [1], [0, 0, 1, 1], [], []>} : vector<16x128xf32>, vector<128x128xf32>, vector<16x128xf32> -> vector<16x128xf32>
    %194 = arith.addf %193, %5 : vector<16x128xf32>
    %195 = arith.index_cast %c6_i32 : i32 to index
    %c0_79 = arith.constant 0 : index
    %c0_80 = arith.constant 0 : index
    %196 = vector.load %arg2[%195, %c0_79, %c0_80] : memref<10x1x128xf32, #tpu.memory_space<vmem>>, vector<1x1x128xf32>
    %197 = vector.shape_cast %196 : vector<1x1x128xf32> to vector<1x128xf32>
    %198 = vector.broadcast %197 : vector<1x128xf32> to vector<16x128xf32>
    %199 = arith.addf %194, %198 : vector<16x128xf32>
    %cst_81 = arith.constant 0.000000e+00 : f32
    %200 = vector.broadcast %cst_81 : f32 to vector<16x128xf32>
    %201 = arith.maximumf %199, %200 : vector<16x128xf32>
    %cst_82 = arith.constant dense<0.000000e+00> : vector<16x128xf32>
    %202 = tpu.matmul %201, %1, %cst_82 {dimension_numbers = #tpu.dot_dimension_numbers<[1], [0], [0], [1], [0, 0, 1, 1], [], []>} : vector<16x128xf32>, vector<128x128xf32>, vector<16x128xf32> -> vector<16x128xf32>
    %203 = vector.broadcast %2 : vector<1x128xf32> to vector<16x128xf32>
    %204 = arith.addf %202, %203 : vector<16x128xf32>
    %cst_83 = arith.constant 0.000000e+00 : f32
    %205 = vector.broadcast %cst_83 : f32 to vector<16x128xf32>
    %206 = arith.maximumf %204, %205 : vector<16x128xf32>
    %cst_84 = arith.constant dense<0.000000e+00> : vector<16x128xf32>
    %207 = tpu.matmul %206, %3, %cst_84 {dimension_numbers = #tpu.dot_dimension_numbers<[1], [0], [0], [1], [0, 0, 1, 1], [], []>} : vector<16x128xf32>, vector<128x128xf32>, vector<16x128xf32> -> vector<16x128xf32>
    %208 = vector.broadcast %4 : vector<1x128xf32> to vector<16x128xf32>
    %209 = arith.addf %207, %208 : vector<16x128xf32>
    %210 = arith.index_cast %c6_i32 : i32 to index
    %c0_85 = arith.constant 0 : index
    %c0_86 = arith.constant 0 : index
    %211 = vector.load %arg3[%210, %c0_85, %c0_86] : memref<10x8x128xf32, #tpu.memory_space<vmem>>, vector<1x8x128xf32>
    %212 = vector.shape_cast %211 : vector<1x8x128xf32> to vector<8x128xf32>
    %213 = vector.extract_strided_slice %212 {offsets = [0, 0], sizes = [1, 128], strides = [1, 1]} : vector<8x128xf32> to vector<1x128xf32>
    %214 = vector.extract_strided_slice %212 {offsets = [1, 0], sizes = [1, 128], strides = [1, 1]} : vector<8x128xf32> to vector<1x128xf32>
    %215 = vector.broadcast %213 : vector<1x128xf32> to vector<16x128xf32>
    %216 = arith.mulf %215, %192 : vector<16x128xf32>
    %217 = vector.broadcast %214 : vector<1x128xf32> to vector<16x128xf32>
    %218 = arith.mulf %217, %209 : vector<16x128xf32>
    %219 = arith.subf %216, %218 : vector<16x128xf32>
    %220 = arith.index_cast %c6_i32 : i32 to index
    %c0_87 = arith.constant 0 : index
    %c0_88 = arith.constant 0 : index
    %221 = vector.load %arg4[%220, %c0_87, %c0_88] : memref<10x16x128xf32, #tpu.memory_space<vmem>>, vector<1x16x128xf32>
    %222 = vector.shape_cast %221 : vector<1x16x128xf32> to vector<16x128xf32>
    %223 = arith.addf %219, %222 : vector<16x128xf32>
    %c7_i32 = arith.constant 7 : i32
    %cst_89 = arith.constant dense<0.000000e+00> : vector<16x128xf32>
    %224 = tpu.matmul %223, %0, %cst_89 {dimension_numbers = #tpu.dot_dimension_numbers<[1], [0], [0], [1], [0, 0, 1, 1], [], []>} : vector<16x128xf32>, vector<128x128xf32>, vector<16x128xf32> -> vector<16x128xf32>
    %225 = arith.addf %224, %5 : vector<16x128xf32>
    %226 = arith.index_cast %c7_i32 : i32 to index
    %c0_90 = arith.constant 0 : index
    %c0_91 = arith.constant 0 : index
    %227 = vector.load %arg2[%226, %c0_90, %c0_91] : memref<10x1x128xf32, #tpu.memory_space<vmem>>, vector<1x1x128xf32>
    %228 = vector.shape_cast %227 : vector<1x1x128xf32> to vector<1x128xf32>
    %229 = vector.broadcast %228 : vector<1x128xf32> to vector<16x128xf32>
    %230 = arith.addf %225, %229 : vector<16x128xf32>
    %cst_92 = arith.constant 0.000000e+00 : f32
    %231 = vector.broadcast %cst_92 : f32 to vector<16x128xf32>
    %232 = arith.maximumf %230, %231 : vector<16x128xf32>
    %cst_93 = arith.constant dense<0.000000e+00> : vector<16x128xf32>
    %233 = tpu.matmul %232, %1, %cst_93 {dimension_numbers = #tpu.dot_dimension_numbers<[1], [0], [0], [1], [0, 0, 1, 1], [], []>} : vector<16x128xf32>, vector<128x128xf32>, vector<16x128xf32> -> vector<16x128xf32>
    %234 = vector.broadcast %2 : vector<1x128xf32> to vector<16x128xf32>
    %235 = arith.addf %233, %234 : vector<16x128xf32>
    %cst_94 = arith.constant 0.000000e+00 : f32
    %236 = vector.broadcast %cst_94 : f32 to vector<16x128xf32>
    %237 = arith.maximumf %235, %236 : vector<16x128xf32>
    %cst_95 = arith.constant dense<0.000000e+00> : vector<16x128xf32>
    %238 = tpu.matmul %237, %3, %cst_95 {dimension_numbers = #tpu.dot_dimension_numbers<[1], [0], [0], [1], [0, 0, 1, 1], [], []>} : vector<16x128xf32>, vector<128x128xf32>, vector<16x128xf32> -> vector<16x128xf32>
    %239 = vector.broadcast %4 : vector<1x128xf32> to vector<16x128xf32>
    %240 = arith.addf %238, %239 : vector<16x128xf32>
    %241 = arith.index_cast %c7_i32 : i32 to index
    %c0_96 = arith.constant 0 : index
    %c0_97 = arith.constant 0 : index
    %242 = vector.load %arg3[%241, %c0_96, %c0_97] : memref<10x8x128xf32, #tpu.memory_space<vmem>>, vector<1x8x128xf32>
    %243 = vector.shape_cast %242 : vector<1x8x128xf32> to vector<8x128xf32>
    %244 = vector.extract_strided_slice %243 {offsets = [0, 0], sizes = [1, 128], strides = [1, 1]} : vector<8x128xf32> to vector<1x128xf32>
    %245 = vector.extract_strided_slice %243 {offsets = [1, 0], sizes = [1, 128], strides = [1, 1]} : vector<8x128xf32> to vector<1x128xf32>
    %246 = vector.broadcast %244 : vector<1x128xf32> to vector<16x128xf32>
    %247 = arith.mulf %246, %223 : vector<16x128xf32>
    %248 = vector.broadcast %245 : vector<1x128xf32> to vector<16x128xf32>
    %249 = arith.mulf %248, %240 : vector<16x128xf32>
    %250 = arith.subf %247, %249 : vector<16x128xf32>
    %251 = arith.index_cast %c7_i32 : i32 to index
    %c0_98 = arith.constant 0 : index
    %c0_99 = arith.constant 0 : index
    %252 = vector.load %arg4[%251, %c0_98, %c0_99] : memref<10x16x128xf32, #tpu.memory_space<vmem>>, vector<1x16x128xf32>
    %253 = vector.shape_cast %252 : vector<1x16x128xf32> to vector<16x128xf32>
    %254 = arith.addf %250, %253 : vector<16x128xf32>
    %c8_i32 = arith.constant 8 : i32
    %cst_100 = arith.constant dense<0.000000e+00> : vector<16x128xf32>
    %255 = tpu.matmul %254, %0, %cst_100 {dimension_numbers = #tpu.dot_dimension_numbers<[1], [0], [0], [1], [0, 0, 1, 1], [], []>} : vector<16x128xf32>, vector<128x128xf32>, vector<16x128xf32> -> vector<16x128xf32>
    %256 = arith.addf %255, %5 : vector<16x128xf32>
    %257 = arith.index_cast %c8_i32 : i32 to index
    %c0_101 = arith.constant 0 : index
    %c0_102 = arith.constant 0 : index
    %258 = vector.load %arg2[%257, %c0_101, %c0_102] : memref<10x1x128xf32, #tpu.memory_space<vmem>>, vector<1x1x128xf32>
    %259 = vector.shape_cast %258 : vector<1x1x128xf32> to vector<1x128xf32>
    %260 = vector.broadcast %259 : vector<1x128xf32> to vector<16x128xf32>
    %261 = arith.addf %256, %260 : vector<16x128xf32>
    %cst_103 = arith.constant 0.000000e+00 : f32
    %262 = vector.broadcast %cst_103 : f32 to vector<16x128xf32>
    %263 = arith.maximumf %261, %262 : vector<16x128xf32>
    %cst_104 = arith.constant dense<0.000000e+00> : vector<16x128xf32>
    %264 = tpu.matmul %263, %1, %cst_104 {dimension_numbers = #tpu.dot_dimension_numbers<[1], [0], [0], [1], [0, 0, 1, 1], [], []>} : vector<16x128xf32>, vector<128x128xf32>, vector<16x128xf32> -> vector<16x128xf32>
    %265 = vector.broadcast %2 : vector<1x128xf32> to vector<16x128xf32>
    %266 = arith.addf %264, %265 : vector<16x128xf32>
    %cst_105 = arith.constant 0.000000e+00 : f32
    %267 = vector.broadcast %cst_105 : f32 to vector<16x128xf32>
    %268 = arith.maximumf %266, %267 : vector<16x128xf32>
    %cst_106 = arith.constant dense<0.000000e+00> : vector<16x128xf32>
    %269 = tpu.matmul %268, %3, %cst_106 {dimension_numbers = #tpu.dot_dimension_numbers<[1], [0], [0], [1], [0, 0, 1, 1], [], []>} : vector<16x128xf32>, vector<128x128xf32>, vector<16x128xf32> -> vector<16x128xf32>
    %270 = vector.broadcast %4 : vector<1x128xf32> to vector<16x128xf32>
    %271 = arith.addf %269, %270 : vector<16x128xf32>
    %272 = arith.index_cast %c8_i32 : i32 to index
    %c0_107 = arith.constant 0 : index
    %c0_108 = arith.constant 0 : index
    %273 = vector.load %arg3[%272, %c0_107, %c0_108] : memref<10x8x128xf32, #tpu.memory_space<vmem>>, vector<1x8x128xf32>
    %274 = vector.shape_cast %273 : vector<1x8x128xf32> to vector<8x128xf32>
    %275 = vector.extract_strided_slice %274 {offsets = [0, 0], sizes = [1, 128], strides = [1, 1]} : vector<8x128xf32> to vector<1x128xf32>
    %276 = vector.extract_strided_slice %274 {offsets = [1, 0], sizes = [1, 128], strides = [1, 1]} : vector<8x128xf32> to vector<1x128xf32>
    %277 = vector.broadcast %275 : vector<1x128xf32> to vector<16x128xf32>
    %278 = arith.mulf %277, %254 : vector<16x128xf32>
    %279 = vector.broadcast %276 : vector<1x128xf32> to vector<16x128xf32>
    %280 = arith.mulf %279, %271 : vector<16x128xf32>
    %281 = arith.subf %278, %280 : vector<16x128xf32>
    %282 = arith.index_cast %c8_i32 : i32 to index
    %c0_109 = arith.constant 0 : index
    %c0_110 = arith.constant 0 : index
    %283 = vector.load %arg4[%282, %c0_109, %c0_110] : memref<10x16x128xf32, #tpu.memory_space<vmem>>, vector<1x16x128xf32>
    %284 = vector.shape_cast %283 : vector<1x16x128xf32> to vector<16x128xf32>
    %285 = arith.addf %281, %284 : vector<16x128xf32>
    %c9_i32 = arith.constant 9 : i32
    %cst_111 = arith.constant dense<0.000000e+00> : vector<16x128xf32>
    %286 = tpu.matmul %285, %0, %cst_111 {dimension_numbers = #tpu.dot_dimension_numbers<[1], [0], [0], [1], [0, 0, 1, 1], [], []>} : vector<16x128xf32>, vector<128x128xf32>, vector<16x128xf32> -> vector<16x128xf32>
    %287 = arith.addf %286, %5 : vector<16x128xf32>
    %288 = arith.index_cast %c9_i32 : i32 to index
    %c0_112 = arith.constant 0 : index
    %c0_113 = arith.constant 0 : index
    %289 = vector.load %arg2[%288, %c0_112, %c0_113] : memref<10x1x128xf32, #tpu.memory_space<vmem>>, vector<1x1x128xf32>
    %290 = vector.shape_cast %289 : vector<1x1x128xf32> to vector<1x128xf32>
    %291 = vector.broadcast %290 : vector<1x128xf32> to vector<16x128xf32>
    %292 = arith.addf %287, %291 : vector<16x128xf32>
    %cst_114 = arith.constant 0.000000e+00 : f32
    %293 = vector.broadcast %cst_114 : f32 to vector<16x128xf32>
    %294 = arith.maximumf %292, %293 : vector<16x128xf32>
    %cst_115 = arith.constant dense<0.000000e+00> : vector<16x128xf32>
    %295 = tpu.matmul %294, %1, %cst_115 {dimension_numbers = #tpu.dot_dimension_numbers<[1], [0], [0], [1], [0, 0, 1, 1], [], []>} : vector<16x128xf32>, vector<128x128xf32>, vector<16x128xf32> -> vector<16x128xf32>
    %296 = vector.broadcast %2 : vector<1x128xf32> to vector<16x128xf32>
    %297 = arith.addf %295, %296 : vector<16x128xf32>
    %cst_116 = arith.constant 0.000000e+00 : f32
    %298 = vector.broadcast %cst_116 : f32 to vector<16x128xf32>
    %299 = arith.maximumf %297, %298 : vector<16x128xf32>
    %cst_117 = arith.constant dense<0.000000e+00> : vector<16x128xf32>
    %300 = tpu.matmul %299, %3, %cst_117 {dimension_numbers = #tpu.dot_dimension_numbers<[1], [0], [0], [1], [0, 0, 1, 1], [], []>} : vector<16x128xf32>, vector<128x128xf32>, vector<16x128xf32> -> vector<16x128xf32>
    %301 = vector.broadcast %4 : vector<1x128xf32> to vector<16x128xf32>
    %302 = arith.addf %300, %301 : vector<16x128xf32>
    %303 = arith.index_cast %c9_i32 : i32 to index
    %c0_118 = arith.constant 0 : index
    %c0_119 = arith.constant 0 : index
    %304 = vector.load %arg3[%303, %c0_118, %c0_119] : memref<10x8x128xf32, #tpu.memory_space<vmem>>, vector<1x8x128xf32>
    %305 = vector.shape_cast %304 : vector<1x8x128xf32> to vector<8x128xf32>
    %306 = vector.extract_strided_slice %305 {offsets = [0, 0], sizes = [1, 128], strides = [1, 1]} : vector<8x128xf32> to vector<1x128xf32>
    %307 = vector.extract_strided_slice %305 {offsets = [1, 0], sizes = [1, 128], strides = [1, 1]} : vector<8x128xf32> to vector<1x128xf32>
    %308 = vector.broadcast %306 : vector<1x128xf32> to vector<16x128xf32>
    %309 = arith.mulf %308, %285 : vector<16x128xf32>
    %310 = vector.broadcast %307 : vector<1x128xf32> to vector<16x128xf32>
    %311 = arith.mulf %310, %302 : vector<16x128xf32>
    %312 = arith.subf %309, %311 : vector<16x128xf32>
    %313 = arith.index_cast %c9_i32 : i32 to index
    %c0_120 = arith.constant 0 : index
    %c0_121 = arith.constant 0 : index
    %314 = vector.load %arg4[%313, %c0_120, %c0_121] : memref<10x16x128xf32, #tpu.memory_space<vmem>>, vector<1x16x128xf32>
    %315 = vector.shape_cast %314 : vector<1x16x128xf32> to vector<16x128xf32>
    %316 = arith.addf %312, %315 : vector<16x128xf32>
    %c10_i32 = arith.constant 10 : i32
    %c0_122 = arith.constant 0 : index
    %c0_123 = arith.constant 0 : index
    %317 = vector.load %arg10[%c0_122, %c0_123] : memref<16x128xf32, #tpu.memory_space<vmem>>, vector<16x128xf32>
    tpu.vector_store %arg10[%c0_122, %c0_123], %316 {strides = array<i32>} : memref<16x128xf32, #tpu.memory_space<vmem>>, vector<16x128xf32>,
    return
  }
}

</mosaic_0001>

<llo_original>
// kernel: sample_pallas.1
$region0: #{sample_pallas.1}
  #allocation0 [shape = 'u32[]', space=smem, size = 0x4, offset = 0x4, fixed_abs, tag = 'smem constant byte address 0x4 - core index']
  #allocation1 [shape = 'u32[144,128]{1,0:T(1,128)}', space=vmem, size = 0x12000, scoped, tag = 'internal scratch']
  %s0 = inlined_call_operand.vmem [shape: f32[16,128], index: 0, kind: input, shape index: {}]
  %s1 = inlined_call_operand.vmem [shape: f32[16,128], index: 1, kind: input, shape index: {}]
  %s2 = inlined_call_operand.vmem [shape: f32[10,1,128], index: 2, kind: input, shape index: {}]
  %s3 = inlined_call_operand.vmem [shape: f32[10,8,128], index: 3, kind: input, shape index: {}]
  %s4 = inlined_call_operand.vmem [shape: f32[10,16,128], index: 4, kind: input, shape index: {}]
  %s5 = inlined_call_operand.vmem [shape: f32[128,128], index: 5, kind: input, shape index: {}]
  %s6 = inlined_call_operand.vmem [shape: f32[128,128], index: 6, kind: input, shape index: {}]
  %s7 = inlined_call_operand.vmem [shape: f32[1,128], index: 7, kind: input, shape index: {}]
  %s8 = inlined_call_operand.vmem [shape: f32[128,128], index: 8, kind: input, shape index: {}]
  %s9 = inlined_call_operand.vmem [shape: f32[1,128], index: 9, kind: input, shape index: {}]
  %s10 = inlined_call_operand.vmem [shape: f32[16,128], index: 10, kind: output, shape index: {}]
  %s11 = sld [smem:[#allocation0]]
  $region50: #{sample_pallas.1} parent=0
    _
  %s13 = ssub.s32 1, %s11
  %s14 = scalar_select 0, %s13, %s11
  // Predicated region
  $region2: #{sample_pallas.1} parent=0 // pred_check
    _
  $region3: #{sample_pallas.1} parent=0 // pred_check_branch
    %16 = sbr.rel (0) target = $region5
  $region4: #{sample_pallas.1} parent=0 // pred_region
    _
  $region5: #{sample_pallas.1} parent=0 // pred_fallthru
    _
  // Predicated region
  $region6: #{sample_pallas.1} parent=0 // pred_check
    _
  $region7: #{sample_pallas.1} parent=0 // pred_check_branch
    %18 = sbr.rel (0) target = $region9
  $region8: #{sample_pallas.1} parent=0 // pred_region
    _
  $region9: #{sample_pallas.1} parent=0 // pred_fallthru
    _
  // Predicated region
  $region10: #{sample_pallas.1} parent=0 // pred_check
    _
  $region11: #{sample_pallas.1} parent=0 // pred_check_branch
    %20 = sbr.rel (0) target = $region13
  $region12: #{sample_pallas.1} parent=0 // pred_region
    _
  $region13: #{sample_pallas.1} parent=0 // pred_fallthru
    _
  // Predicated region
  $region14: #{sample_pallas.1} parent=0 // pred_check
    _
  $region15: #{sample_pallas.1} parent=0 // pred_check_branch
    %22 = sbr.rel (0) target = $region17
  $region16: #{sample_pallas.1} parent=0 // pred_region
    _
  $region17: #{sample_pallas.1} parent=0 // pred_fallthru
    _
  // Predicated region
  $region18: #{sample_pallas.1} parent=0 // pred_check
    _
  $region19: #{sample_pallas.1} parent=0 // pred_check_branch
    %24 = sbr.rel (0) target = $region21
  $region20: #{sample_pallas.1} parent=0 // pred_region
    _
  $region21: #{sample_pallas.1} parent=0 // pred_fallthru
    _
  // Predicated region
  $region22: #{sample_pallas.1} parent=0 // pred_check
    _
  $region23: #{sample_pallas.1} parent=0 // pred_check_branch
    %26 = sbr.rel (0) target = $region25
  $region24: #{sample_pallas.1} parent=0 // pred_region
    _
  $region25: #{sample_pallas.1} parent=0 // pred_fallthru
    _
  // Predicated region
  $region26: #{sample_pallas.1} parent=0 // pred_check
    _
  $region27: #{sample_pallas.1} parent=0 // pred_check_branch
    %28 = sbr.rel (0) target = $region29
  $region28: #{sample_pallas.1} parent=0 // pred_region
    _
  $region29: #{sample_pallas.1} parent=0 // pred_fallthru
    _
  // Predicated region
  $region30: #{sample_pallas.1} parent=0 // pred_check
    _
  $region31: #{sample_pallas.1} parent=0 // pred_check_branch
    %30 = sbr.rel (0) target = $region33
  $region32: #{sample_pallas.1} parent=0 // pred_region
    _
  $region33: #{sample_pallas.1} parent=0 // pred_fallthru
    _
  // Predicated region
  $region34: #{sample_pallas.1} parent=0 // pred_check
    _
  $region35: #{sample_pallas.1} parent=0 // pred_check_branch
    %32 = sbr.rel (0) target = $region37
  $region36: #{sample_pallas.1} parent=0 // pred_region
    _
  $region37: #{sample_pallas.1} parent=0 // pred_fallthru
    _
  // Predicated region
  $region38: #{sample_pallas.1} parent=0 // pred_check
    _
  $region39: #{sample_pallas.1} parent=0 // pred_check_branch
    %34 = sbr.rel (0) target = $region41
  $region40: #{sample_pallas.1} parent=0 // pred_region
    _
  $region41: #{sample_pallas.1} parent=0 // pred_fallthru
    _
  %v35 = vld [vmem:[%s5] sm:$0xff]
  %v36 = vld [vmem:[%s5 + $0x8] sm:$0xff]
  %v37 = vld [vmem:[%s5 + $0x10] sm:$0xff]
  %v38 = vld [vmem:[%s5 + $0x18] sm:$0xff]
  %v39 = vld [vmem:[%s5 + $0x20] sm:$0xff]
  %v40 = vld [vmem:[%s5 + $0x28] sm:$0xff]
  %v41 = vld [vmem:[%s5 + $0x30] sm:$0xff]
  %v42 = vld [vmem:[%s5 + $0x38] sm:$0xff]
  %v43 = vld [vmem:[%s5 + $0x40] sm:$0xff]
  %v44 = vld [vmem:[%s5 + $0x48] sm:$0xff]
  %v45 = vld [vmem:[%s5 + $0x50] sm:$0xff]
  %v46 = vld [vmem:[%s5 + $0x58] sm:$0xff]
  %v47 = vld [vmem:[%s5 + $0x60] sm:$0xff]
  %v48 = vld [vmem:[%s5 + $0x68] sm:$0xff]
  %v49 = vld [vmem:[%s5 + $0x70] sm:$0xff]
  %v50 = vld [vmem:[%s5 + $0x78] sm:$0xff]
  %v51 = vld [vmem:[%s6] sm:$0xff]
  %v52 = vld [vmem:[%s6 + $0x8] sm:$0xff]
  %v53 = vld [vmem:[%s6 + $0x10] sm:$0xff]
  %v54 = vld [vmem:[%s6 + $0x18] sm:$0xff]
  %v55 = vld [vmem:[%s6 + $0x20] sm:$0xff]
  %v56 = vld [vmem:[%s6 + $0x28] sm:$0xff]
  %v57 = vld [vmem:[%s6 + $0x30] sm:$0xff]
  %v58 = vld [vmem:[%s6 + $0x38] sm:$0xff]
  %v59 = vld [vmem:[%s6 + $0x40] sm:$0xff]
  %v60 = vld [vmem:[%s6 + $0x48] sm:$0xff]
  %v61 = vld [vmem:[%s6 + $0x50] sm:$0xff]
  %v62 = vld [vmem:[%s6 + $0x58] sm:$0xff]
  %v63 = vld [vmem:[%s6 + $0x60] sm:$0xff]
  %v64 = vld [vmem:[%s6 + $0x68] sm:$0xff]
  %v65 = vld [vmem:[%s6 + $0x70] sm:$0xff]
  %v66 = vld [vmem:[%s6 + $0x78] sm:$0xff]
  %v67 = vld [vmem:[%s7] sm:$0x1]
  %v68 = vld [vmem:[%s8] sm:$0xff]
  %v69 = vld [vmem:[%s8 + $0x8] sm:$0xff]
  %v70 = vld [vmem:[%s8 + $0x10] sm:$0xff]
  %v71 = vld [vmem:[%s8 + $0x18] sm:$0xff]
  %v72 = vld [vmem:[%s8 + $0x20] sm:$0xff]
  %v73 = vld [vmem:[%s8 + $0x28] sm:$0xff]
  %v74 = vld [vmem:[%s8 + $0x30] sm:$0xff]
  %v75 = vld [vmem:[%s8 + $0x38] sm:$0xff]
  %v76 = vld [vmem:[%s8 + $0x40] sm:$0xff]
  %v77 = vld [vmem:[%s8 + $0x48] sm:$0xff]
  %v78 = vld [vmem:[%s8 + $0x50] sm:$0xff]
  %v79 = vld [vmem:[%s8 + $0x58] sm:$0xff]
  %v80 = vld [vmem:[%s8 + $0x60] sm:$0xff]
  %v81 = vld [vmem:[%s8 + $0x68] sm:$0xff]
  %v82 = vld [vmem:[%s8 + $0x70] sm:$0xff]
  %v83 = vld [vmem:[%s8 + $0x78] sm:$0xff]
  %v84 = vld [vmem:[%s9] sm:$0x1]
  %v85 = vld [vmem:[%s1] sm:$0xff]
  %v86 = vld [vmem:[%s1 + $0x8] sm:$0xff]
  %v87 = vld [vmem:[%s0] sm:$0xff]
  %v88 = vld [vmem:[%s0 + $0x8] sm:$0xff]
  %89 = vmatprep.subr.mxu0 0.0
  %90 = vmatpush1.msra.mxu0 %v50
  %91 = vmatprep.subr.mxu0 0.0
  %92 = vmatpush1.msra.mxu0 %v49
  %93 = vmatprep.subr.mxu0 0.0
  %94 = vmatpush1.msra.mxu0 %v48
  %95 = vmatprep.subr.mxu0 0.0
  %96 = vmatpush1.msra.mxu0 %v47
  %97 = vmatprep.subr.mxu0 0.0
  %98 = vmatpush1.msra.mxu0 %v46
  %99 = vmatprep.subr.mxu0 0.0
  %100 = vmatpush1.msra.mxu0 %v45
  %101 = vmatprep.subr.mxu0 0.0
  %102 = vmatpush1.msra.mxu0 %v44
  %103 = vmatprep.subr.mxu0 0.0
  %104 = vmatpush1.msra.mxu0 %v43
  %105 = vmatprep.subr.mxu0 0.0
  %106 = vmatpush1.msra.mxu0 %v42
  %107 = vmatprep.subr.mxu0 0.0
  %108 = vmatpush1.msra.mxu0 %v41
  %109 = vmatprep.subr.mxu0 0.0
  %110 = vmatpush1.msra.mxu0 %v40
  %111 = vmatprep.subr.mxu0 0.0
  %112 = vmatpush1.msra.mxu0 %v39
  %113 = vmatprep.subr.mxu0 0.0
  %114 = vmatpush1.msra.mxu0 %v38
  %115 = vmatprep.subr.mxu0 0.0
  %116 = vmatpush1.msra.mxu0 %v37
  %117 = vmatprep.subr.mxu0 0.0
  %118 = vmatpush1.msra.mxu0 %v36
  %119 = vmatprep.subr.mxu0 0.0
  %120 = vmatpush1.msra.mxu0 %v35
  %121 = vmatprep.subr.mxu0 0.0
  %122 = vmatpush2.msra.mxu0 0.0
  %123 = vmatprep.subr.mxu0 0.0
  %124 = vmatpush2.msra.mxu0 0.0
  %125 = vmatprep.subr.mxu0 0.0
  %126 = vmatpush2.msra.mxu0 0.0
  %127 = vmatprep.subr.mxu0 0.0
  %128 = vmatpush2.msra.mxu0 0.0
  %129 = vmatprep.subr.mxu0 0.0
  %130 = vmatpush2.msra.mxu0 0.0
  %131 = vmatprep.subr.mxu0 0.0
  %132 = vmatpush2.msra.mxu0 0.0
  %133 = vmatprep.subr.mxu0 0.0
  %134 = vmatpush2.msra.mxu0 0.0
  %135 = vmatprep.subr.mxu0 0.0
  %136 = vmatpush2.msra.mxu0 0.0
  %137 = vmatprep.subr.mxu0 0.0
  %138 = vmatpush2.msra.mxu0 0.0
  %139 = vmatprep.subr.mxu0 0.0
  %140 = vmatpush2.msra.mxu0 0.0
  %141 = vmatprep.subr.mxu0 0.0
  %142 = vmatpush2.msra.mxu0 0.0
  %143 = vmatprep.subr.mxu0 0.0
  %144 = vmatpush2.msra.mxu0 0.0
  %145 = vmatprep.subr.mxu0 0.0
  %146 = vmatpush2.msra.mxu0 0.0
  %147 = vmatprep.subr.mxu0 0.0
  %148 = vmatpush2.msra.mxu0 0.0
  %149 = vmatprep.subr.mxu0 0.0
  %150 = vmatpush2.msra.mxu0 0.0
  %151 = vmatprep.subr.mxu0 0.0
  %152 = vmatpush2.msra.mxu0 0.0
  %153 = vmatprep.mubr.f32.mxu0 0.0
  %154 = vmatmul.mubr.f32.gmra.mxu0 %v87
  %v155 = vpop.f32.mrf.mxu0
  %v156 = vadd.f32 %v85, %v155
  %v157 = vpop.f32.mrf.mxu0
  %158 = vmatprep.mubr.f32.mxu0 0.0
  %159 = vmatmul.mubr.f32.gmra.mxu0 %v88
  %v160 = vpop.f32.mrf.mxu0
  %v161 = vadd.f32 %v86, %v160
  %v162 = vpop.f32.mrf.mxu0
  %163 = vdwg.mxu0
  %v164 = vld [vmem:[%s2] sm:$0x1]
  %v166 = vlaneseq
  %v167 = vshrl.u32 %v166, 7
  %v168 = vsub.s32 0, %v167
  %v169 = vrot.slane %v164, %v168
  %v171 = vadd.f32 %v156, %v169
  %v172 = vadd.f32 %v161, %v169
  %v173 = vmax.f32 %v171, 0.0
  %v174 = vmax.f32 %v172, 0.0
  %v176 = vlaneseq
  %v177 = vshrl.u32 %v176, 7
  %v178 = vsub.s32 0, %v177
  %v179 = vrot.slane %v67, %v178
  %181 = vmatprep.subr.mxu0 0.0
  %182 = vmatpush1.msra.mxu0 %v66
  %183 = vmatprep.subr.mxu0 0.0
  %184 = vmatpush1.msra.mxu0 %v65
  %185 = vmatprep.subr.mxu0 0.0
  %186 = vmatpush1.msra.mxu0 %v64
  %187 = vmatprep.subr.mxu0 0.0
  %188 = vmatpush1.msra.mxu0 %v63
  %189 = vmatprep.subr.mxu0 0.0
  %190 = vmatpush1.msra.mxu0 %v62
  %191 = vmatprep.subr.mxu0 0.0
  %192 = vmatpush1.msra.mxu0 %v61
  %193 = vmatprep.subr.mxu0 0.0
  %194 = vmatpush1.msra.mxu0 %v60
  %195 = vmatprep.subr.mxu0 0.0
  %196 = vmatpush1.msra.mxu0 %v59
  %197 = vmatprep.subr.mxu0 0.0
  %198 = vmatpush1.msra.mxu0 %v58
  %199 = vmatprep.subr.mxu0 0.0
  %200 = vmatpush1.msra.mxu0 %v57
  %201 = vmatprep.subr.mxu0 0.0
  %202 = vmatpush1.msra.mxu0 %v56
  %203 = vmatprep.subr.mxu0 0.0
  %204 = vmatpush1.msra.mxu0 %v55
  %205 = vmatprep.subr.mxu0 0.0
  %206 = vmatpush1.msra.mxu0 %v54
  %207 = vmatprep.subr.mxu0 0.0
  %208 = vmatpush1.msra.mxu0 %v53
  %209 = vmatprep.subr.mxu0 0.0
  %210 = vmatpush1.msra.mxu0 %v52
  %211 = vmatprep.subr.mxu0 0.0
  %212 = vmatpush1.msra.mxu0 %v51
  %213 = vmatprep.subr.mxu0 0.0
  %214 = vmatpush2.msra.mxu0 0.0
  %215 = vmatprep.subr.mxu0 0.0
  %216 = vmatpush2.msra.mxu0 0.0
  %217 = vmatprep.subr.mxu0 0.0
  %218 = vmatpush2.msra.mxu0 0.0
  %219 = vmatprep.subr.mxu0 0.0
  %220 = vmatpush2.msra.mxu0 0.0
  %221 = vmatprep.subr.mxu0 0.0
  %222 = vmatpush2.msra.mxu0 0.0
  %223 = vmatprep.subr.mxu0 0.0
  %224 = vmatpush2.msra.mxu0 0.0
  %225 = vmatprep.subr.mxu0 0.0
  %226 = vmatpush2.msra.mxu0 0.0
  %227 = vmatprep.subr.mxu0 0.0
  %228 = vmatpush2.msra.mxu0 0.0
  %229 = vmatprep.subr.mxu0 0.0
  %230 = vmatpush2.msra.mxu0 0.0
  %231 = vmatprep.subr.mxu0 0.0
  %232 = vmatpush2.msra.mxu0 0.0
  %233 = vmatprep.subr.mxu0 0.0
  %234 = vmatpush2.msra.mxu0 0.0
  %235 = vmatprep.subr.mxu0 0.0
  %236 = vmatpush2.msra.mxu0 0.0
  %237 = vmatprep.subr.mxu0 0.0
  %238 = vmatpush2.msra.mxu0 0.0
  %239 = vmatprep.subr.mxu0 0.0
  %240 = vmatpush2.msra.mxu0 0.0
  %241 = vmatprep.subr.mxu0 0.0
  %242 = vmatpush2.msra.mxu0 0.0
  %243 = vmatprep.subr.mxu0 0.0
  %244 = vmatpush2.msra.mxu0 0.0
  %245 = vmatprep.mubr.f32.mxu0 0.0
  %246 = vmatmul.mubr.f32.gmra.mxu0 %v173
  %v247 = vpop.f32.mrf.mxu0
  %v248 = vadd.f32 %v179, %v247
  %v249 = vpop.f32.mrf.mxu0
  %250 = vmatprep.mubr.f32.mxu0 0.0
  %251 = vmatmul.mubr.f32.gmra.mxu0 %v174
  %v252 = vpop.f32.mrf.mxu0
  %v253 = vadd.f32 %v179, %v252
  %v254 = vpop.f32.mrf.mxu0
  %255 = vdwg.mxu0
  %v256 = vmax.f32 %v248, 0.0
  %v257 = vmax.f32 %v253, 0.0
  %v259 = vlaneseq
  %v260 = vshrl.u32 %v259, 7
  %v261 = vsub.s32 0, %v260
  %v262 = vrot.slane %v84, %v261
  %264 = vmatprep.subr.mxu0 0.0
  %265 = vmatpush1.msra.mxu0 %v83
  %266 = vmatprep.subr.mxu0 0.0
  %267 = vmatpush1.msra.mxu0 %v82
  %268 = vmatprep.subr.mxu0 0.0
  %269 = vmatpush1.msra.mxu0 %v81
  %270 = vmatprep.subr.mxu0 0.0
  %271 = vmatpush1.msra.mxu0 %v80
  %272 = vmatprep.subr.mxu0 0.0
  %273 = vmatpush1.msra.mxu0 %v79
  %274 = vmatprep.subr.mxu0 0.0
  %275 = vmatpush1.msra.mxu0 %v78
  %276 = vmatprep.subr.mxu0 0.0
  %277 = vmatpush1.msra.mxu0 %v77
  %278 = vmatprep.subr.mxu0 0.0
  %279 = vmatpush1.msra.mxu0 %v76
  %280 = vmatprep.subr.mxu0 0.0
  %281 = vmatpush1.msra.mxu0 %v75
  %282 = vmatprep.subr.mxu0 0.0
  %283 = vmatpush1.msra.mxu0 %v74
  %284 = vmatprep.subr.mxu0 0.0
  %285 = vmatpush1.msra.mxu0 %v73
  %286 = vmatprep.subr.mxu0 0.0
  %287 = vmatpush1.msra.mxu0 %v72
  %288 = vmatprep.subr.mxu0 0.0
  %289 = vmatpush1.msra.mxu0 %v71
  %290 = vmatprep.subr.mxu0 0.0
  %291 = vmatpush1.msra.mxu0 %v70
  %292 = vmatprep.subr.mxu0 0.0
  %293 = vmatpush1.msra.mxu0 %v69
  %294 = vmatprep.subr.mxu0 0.0
  %295 = vmatpush1.msra.mxu0 %v68
  %296 = vmatprep.subr.mxu0 0.0
  %297 = vmatpush2.msra.mxu0 0.0
  %298 = vmatprep.subr.mxu0 0.0
  %299 = vmatpush2.msra.mxu0 0.0
  %300 = vmatprep.subr.mxu0 0.0
  %301 = vmatpush2.msra.mxu0 0.0
  %302 = vmatprep.subr.mxu0 0.0
  %303 = vmatpush2.msra.mxu0 0.0
  %304 = vmatprep.subr.mxu0 0.0
  %305 = vmatpush2.msra.mxu0 0.0
  %306 = vmatprep.subr.mxu0 0.0
  %307 = vmatpush2.msra.mxu0 0.0
  %308 = vmatprep.subr.mxu0 0.0
  %309 = vmatpush2.msra.mxu0 0.0
  %310 = vmatprep.subr.mxu0 0.0
  %311 = vmatpush2.msra.mxu0 0.0
  %312 = vmatprep.subr.mxu0 0.0
  %313 = vmatpush2.msra.mxu0 0.0
  %314 = vmatprep.subr.mxu0 0.0
  %315 = vmatpush2.msra.mxu0 0.0
  %316 = vmatprep.subr.mxu0 0.0
  %317 = vmatpush2.msra.mxu0 0.0
  %318 = vmatprep.subr.mxu0 0.0
  %319 = vmatpush2.msra.mxu0 0.0
  %320 = vmatprep.subr.mxu0 0.0
  %321 = vmatpush2.msra.mxu0 0.0
  %322 = vmatprep.subr.mxu0 0.0
  %323 = vmatpush2.msra.mxu0 0.0
  %324 = vmatprep.subr.mxu0 0.0
  %325 = vmatpush2.msra.mxu0 0.0
  %326 = vmatprep.subr.mxu0 0.0
  %327 = vmatpush2.msra.mxu0 0.0
  %328 = vmatprep.mubr.f32.mxu0 0.0
  %329 = vmatmul.mubr.f32.gmra.mxu0 %v256
  %v330 = vpop.f32.mrf.mxu0
  %v331 = vadd.f32 %v262, %v330
  %v332 = vpop.f32.mrf.mxu0
  %333 = vmatprep.mubr.f32.mxu0 0.0
  %334 = vmatmul.mubr.f32.gmra.mxu0 %v257
  %v335 = vpop.f32.mrf.mxu0
  %v336 = vadd.f32 %v262, %v335
  %v337 = vpop.f32.mrf.mxu0
  %338 = vdwg.mxu0
  %v339 = vld [vmem:[%s3] sm:$0xff]
  %v340 = vlaneseq
  %v341 = vshrl.u32 %v340, 7
  %v342 = vsub.s32 0, %v341
  %v343 = vrot.slane %v339, %v342
  %v344 = vmul.f32 %v343, %v87
  %v345 = vmul.f32 %v343, %v88
  %v346 = vlaneseq
  %v347 = vshrl.u32 %v346, 7
  %v348 = vsub.s32 1, %v347
  %v349 = vrot.slane %v339, %v348
  %v350 = vmul.f32 %v349, %v331
  %v351 = vmul.f32 %v349, %v336
  %v352 = vsub.f32 %v344, %v350
  %v353 = vsub.f32 %v345, %v351
  %v354 = vld [vmem:[%s4] sm:$0xff]
  %v355 = vld [vmem:[%s4 + $0x8] sm:$0xff]
  %v356 = vadd.f32 %v352, %v354
  %v357 = vadd.f32 %v353, %v355
  %358 = vmatprep.subr.mxu0 0.0
  %359 = vmatpush1.msra.mxu0 %v50
  %360 = vmatprep.subr.mxu0 0.0
  %361 = vmatpush1.msra.mxu0 %v49
  %362 = vmatprep.subr.mxu0 0.0
  %363 = vmatpush1.msra.mxu0 %v48
  %364 = vmatprep.subr.mxu0 0.0
  %365 = vmatpush1.msra.mxu0 %v47
  %366 = vmatprep.subr.mxu0 0.0
  %367 = vmatpush1.msra.mxu0 %v46
  %368 = vmatprep.subr.mxu0 0.0
  %369 = vmatpush1.msra.mxu0 %v45
  %370 = vmatprep.subr.mxu0 0.0
  %371 = vmatpush1.msra.mxu0 %v44
  %372 = vmatprep.subr.mxu0 0.0
  %373 = vmatpush1.msra.mxu0 %v43
  %374 = vmatprep.subr.mxu0 0.0
  %375 = vmatpush1.msra.mxu0 %v42
  %376 = vmatprep.subr.mxu0 0.0
  %377 = vmatpush1.msra.mxu0 %v41
  %378 = vmatprep.subr.mxu0 0.0
  %379 = vmatpush1.msra.mxu0 %v40
  %380 = vmatprep.subr.mxu0 0.0
  %381 = vmatpush1.msra.mxu0 %v39
  %382 = vmatprep.subr.mxu0 0.0
  %383 = vmatpush1.msra.mxu0 %v38
  %384 = vmatprep.subr.mxu0 0.0
  %385 = vmatpush1.msra.mxu0 %v37
  %386 = vmatprep.subr.mxu0 0.0
  %387 = vmatpush1.msra.mxu0 %v36
  %388 = vmatprep.subr.mxu0 0.0
  %389 = vmatpush1.msra.mxu0 %v35
  %390 = vmatprep.subr.mxu0 0.0
  %391 = vmatpush2.msra.mxu0 0.0
  %392 = vmatprep.subr.mxu0 0.0
  %393 = vmatpush2.msra.mxu0 0.0
  %394 = vmatprep.subr.mxu0 0.0
  %395 = vmatpush2.msra.mxu0 0.0
  %396 = vmatprep.subr.mxu0 0.0
  %397 = vmatpush2.msra.mxu0 0.0
  %398 = vmatprep.subr.mxu0 0.0
  %399 = vmatpush2.msra.mxu0 0.0
  %400 = vmatprep.subr.mxu0 0.0
  %401 = vmatpush2.msra.mxu0 0.0
  %402 = vmatprep.subr.mxu0 0.0
  %403 = vmatpush2.msra.mxu0 0.0
  %404 = vmatprep.subr.mxu0 0.0
  %405 = vmatpush2.msra.mxu0 0.0
  %406 = vmatprep.subr.mxu0 0.0
  %407 = vmatpush2.msra.mxu0 0.0
  %408 = vmatprep.subr.mxu0 0.0
  %409 = vmatpush2.msra.mxu0 0.0
  %410 = vmatprep.subr.mxu0 0.0
  %411 = vmatpush2.msra.mxu0 0.0
  %412 = vmatprep.subr.mxu0 0.0
  %413 = vmatpush2.msra.mxu0 0.0
  %414 = vmatprep.subr.mxu0 0.0
  %415 = vmatpush2.msra.mxu0 0.0
  %416 = vmatprep.subr.mxu0 0.0
  %417 = vmatpush2.msra.mxu0 0.0
  %418 = vmatprep.subr.mxu0 0.0
  %419 = vmatpush2.msra.mxu0 0.0
  %420 = vmatprep.subr.mxu0 0.0
  %421 = vmatpush2.msra.mxu0 0.0
  %422 = vmatprep.mubr.f32.mxu0 0.0
  %423 = vmatmul.mubr.f32.gmra.mxu0 %v356
  %v424 = vpop.f32.mrf.mxu0
  %v425 = vadd.f32 %v85, %v424
  %v426 = vpop.f32.mrf.mxu0
  %427 = vmatprep.mubr.f32.mxu0 0.0
  %428 = vmatmul.mubr.f32.gmra.mxu0 %v357
  %v429 = vpop.f32.mrf.mxu0
  %v430 = vadd.f32 %v86, %v429
  %v431 = vpop.f32.mrf.mxu0
  %432 = vdwg.mxu0
  %s433 = scalar_lea.vmem %s2, 1
  %v434 = vld [vmem:[%s433] sm:$0x1]
  %v436 = vlaneseq
  %v437 = vshrl.u32 %v436, 7
  %v438 = vsub.s32 0, %v437
  %v439 = vrot.slane %v434, %v438
  %v441 = vadd.f32 %v425, %v439
  %v442 = vadd.f32 %v430, %v439
  %v443 = vmax.f32 %v441, 0.0
  %v444 = vmax.f32 %v442, 0.0
  %445 = vmatprep.subr.mxu0 0.0
  %446 = vmatpush1.msra.mxu0 %v66
  %447 = vmatprep.subr.mxu0 0.0
  %448 = vmatpush1.msra.mxu0 %v65
  %449 = vmatprep.subr.mxu0 0.0
  %450 = vmatpush1.msra.mxu0 %v64
  %451 = vmatprep.subr.mxu0 0.0
  %452 = vmatpush1.msra.mxu0 %v63
  %453 = vmatprep.subr.mxu0 0.0
  %454 = vmatpush1.msra.mxu0 %v62
  %455 = vmatprep.subr.mxu0 0.0
  %456 = vmatpush1.msra.mxu0 %v61
  %457 = vmatprep.subr.mxu0 0.0
  %458 = vmatpush1.msra.mxu0 %v60
  %459 = vmatprep.subr.mxu0 0.0
  %460 = vmatpush1.msra.mxu0 %v59
  %461 = vmatprep.subr.mxu0 0.0
  %462 = vmatpush1.msra.mxu0 %v58
  %463 = vmatprep.subr.mxu0 0.0
  %464 = vmatpush1.msra.mxu0 %v57
  %465 = vmatprep.subr.mxu0 0.0
  %466 = vmatpush1.msra.mxu0 %v56
  %467 = vmatprep.subr.mxu0 0.0
  %468 = vmatpush1.msra.mxu0 %v55
  %469 = vmatprep.subr.mxu0 0.0
  %470 = vmatpush1.msra.mxu0 %v54
  %471 = vmatprep.subr.mxu0 0.0
  %472 = vmatpush1.msra.mxu0 %v53
  %473 = vmatprep.subr.mxu0 0.0
  %474 = vmatpush1.msra.mxu0 %v52
  %475 = vmatprep.subr.mxu0 0.0
  %476 = vmatpush1.msra.mxu0 %v51
  %477 = vmatprep.subr.mxu0 0.0
  %478 = vmatpush2.msra.mxu0 0.0
  %479 = vmatprep.subr.mxu0 0.0
  %480 = vmatpush2.msra.mxu0 0.0
  %481 = vmatprep.subr.mxu0 0.0
  %482 = vmatpush2.msra.mxu0 0.0
  %483 = vmatprep.subr.mxu0 0.0
  %484 = vmatpush2.msra.mxu0 0.0
  %485 = vmatprep.subr.mxu0 0.0
  %486 = vmatpush2.msra.mxu0 0.0
  %487 = vmatprep.subr.mxu0 0.0
  %488 = vmatpush2.msra.mxu0 0.0
  %489 = vmatprep.subr.mxu0 0.0
  %490 = vmatpush2.msra.mxu0 0.0
  %491 = vmatprep.subr.mxu0 0.0
  %492 = vmatpush2.msra.mxu0 0.0
  %493 = vmatprep.subr.mxu0 0.0
  %494 = vmatpush2.msra.mxu0 0.0
  %495 = vmatprep.subr.mxu0 0.0
  %496 = vmatpush2.msra.mxu0 0.0
  %497 = vmatprep.subr.mxu0 0.0
  %498 = vmatpush2.msra.mxu0 0.0
  %499 = vmatprep.subr.mxu0 0.0
  %500 = vmatpush2.msra.mxu0 0.0
  %501 = vmatprep.subr.mxu0 0.0
  %502 = vmatpush2.msra.mxu0 0.0
  %503 = vmatprep.subr.mxu0 0.0
  %504 = vmatpush2.msra.mxu0 0.0
  %505 = vmatprep.subr.mxu0 0.0
  %506 = vmatpush2.msra.mxu0 0.0
  %507 = vmatprep.subr.mxu0 0.0
  %508 = vmatpush2.msra.mxu0 0.0
  %509 = vmatprep.mubr.f32.mxu0 0.0
  %510 = vmatmul.mubr.f32.gmra.mxu0 %v443
  %v511 = vpop.f32.mrf.mxu0
  %v512 = vadd.f32 %v179, %v511
  %v513 = vpop.f32.mrf.mxu0
  %514 = vmatprep.mubr.f32.mxu0 0.0
  %515 = vmatmul.mubr.f32.gmra.mxu0 %v444
  %v516 = vpop.f32.mrf.mxu0
  %v517 = vadd.f32 %v179, %v516
  %v518 = vpop.f32.mrf.mxu0
  %519 = vdwg.mxu0
  %v520 = vmax.f32 %v512, 0.0
  %v521 = vmax.f32 %v517, 0.0
  %522 = vmatprep.subr.mxu0 0.0
  %523 = vmatpush1.msra.mxu0 %v83
  %524 = vmatprep.subr.mxu0 0.0
  %525 = vmatpush1.msra.mxu0 %v82
  %526 = vmatprep.subr.mxu0 0.0
  %527 = vmatpush1.msra.mxu0 %v81
  %528 = vmatprep.subr.mxu0 0.0
  %529 = vmatpush1.msra.mxu0 %v80
  %530 = vmatprep.subr.mxu0 0.0
  %531 = vmatpush1.msra.mxu0 %v79
  %532 = vmatprep.subr.mxu0 0.0
  %533 = vmatpush1.msra.mxu0 %v78
  %534 = vmatprep.subr.mxu0 0.0
  %535 = vmatpush1.msra.mxu0 %v77
  %536 = vmatprep.subr.mxu0 0.0
  %537 = vmatpush1.msra.mxu0 %v76
  %538 = vmatprep.subr.mxu0 0.0
  %539 = vmatpush1.msra.mxu0 %v75
  %540 = vmatprep.subr.mxu0 0.0
  %541 = vmatpush1.msra.mxu0 %v74
  %542 = vmatprep.subr.mxu0 0.0
  %543 = vmatpush1.msra.mxu0 %v73
  %544 = vmatprep.subr.mxu0 0.0
  %545 = vmatpush1.msra.mxu0 %v72
  %546 = vmatprep.subr.mxu0 0.0
  %547 = vmatpush1.msra.mxu0 %v71
  %548 = vmatprep.subr.mxu0 0.0
  %549 = vmatpush1.msra.mxu0 %v70
  %550 = vmatprep.subr.mxu0 0.0
  %551 = vmatpush1.msra.mxu0 %v69
  %552 = vmatprep.subr.mxu0 0.0
  %553 = vmatpush1.msra.mxu0 %v68
  %554 = vmatprep.subr.mxu0 0.0
  %555 = vmatpush2.msra.mxu0 0.0
  %556 = vmatprep.subr.mxu0 0.0
  %557 = vmatpush2.msra.mxu0 0.0
  %558 = vmatprep.subr.mxu0 0.0
  %559 = vmatpush2.msra.mxu0 0.0
  %560 = vmatprep.subr.mxu0 0.0
  %561 = vmatpush2.msra.mxu0 0.0
  %562 = vmatprep.subr.mxu0 0.0
  %563 = vmatpush2.msra.mxu0 0.0
  %564 = vmatprep.subr.mxu0 0.0
  %565 = vmatpush2.msra.mxu0 0.0
  %566 = vmatprep.subr.mxu0 0.0
  %567 = vmatpush2.msra.mxu0 0.0
  %568 = vmatprep.subr.mxu0 0.0
  %569 = vmatpush2.msra.mxu0 0.0
  %570 = vmatprep.subr.mxu0 0.0
  %571 = vmatpush2.msra.mxu0 0.0
  %572 = vmatprep.subr.mxu0 0.0
  %573 = vmatpush2.msra.mxu0 0.0
  %574 = vmatprep.subr.mxu0 0.0
  %575 = vmatpush2.msra.mxu0 0.0
  %576 = vmatprep.subr.mxu0 0.0
  %577 = vmatpush2.msra.mxu0 0.0
  %578 = vmatprep.subr.mxu0 0.0
  %579 = vmatpush2.msra.mxu0 0.0
  %580 = vmatprep.subr.mxu0 0.0
  %581 = vmatpush2.msra.mxu0 0.0
  %582 = vmatprep.subr.mxu0 0.0
  %583 = vmatpush2.msra.mxu0 0.0
  %584 = vmatprep.subr.mxu0 0.0
  %585 = vmatpush2.msra.mxu0 0.0
  %586 = vmatprep.mubr.f32.mxu0 0.0
  %587 = vmatmul.mubr.f32.gmra.mxu0 %v520
  %v588 = vpop.f32.mrf.mxu0
  %v589 = vadd.f32 %v262, %v588
  %v590 = vpop.f32.mrf.mxu0
  %591 = vmatprep.mubr.f32.mxu0 0.0
  %592 = vmatmul.mubr.f32.gmra.mxu0 %v521
  %v593 = vpop.f32.mrf.mxu0
  %v594 = vadd.f32 %v262, %v593
  %v595 = vpop.f32.mrf.mxu0
  %596 = vdwg.mxu0
  %s597 = scalar_lea.vmem %s3, 8
  %v598 = vld [vmem:[%s597] sm:$0xff]
  %v599 = vlaneseq
  %v600 = vshrl.u32 %v599, 7
  %v601 = vsub.s32 0, %v600
  %v602 = vrot.slane %v598, %v601
  %v603 = vmul.f32 %v602, %v356
  %v604 = vmul.f32 %v602, %v357
  %v605 = vlaneseq
  %v606 = vshrl.u32 %v605, 7
  %v607 = vsub.s32 1, %v606
  %v608 = vrot.slane %v598, %v607
  %v609 = vmul.f32 %v608, %v589
  %v610 = vmul.f32 %v608, %v594
  %v611 = vsub.f32 %v603, %v609
  %v612 = vsub.f32 %v604, %v610
  %s613 = scalar_lea.vmem %s4, 16
  %v614 = vld [vmem:[%s613] sm:$0xff]
  %v615 = vld [vmem:[%s613 + $0x8] sm:$0xff]
  %v616 = vadd.f32 %v611, %v614
  %v617 = vadd.f32 %v612, %v615
  %618 = vmatprep.subr.mxu0 0.0
  %619 = vmatpush1.msra.mxu0 %v50
  %620 = vmatprep.subr.mxu0 0.0
  %621 = vmatpush1.msra.mxu0 %v49
  %622 = vmatprep.subr.mxu0 0.0
  %623 = vmatpush1.msra.mxu0 %v48
  %624 = vmatprep.subr.mxu0 0.0
  %625 = vmatpush1.msra.mxu0 %v47
  %626 = vmatprep.subr.mxu0 0.0
  %627 = vmatpush1.msra.mxu0 %v46
  %628 = vmatprep.subr.mxu0 0.0
  %629 = vmatpush1.msra.mxu0 %v45
  %630 = vmatprep.subr.mxu0 0.0
  %631 = vmatpush1.msra.mxu0 %v44
  %632 = vmatprep.subr.mxu0 0.0
  %633 = vmatpush1.msra.mxu0 %v43
  %634 = vmatprep.subr.mxu0 0.0
  %635 = vmatpush1.msra.mxu0 %v42
  %636 = vmatprep.subr.mxu0 0.0
  %637 = vmatpush1.msra.mxu0 %v41
  %638 = vmatprep.subr.mxu0 0.0
  %639 = vmatpush1.msra.mxu0 %v40
  %640 = vmatprep.subr.mxu0 0.0
  %641 = vmatpush1.msra.mxu0 %v39
  %642 = vmatprep.subr.mxu0 0.0
  %643 = vmatpush1.msra.mxu0 %v38
  %644 = vmatprep.subr.mxu0 0.0
  %645 = vmatpush1.msra.mxu0 %v37
  %646 = vmatprep.subr.mxu0 0.0
  %647 = vmatpush1.msra.mxu0 %v36
  %648 = vmatprep.subr.mxu0 0.0
  %649 = vmatpush1.msra.mxu0 %v35
  %650 = vmatprep.subr.mxu0 0.0
  %651 = vmatpush2.msra.mxu0 0.0
  %652 = vmatprep.subr.mxu0 0.0
  %653 = vmatpush2.msra.mxu0 0.0
  %654 = vmatprep.subr.mxu0 0.0
  %655 = vmatpush2.msra.mxu0 0.0
  %656 = vmatprep.subr.mxu0 0.0
  %657 = vmatpush2.msra.mxu0 0.0
  %658 = vmatprep.subr.mxu0 0.0
  %659 = vmatpush2.msra.mxu0 0.0
  %660 = vmatprep.subr.mxu0 0.0
  %661 = vmatpush2.msra.mxu0 0.0
  %662 = vmatprep.subr.mxu0 0.0
  %663 = vmatpush2.msra.mxu0 0.0
  %664 = vmatprep.subr.mxu0 0.0
  %665 = vmatpush2.msra.mxu0 0.0
  %666 = vmatprep.subr.mxu0 0.0
  %667 = vmatpush2.msra.mxu0 0.0
  %668 = vmatprep.subr.mxu0 0.0
  %669 = vmatpush2.msra.mxu0 0.0
  %670 = vmatprep.subr.mxu0 0.0
  %671 = vmatpush2.msra.mxu0 0.0
  %672 = vmatprep.subr.mxu0 0.0
  %673 = vmatpush2.msra.mxu0 0.0
  %674 = vmatprep.subr.mxu0 0.0
  %675 = vmatpush2.msra.mxu0 0.0
  %676 = vmatprep.subr.mxu0 0.0
  %677 = vmatpush2.msra.mxu0 0.0
  %678 = vmatprep.subr.mxu0 0.0
  %679 = vmatpush2.msra.mxu0 0.0
  %680 = vmatprep.subr.mxu0 0.0
  %681 = vmatpush2.msra.mxu0 0.0
  %682 = vmatprep.mubr.f32.mxu0 0.0
  %683 = vmatmul.mubr.f32.gmra.mxu0 %v616
  %v684 = vpop.f32.mrf.mxu0
  %v685 = vadd.f32 %v85, %v684
  %v686 = vpop.f32.mrf.mxu0
  %687 = vmatprep.mubr.f32.mxu0 0.0
  %688 = vmatmul.mubr.f32.gmra.mxu0 %v617
  %v689 = vpop.f32.mrf.mxu0
  %v690 = vadd.f32 %v86, %v689
  %v691 = vpop.f32.mrf.mxu0
  %692 = vdwg.mxu0
  %s693 = scalar_lea.vmem %s2, 2
  %v694 = vld [vmem:[%s693] sm:$0x1]
  %v696 = vlaneseq
  %v697 = vshrl.u32 %v696, 7
  %v698 = vsub.s32 0, %v697
  %v699 = vrot.slane %v694, %v698
  %v701 = vadd.f32 %v685, %v699
  %v702 = vadd.f32 %v690, %v699
  %v703 = vmax.f32 %v701, 0.0
  %v704 = vmax.f32 %v702, 0.0
  %705 = vmatprep.subr.mxu0 0.0
  %706 = vmatpush1.msra.mxu0 %v66
  %707 = vmatprep.subr.mxu0 0.0
  %708 = vmatpush1.msra.mxu0 %v65
  %709 = vmatprep.subr.mxu0 0.0
  %710 = vmatpush1.msra.mxu0 %v64
  %711 = vmatprep.subr.mxu0 0.0
  %712 = vmatpush1.msra.mxu0 %v63
  %713 = vmatprep.subr.mxu0 0.0
  %714 = vmatpush1.msra.mxu0 %v62
  %715 = vmatprep.subr.mxu0 0.0
  %716 = vmatpush1.msra.mxu0 %v61
  %717 = vmatprep.subr.mxu0 0.0
  %718 = vmatpush1.msra.mxu0 %v60
  %719 = vmatprep.subr.mxu0 0.0
  %720 = vmatpush1.msra.mxu0 %v59
  %721 = vmatprep.subr.mxu0 0.0
  %722 = vmatpush1.msra.mxu0 %v58
  %723 = vmatprep.subr.mxu0 0.0
  %724 = vmatpush1.msra.mxu0 %v57
  %725 = vmatprep.subr.mxu0 0.0
  %726 = vmatpush1.msra.mxu0 %v56
  %727 = vmatprep.subr.mxu0 0.0
  %728 = vmatpush1.msra.mxu0 %v55
  %729 = vmatprep.subr.mxu0 0.0
  %730 = vmatpush1.msra.mxu0 %v54
  %731 = vmatprep.subr.mxu0 0.0
  %732 = vmatpush1.msra.mxu0 %v53
  %733 = vmatprep.subr.mxu0 0.0
  %734 = vmatpush1.msra.mxu0 %v52
  %735 = vmatprep.subr.mxu0 0.0
  %736 = vmatpush1.msra.mxu0 %v51
  %737 = vmatprep.subr.mxu0 0.0
  %738 = vmatpush2.msra.mxu0 0.0
  %739 = vmatprep.subr.mxu0 0.0
  %740 = vmatpush2.msra.mxu0 0.0
  %741 = vmatprep.subr.mxu0 0.0
  %742 = vmatpush2.msra.mxu0 0.0
  %743 = vmatprep.subr.mxu0 0.0
  %744 = vmatpush2.msra.mxu0 0.0
  %745 = vmatprep.subr.mxu0 0.0
  %746 = vmatpush2.msra.mxu0 0.0
  %747 = vmatprep.subr.mxu0 0.0
  %748 = vmatpush2.msra.mxu0 0.0
  %749 = vmatprep.subr.mxu0 0.0
  %750 = vmatpush2.msra.mxu0 0.0
  %751 = vmatprep.subr.mxu0 0.0
  %752 = vmatpush2.msra.mxu0 0.0
  %753 = vmatprep.subr.mxu0 0.0
  %754 = vmatpush2.msra.mxu0 0.0
  %755 = vmatprep.subr.mxu0 0.0
  %756 = vmatpush2.msra.mxu0 0.0
  %757 = vmatprep.subr.mxu0 0.0
  %758 = vmatpush2.msra.mxu0 0.0
  %759 = vmatprep.subr.mxu0 0.0
  %760 = vmatpush2.msra.mxu0 0.0
  %761 = vmatprep.subr.mxu0 0.0
  %762 = vmatpush2.msra.mxu0 0.0
  %763 = vmatprep.subr.mxu0 0.0
  %764 = vmatpush2.msra.mxu0 0.0
  %765 = vmatprep.subr.mxu0 0.0
  %766 = vmatpush2.msra.mxu0 0.0
  %767 = vmatprep.subr.mxu0 0.0
  %768 = vmatpush2.msra.mxu0 0.0
  %769 = vmatprep.mubr.f32.mxu0 0.0
  %770 = vmatmul.mubr.f32.gmra.mxu0 %v703
  %v771 = vpop.f32.mrf.mxu0
  %v772 = vadd.f32 %v179, %v771
  %v773 = vpop.f32.mrf.mxu0
  %774 = vmatprep.mubr.f32.mxu0 0.0
  %775 = vmatmul.mubr.f32.gmra.mxu0 %v704
  %v776 = vpop.f32.mrf.mxu0
  %v777 = vadd.f32 %v179, %v776
  %v778 = vpop.f32.mrf.mxu0
  %779 = vdwg.mxu0
  %v780 = vmax.f32 %v772, 0.0
  %v781 = vmax.f32 %v777, 0.0
  %782 = vmatprep.subr.mxu0 0.0
  %783 = vmatpush1.msra.mxu0 %v83
  %784 = vmatprep.subr.mxu0 0.0
  %785 = vmatpush1.msra.mxu0 %v82
  %786 = vmatprep.subr.mxu0 0.0
  %787 = vmatpush1.msra.mxu0 %v81
  %788 = vmatprep.subr.mxu0 0.0
  %789 = vmatpush1.msra.mxu0 %v80
  %790 = vmatprep.subr.mxu0 0.0
  %791 = vmatpush1.msra.mxu0 %v79
  %792 = vmatprep.subr.mxu0 0.0
  %793 = vmatpush1.msra.mxu0 %v78
  %794 = vmatprep.subr.mxu0 0.0
  %795 = vmatpush1.msra.mxu0 %v77
  %796 = vmatprep.subr.mxu0 0.0
  %797 = vmatpush1.msra.mxu0 %v76
  %798 = vmatprep.subr.mxu0 0.0
  %799 = vmatpush1.msra.mxu0 %v75
  %800 = vmatprep.subr.mxu0 0.0
  %801 = vmatpush1.msra.mxu0 %v74
  %802 = vmatprep.subr.mxu0 0.0
  %803 = vmatpush1.msra.mxu0 %v73
  %804 = vmatprep.subr.mxu0 0.0
  %805 = vmatpush1.msra.mxu0 %v72
  %806 = vmatprep.subr.mxu0 0.0
  %807 = vmatpush1.msra.mxu0 %v71
  %808 = vmatprep.subr.mxu0 0.0
  %809 = vmatpush1.msra.mxu0 %v70
  %810 = vmatprep.subr.mxu0 0.0
  %811 = vmatpush1.msra.mxu0 %v69
  %812 = vmatprep.subr.mxu0 0.0
  %813 = vmatpush1.msra.mxu0 %v68
  %814 = vmatprep.subr.mxu0 0.0
  %815 = vmatpush2.msra.mxu0 0.0
  %816 = vmatprep.subr.mxu0 0.0
  %817 = vmatpush2.msra.mxu0 0.0
  %818 = vmatprep.subr.mxu0 0.0
  %819 = vmatpush2.msra.mxu0 0.0
  %820 = vmatprep.subr.mxu0 0.0
  %821 = vmatpush2.msra.mxu0 0.0
  %822 = vmatprep.subr.mxu0 0.0
  %823 = vmatpush2.msra.mxu0 0.0
  %824 = vmatprep.subr.mxu0 0.0
  %825 = vmatpush2.msra.mxu0 0.0
  %826 = vmatprep.subr.mxu0 0.0
  %827 = vmatpush2.msra.mxu0 0.0
  %828 = vmatprep.subr.mxu0 0.0
  %829 = vmatpush2.msra.mxu0 0.0
  %830 = vmatprep.subr.mxu0 0.0
  %831 = vmatpush2.msra.mxu0 0.0
  %832 = vmatprep.subr.mxu0 0.0
  %833 = vmatpush2.msra.mxu0 0.0
  %834 = vmatprep.subr.mxu0 0.0
  %835 = vmatpush2.msra.mxu0 0.0
  %836 = vmatprep.subr.mxu0 0.0
  %837 = vmatpush2.msra.mxu0 0.0
  %838 = vmatprep.subr.mxu0 0.0
  %839 = vmatpush2.msra.mxu0 0.0
  %840 = vmatprep.subr.mxu0 0.0
  %841 = vmatpush2.msra.mxu0 0.0
  %842 = vmatprep.subr.mxu0 0.0
  %843 = vmatpush2.msra.mxu0 0.0
  %844 = vmatprep.subr.mxu0 0.0
  %845 = vmatpush2.msra.mxu0 0.0
  %846 = vmatprep.mubr.f32.mxu0 0.0
  %847 = vmatmul.mubr.f32.gmra.mxu0 %v780
  %v848 = vpop.f32.mrf.mxu0
  %v849 = vadd.f32 %v262, %v848
  %v850 = vpop.f32.mrf.mxu0
  %851 = vmatprep.mubr.f32.mxu0 0.0
  %852 = vmatmul.mubr.f32.gmra.mxu0 %v781
  %v853 = vpop.f32.mrf.mxu0
  %v854 = vadd.f32 %v262, %v853
  %v855 = vpop.f32.mrf.mxu0
  %856 = vdwg.mxu0
  %s857 = scalar_lea.vmem %s3, 16
  %v858 = vld [vmem:[%s857] sm:$0xff]
  %v859 = vlaneseq
  %v860 = vshrl.u32 %v859, 7
  %v861 = vsub.s32 0, %v860
  %v862 = vrot.slane %v858, %v861
  %v863 = vmul.f32 %v862, %v616
  %v864 = vmul.f32 %v862, %v617
  %v865 = vlaneseq
  %v866 = vshrl.u32 %v865, 7
  %v867 = vsub.s32 1, %v866
  %v868 = vrot.slane %v858, %v867
  %v869 = vmul.f32 %v868, %v849
  %v870 = vmul.f32 %v868, %v854
  %v871 = vsub.f32 %v863, %v869
  %v872 = vsub.f32 %v864, %v870
  %s873 = scalar_lea.vmem %s4, 32
  %v874 = vld [vmem:[%s873] sm:$0xff]
  %v875 = vld [vmem:[%s873 + $0x8] sm:$0xff]
  %v876 = vadd.f32 %v871, %v874
  %v877 = vadd.f32 %v872, %v875
  %878 = vmatprep.subr.mxu0 0.0
  %879 = vmatpush1.msra.mxu0 %v50
  %880 = vmatprep.subr.mxu0 0.0
  %881 = vmatpush1.msra.mxu0 %v49
  %882 = vmatprep.subr.mxu0 0.0
  %883 = vmatpush1.msra.mxu0 %v48
  %884 = vmatprep.subr.mxu0 0.0
  %885 = vmatpush1.msra.mxu0 %v47
  %886 = vmatprep.subr.mxu0 0.0
  %887 = vmatpush1.msra.mxu0 %v46
  %888 = vmatprep.subr.mxu0 0.0
  %889 = vmatpush1.msra.mxu0 %v45
  %890 = vmatprep.subr.mxu0 0.0
  %891 = vmatpush1.msra.mxu0 %v44
  %892 = vmatprep.subr.mxu0 0.0
  %893 = vmatpush1.msra.mxu0 %v43
  %894 = vmatprep.subr.mxu0 0.0
  %895 = vmatpush1.msra.mxu0 %v42
  %896 = vmatprep.subr.mxu0 0.0
  %897 = vmatpush1.msra.mxu0 %v41
  %898 = vmatprep.subr.mxu0 0.0
  %899 = vmatpush1.msra.mxu0 %v40
  %900 = vmatprep.subr.mxu0 0.0
  %901 = vmatpush1.msra.mxu0 %v39
  %902 = vmatprep.subr.mxu0 0.0
  %903 = vmatpush1.msra.mxu0 %v38
  %904 = vmatprep.subr.mxu0 0.0
  %905 = vmatpush1.msra.mxu0 %v37
  %906 = vmatprep.subr.mxu0 0.0
  %907 = vmatpush1.msra.mxu0 %v36
  %908 = vmatprep.subr.mxu0 0.0
  %909 = vmatpush1.msra.mxu0 %v35
  %910 = vmatprep.subr.mxu0 0.0
  %911 = vmatpush2.msra.mxu0 0.0
  %912 = vmatprep.subr.mxu0 0.0
  %913 = vmatpush2.msra.mxu0 0.0
  %914 = vmatprep.subr.mxu0 0.0
  %915 = vmatpush2.msra.mxu0 0.0
  %916 = vmatprep.subr.mxu0 0.0
  %917 = vmatpush2.msra.mxu0 0.0
  %918 = vmatprep.subr.mxu0 0.0
  %919 = vmatpush2.msra.mxu0 0.0
  %920 = vmatprep.subr.mxu0 0.0
  %921 = vmatpush2.msra.mxu0 0.0
  %922 = vmatprep.subr.mxu0 0.0
  %923 = vmatpush2.msra.mxu0 0.0
  %924 = vmatprep.subr.mxu0 0.0
  %925 = vmatpush2.msra.mxu0 0.0
  %926 = vmatprep.subr.mxu0 0.0
  %927 = vmatpush2.msra.mxu0 0.0
  %928 = vmatprep.subr.mxu0 0.0
  %929 = vmatpush2.msra.mxu0 0.0
  %930 = vmatprep.subr.mxu0 0.0
  %931 = vmatpush2.msra.mxu0 0.0
  %932 = vmatprep.subr.mxu0 0.0
  %933 = vmatpush2.msra.mxu0 0.0
  %934 = vmatprep.subr.mxu0 0.0
  %935 = vmatpush2.msra.mxu0 0.0
  %936 = vmatprep.subr.mxu0 0.0
  %937 = vmatpush2.msra.mxu0 0.0
  %938 = vmatprep.subr.mxu0 0.0
  %939 = vmatpush2.msra.mxu0 0.0
  %940 = vmatprep.subr.mxu0 0.0
  %941 = vmatpush2.msra.mxu0 0.0
  %942 = vmatprep.mubr.f32.mxu0 0.0
  %943 = vmatmul.mubr.f32.gmra.mxu0 %v876
  %v944 = vpop.f32.mrf.mxu0
  %v945 = vadd.f32 %v85, %v944
  %v946 = vpop.f32.mrf.mxu0
  %947 = vmatprep.mubr.f32.mxu0 0.0
  %948 = vmatmul.mubr.f32.gmra.mxu0 %v877
  %v949 = vpop.f32.mrf.mxu0
  %v950 = vadd.f32 %v86, %v949
  %v951 = vpop.f32.mrf.mxu0
  %952 = vdwg.mxu0
  %s953 = scalar_lea.vmem %s2, 3
  %v954 = vld [vmem:[%s953] sm:$0x1]
  %v956 = vlaneseq
  %v957 = vshrl.u32 %v956, 7
  %v958 = vsub.s32 0, %v957
  %v959 = vrot.slane %v954, %v958
  %v961 = vadd.f32 %v945, %v959
  %v962 = vadd.f32 %v950, %v959
  %v963 = vmax.f32 %v961, 0.0
  %v964 = vmax.f32 %v962, 0.0
  %965 = vmatprep.subr.mxu0 0.0
  %966 = vmatpush1.msra.mxu0 %v66
  %967 = vmatprep.subr.mxu0 0.0
  %968 = vmatpush1.msra.mxu0 %v65
  %969 = vmatprep.subr.mxu0 0.0
  %970 = vmatpush1.msra.mxu0 %v64
  %971 = vmatprep.subr.mxu0 0.0
  %972 = vmatpush1.msra.mxu0 %v63
  %973 = vmatprep.subr.mxu0 0.0
  %974 = vmatpush1.msra.mxu0 %v62
  %975 = vmatprep.subr.mxu0 0.0
  %976 = vmatpush1.msra.mxu0 %v61
  %977 = vmatprep.subr.mxu0 0.0
  %978 = vmatpush1.msra.mxu0 %v60
  %979 = vmatprep.subr.mxu0 0.0
  %980 = vmatpush1.msra.mxu0 %v59
  %981 = vmatprep.subr.mxu0 0.0
  %982 = vmatpush1.msra.mxu0 %v58
  %983 = vmatprep.subr.mxu0 0.0
  %984 = vmatpush1.msra.mxu0 %v57
  %985 = vmatprep.subr.mxu0 0.0
  %986 = vmatpush1.msra.mxu0 %v56
  %987 = vmatprep.subr.mxu0 0.0
  %988 = vmatpush1.msra.mxu0 %v55
  %989 = vmatprep.subr.mxu0 0.0
  %990 = vmatpush1.msra.mxu0 %v54
  %991 = vmatprep.subr.mxu0 0.0
  %992 = vmatpush1.msra.mxu0 %v53
  %993 = vmatprep.subr.mxu0 0.0
  %994 = vmatpush1.msra.mxu0 %v52
  %995 = vmatprep.subr.mxu0 0.0
  %996 = vmatpush1.msra.mxu0 %v51
  %997 = vmatprep.subr.mxu0 0.0
  %998 = vmatpush2.msra.mxu0 0.0
  %999 = vmatprep.subr.mxu0 0.0
  %1000 = vmatpush2.msra.mxu0 0.0
  %1001 = vmatprep.subr.mxu0 0.0
  %1002 = vmatpush2.msra.mxu0 0.0
  %1003 = vmatprep.subr.mxu0 0.0
  %1004 = vmatpush2.msra.mxu0 0.0
  %1005 = vmatprep.subr.mxu0 0.0
  %1006 = vmatpush2.msra.mxu0 0.0
  %1007 = vmatprep.subr.mxu0 0.0
  %1008 = vmatpush2.msra.mxu0 0.0
  %1009 = vmatprep.subr.mxu0 0.0
  %1010 = vmatpush2.msra.mxu0 0.0
  %1011 = vmatprep.subr.mxu0 0.0
  %1012 = vmatpush2.msra.mxu0 0.0
  %1013 = vmatprep.subr.mxu0 0.0
  %1014 = vmatpush2.msra.mxu0 0.0
  %1015 = vmatprep.subr.mxu0 0.0
  %1016 = vmatpush2.msra.mxu0 0.0
  %1017 = vmatprep.subr.mxu0 0.0
  %1018 = vmatpush2.msra.mxu0 0.0
  %1019 = vmatprep.subr.mxu0 0.0
  %1020 = vmatpush2.msra.mxu0 0.0
  %1021 = vmatprep.subr.mxu0 0.0
  %1022 = vmatpush2.msra.mxu0 0.0
  %1023 = vmatprep.subr.mxu0 0.0
  %1024 = vmatpush2.msra.mxu0 0.0
  %1025 = vmatprep.subr.mxu0 0.0
  %1026 = vmatpush2.msra.mxu0 0.0
  %1027 = vmatprep.subr.mxu0 0.0
  %1028 = vmatpush2.msra.mxu0 0.0
  %1029 = vmatprep.mubr.f32.mxu0 0.0
  %1030 = vmatmul.mubr.f32.gmra.mxu0 %v963
  %v1031 = vpop.f32.mrf.mxu0
  %v1032 = vadd.f32 %v179, %v1031
  %v1033 = vpop.f32.mrf.mxu0
  %1034 = vmatprep.mubr.f32.mxu0 0.0
  %1035 = vmatmul.mubr.f32.gmra.mxu0 %v964
  %v1036 = vpop.f32.mrf.mxu0
  %v1037 = vadd.f32 %v179, %v1036
  %v1038 = vpop.f32.mrf.mxu0
  %1039 = vdwg.mxu0
  %v1040 = vmax.f32 %v1032, 0.0
  %v1041 = vmax.f32 %v1037, 0.0
  %1042 = vmatprep.subr.mxu0 0.0
  %1043 = vmatpush1.msra.mxu0 %v83
  %1044 = vmatprep.subr.mxu0 0.0
  %1045 = vmatpush1.msra.mxu0 %v82
  %1046 = vmatprep.subr.mxu0 0.0
  %1047 = vmatpush1.msra.mxu0 %v81
  %1048 = vmatprep.subr.mxu0 0.0
  %1049 = vmatpush1.msra.mxu0 %v80
  %1050 = vmatprep.subr.mxu0 0.0
  %1051 = vmatpush1.msra.mxu0 %v79
  %1052 = vmatprep.subr.mxu0 0.0
  %1053 = vmatpush1.msra.mxu0 %v78
  %1054 = vmatprep.subr.mxu0 0.0
  %1055 = vmatpush1.msra.mxu0 %v77
  %1056 = vmatprep.subr.mxu0 0.0
  %1057 = vmatpush1.msra.mxu0 %v76
  %1058 = vmatprep.subr.mxu0 0.0
  %1059 = vmatpush1.msra.mxu0 %v75
  %1060 = vmatprep.subr.mxu0 0.0
  %1061 = vmatpush1.msra.mxu0 %v74
  %1062 = vmatprep.subr.mxu0 0.0
  %1063 = vmatpush1.msra.mxu0 %v73
  %1064 = vmatprep.subr.mxu0 0.0
  %1065 = vmatpush1.msra.mxu0 %v72
  %1066 = vmatprep.subr.mxu0 0.0
  %1067 = vmatpush1.msra.mxu0 %v71
  %1068 = vmatprep.subr.mxu0 0.0
  %1069 = vmatpush1.msra.mxu0 %v70
  %1070 = vmatprep.subr.mxu0 0.0
  %1071 = vmatpush1.msra.mxu0 %v69
  %1072 = vmatprep.subr.mxu0 0.0
  %1073 = vmatpush1.msra.mxu0 %v68
  %1074 = vmatprep.subr.mxu0 0.0
  %1075 = vmatpush2.msra.mxu0 0.0
  %1076 = vmatprep.subr.mxu0 0.0
  %1077 = vmatpush2.msra.mxu0 0.0
  %1078 = vmatprep.subr.mxu0 0.0
  %1079 = vmatpush2.msra.mxu0 0.0
  %1080 = vmatprep.subr.mxu0 0.0
  %1081 = vmatpush2.msra.mxu0 0.0
  %1082 = vmatprep.subr.mxu0 0.0
  %1083 = vmatpush2.msra.mxu0 0.0
  %1084 = vmatprep.subr.mxu0 0.0
  %1085 = vmatpush2.msra.mxu0 0.0
  %1086 = vmatprep.subr.mxu0 0.0
  %1087 = vmatpush2.msra.mxu0 0.0
  %1088 = vmatprep.subr.mxu0 0.0
  %1089 = vmatpush2.msra.mxu0 0.0
  %1090 = vmatprep.subr.mxu0 0.0
  %1091 = vmatpush2.msra.mxu0 0.0
  %1092 = vmatprep.subr.mxu0 0.0
  %1093 = vmatpush2.msra.mxu0 0.0
  %1094 = vmatprep.subr.mxu0 0.0
  %1095 = vmatpush2.msra.mxu0 0.0
  %1096 = vmatprep.subr.mxu0 0.0
  %1097 = vmatpush2.msra.mxu0 0.0
  %1098 = vmatprep.subr.mxu0 0.0
  %1099 = vmatpush2.msra.mxu0 0.0
  %1100 = vmatprep.subr.mxu0 0.0
  %1101 = vmatpush2.msra.mxu0 0.0
  %1102 = vmatprep.subr.mxu0 0.0
  %1103 = vmatpush2.msra.mxu0 0.0
  %1104 = vmatprep.subr.mxu0 0.0
  %1105 = vmatpush2.msra.mxu0 0.0
  %1106 = vmatprep.mubr.f32.mxu0 0.0
  %1107 = vmatmul.mubr.f32.gmra.mxu0 %v1040
  %v1108 = vpop.f32.mrf.mxu0
  %v1109 = vadd.f32 %v262, %v1108
  %v1110 = vpop.f32.mrf.mxu0
  %1111 = vmatprep.mubr.f32.mxu0 0.0
  %1112 = vmatmul.mubr.f32.gmra.mxu0 %v1041
  %v1113 = vpop.f32.mrf.mxu0
  %v1114 = vadd.f32 %v262, %v1113
  %v1115 = vpop.f32.mrf.mxu0
  %1116 = vdwg.mxu0
  %s1117 = scalar_lea.vmem %s3, 24
  %v1118 = vld [vmem:[%s1117] sm:$0xff]
  %v1119 = vlaneseq
  %v1120 = vshrl.u32 %v1119, 7
  %v1121 = vsub.s32 0, %v1120
  %v1122 = vrot.slane %v1118, %v1121
  %v1123 = vmul.f32 %v1122, %v876
  %v1124 = vmul.f32 %v1122, %v877
  %v1125 = vlaneseq
  %v1126 = vshrl.u32 %v1125, 7
  %v1127 = vsub.s32 1, %v1126
  %v1128 = vrot.slane %v1118, %v1127
  %v1129 = vmul.f32 %v1128, %v1109
  %v1130 = vmul.f32 %v1128, %v1114
  %v1131 = vsub.f32 %v1123, %v1129
  %v1132 = vsub.f32 %v1124, %v1130
  %s1133 = scalar_lea.vmem %s4, 48
  %v1134 = vld [vmem:[%s1133] sm:$0xff]
  %v1135 = vld [vmem:[%s1133 + $0x8] sm:$0xff]
  %v1136 = vadd.f32 %v1131, %v1134
  %v1137 = vadd.f32 %v1132, %v1135
  %1138 = vmatprep.subr.mxu0 0.0
  %1139 = vmatpush1.msra.mxu0 %v50
  %1140 = vmatprep.subr.mxu0 0.0
  %1141 = vmatpush1.msra.mxu0 %v49
  %1142 = vmatprep.subr.mxu0 0.0
  %1143 = vmatpush1.msra.mxu0 %v48
  %1144 = vmatprep.subr.mxu0 0.0
  %1145 = vmatpush1.msra.mxu0 %v47
  %1146 = vmatprep.subr.mxu0 0.0
  %1147 = vmatpush1.msra.mxu0 %v46
  %1148 = vmatprep.subr.mxu0 0.0
  %1149 = vmatpush1.msra.mxu0 %v45
  %1150 = vmatprep.subr.mxu0 0.0
  %1151 = vmatpush1.msra.mxu0 %v44
  %1152 = vmatprep.subr.mxu0 0.0
  %1153 = vmatpush1.msra.mxu0 %v43
  %1154 = vmatprep.subr.mxu0 0.0
  %1155 = vmatpush1.msra.mxu0 %v42
  %1156 = vmatprep.subr.mxu0 0.0
  %1157 = vmatpush1.msra.mxu0 %v41
  %1158 = vmatprep.subr.mxu0 0.0
  %1159 = vmatpush1.msra.mxu0 %v40
  %1160 = vmatprep.subr.mxu0 0.0
  %1161 = vmatpush1.msra.mxu0 %v39
  %1162 = vmatprep.subr.mxu0 0.0
  %1163 = vmatpush1.msra.mxu0 %v38
  %1164 = vmatprep.subr.mxu0 0.0
  %1165 = vmatpush1.msra.mxu0 %v37
  %1166 = vmatprep.subr.mxu0 0.0
  %1167 = vmatpush1.msra.mxu0 %v36
  %1168 = vmatprep.subr.mxu0 0.0
  %1169 = vmatpush1.msra.mxu0 %v35
  %1170 = vmatprep.subr.mxu0 0.0
  %1171 = vmatpush2.msra.mxu0 0.0
  %1172 = vmatprep.subr.mxu0 0.0
  %1173 = vmatpush2.msra.mxu0 0.0
  %1174 = vmatprep.subr.mxu0 0.0
  %1175 = vmatpush2.msra.mxu0 0.0
  %1176 = vmatprep.subr.mxu0 0.0
  %1177 = vmatpush2.msra.mxu0 0.0
  %1178 = vmatprep.subr.mxu0 0.0
  %1179 = vmatpush2.msra.mxu0 0.0
  %1180 = vmatprep.subr.mxu0 0.0
  %1181 = vmatpush2.msra.mxu0 0.0
  %1182 = vmatprep.subr.mxu0 0.0
  %1183 = vmatpush2.msra.mxu0 0.0
  %1184 = vmatprep.subr.mxu0 0.0
  %1185 = vmatpush2.msra.mxu0 0.0
  %1186 = vmatprep.subr.mxu0 0.0
  %1187 = vmatpush2.msra.mxu0 0.0
  %1188 = vmatprep.subr.mxu0 0.0
  %1189 = vmatpush2.msra.mxu0 0.0
  %1190 = vmatprep.subr.mxu0 0.0
  %1191 = vmatpush2.msra.mxu0 0.0
  %1192 = vmatprep.subr.mxu0 0.0
  %1193 = vmatpush2.msra.mxu0 0.0
  %1194 = vmatprep.subr.mxu0 0.0
  %1195 = vmatpush2.msra.mxu0 0.0
  %1196 = vmatprep.subr.mxu0 0.0
  %1197 = vmatpush2.msra.mxu0 0.0
  %1198 = vmatprep.subr.mxu0 0.0
  %1199 = vmatpush2.msra.mxu0 0.0
  %1200 = vmatprep.subr.mxu0 0.0
  %1201 = vmatpush2.msra.mxu0 0.0
  %1202 = vmatprep.mubr.f32.mxu0 0.0
  %1203 = vmatmul.mubr.f32.gmra.mxu0 %v1136
  %v1204 = vpop.f32.mrf.mxu0
  %v1205 = vadd.f32 %v85, %v1204
  %v1206 = vpop.f32.mrf.mxu0
  %1207 = vmatprep.mubr.f32.mxu0 0.0
  %1208 = vmatmul.mubr.f32.gmra.mxu0 %v1137
  %v1209 = vpop.f32.mrf.mxu0
  %v1210 = vadd.f32 %v86, %v1209
  %v1211 = vpop.f32.mrf.mxu0
  %1212 = vdwg.mxu0
  %s1213 = scalar_lea.vmem %s2, 4
  %v1214 = vld [vmem:[%s1213] sm:$0x1]
  %v1216 = vlaneseq
  %v1217 = vshrl.u32 %v1216, 7
  %v1218 = vsub.s32 0, %v1217
  %v1219 = vrot.slane %v1214, %v1218
  %v1221 = vadd.f32 %v1205, %v1219
  %v1222 = vadd.f32 %v1210, %v1219
  %v1223 = vmax.f32 %v1221, 0.0
  %v1224 = vmax.f32 %v1222, 0.0
  %1225 = vmatprep.subr.mxu0 0.0
  %1226 = vmatpush1.msra.mxu0 %v66
  %1227 = vmatprep.subr.mxu0 0.0
  %1228 = vmatpush1.msra.mxu0 %v65
  %1229 = vmatprep.subr.mxu0 0.0
  %1230 = vmatpush1.msra.mxu0 %v64
  %1231 = vmatprep.subr.mxu0 0.0
  %1232 = vmatpush1.msra.mxu0 %v63
  %1233 = vmatprep.subr.mxu0 0.0
  %1234 = vmatpush1.msra.mxu0 %v62
  %1235 = vmatprep.subr.mxu0 0.0
  %1236 = vmatpush1.msra.mxu0 %v61
  %1237 = vmatprep.subr.mxu0 0.0
  %1238 = vmatpush1.msra.mxu0 %v60
  %1239 = vmatprep.subr.mxu0 0.0
  %1240 = vmatpush1.msra.mxu0 %v59
  %1241 = vmatprep.subr.mxu0 0.0
  %1242 = vmatpush1.msra.mxu0 %v58
  %1243 = vmatprep.subr.mxu0 0.0
  %1244 = vmatpush1.msra.mxu0 %v57
  %1245 = vmatprep.subr.mxu0 0.0
  %1246 = vmatpush1.msra.mxu0 %v56
  %1247 = vmatprep.subr.mxu0 0.0
  %1248 = vmatpush1.msra.mxu0 %v55
  %1249 = vmatprep.subr.mxu0 0.0
  %1250 = vmatpush1.msra.mxu0 %v54
  %1251 = vmatprep.subr.mxu0 0.0
  %1252 = vmatpush1.msra.mxu0 %v53
  %1253 = vmatprep.subr.mxu0 0.0
  %1254 = vmatpush1.msra.mxu0 %v52
  %1255 = vmatprep.subr.mxu0 0.0
  %1256 = vmatpush1.msra.mxu0 %v51
  %1257 = vmatprep.subr.mxu0 0.0
  %1258 = vmatpush2.msra.mxu0 0.0
  %1259 = vmatprep.subr.mxu0 0.0
  %1260 = vmatpush2.msra.mxu0 0.0
  %1261 = vmatprep.subr.mxu0 0.0
  %1262 = vmatpush2.msra.mxu0 0.0
  %1263 = vmatprep.subr.mxu0 0.0
  %1264 = vmatpush2.msra.mxu0 0.0
  %1265 = vmatprep.subr.mxu0 0.0
  %1266 = vmatpush2.msra.mxu0 0.0
  %1267 = vmatprep.subr.mxu0 0.0
  %1268 = vmatpush2.msra.mxu0 0.0
  %1269 = vmatprep.subr.mxu0 0.0
  %1270 = vmatpush2.msra.mxu0 0.0
  %1271 = vmatprep.subr.mxu0 0.0
  %1272 = vmatpush2.msra.mxu0 0.0
  %1273 = vmatprep.subr.mxu0 0.0
  %1274 = vmatpush2.msra.mxu0 0.0
  %1275 = vmatprep.subr.mxu0 0.0
  %1276 = vmatpush2.msra.mxu0 0.0
  %1277 = vmatprep.subr.mxu0 0.0
  %1278 = vmatpush2.msra.mxu0 0.0
  %1279 = vmatprep.subr.mxu0 0.0
  %1280 = vmatpush2.msra.mxu0 0.0
  %1281 = vmatprep.subr.mxu0 0.0
  %1282 = vmatpush2.msra.mxu0 0.0
  %1283 = vmatprep.subr.mxu0 0.0
  %1284 = vmatpush2.msra.mxu0 0.0
  %1285 = vmatprep.subr.mxu0 0.0
  %1286 = vmatpush2.msra.mxu0 0.0
  %1287 = vmatprep.subr.mxu0 0.0
  %1288 = vmatpush2.msra.mxu0 0.0
  %1289 = vmatprep.mubr.f32.mxu0 0.0
  %1290 = vmatmul.mubr.f32.gmra.mxu0 %v1223
  %v1291 = vpop.f32.mrf.mxu0
  %v1292 = vadd.f32 %v179, %v1291
  %v1293 = vpop.f32.mrf.mxu0
  %1294 = vmatprep.mubr.f32.mxu0 0.0
  %1295 = vmatmul.mubr.f32.gmra.mxu0 %v1224
  %v1296 = vpop.f32.mrf.mxu0
  %v1297 = vadd.f32 %v179, %v1296
  %v1298 = vpop.f32.mrf.mxu0
  %1299 = vdwg.mxu0
  %v1300 = vmax.f32 %v1292, 0.0
  %v1301 = vmax.f32 %v1297, 0.0
  %1302 = vmatprep.subr.mxu0 0.0
  %1303 = vmatpush1.msra.mxu0 %v83
  %1304 = vmatprep.subr.mxu0 0.0
  %1305 = vmatpush1.msra.mxu0 %v82
  %1306 = vmatprep.subr.mxu0 0.0
  %1307 = vmatpush1.msra.mxu0 %v81
  %1308 = vmatprep.subr.mxu0 0.0
  %1309 = vmatpush1.msra.mxu0 %v80
  %1310 = vmatprep.subr.mxu0 0.0
  %1311 = vmatpush1.msra.mxu0 %v79
  %1312 = vmatprep.subr.mxu0 0.0
  %1313 = vmatpush1.msra.mxu0 %v78
  %1314 = vmatprep.subr.mxu0 0.0
  %1315 = vmatpush1.msra.mxu0 %v77
  %1316 = vmatprep.subr.mxu0 0.0
  %1317 = vmatpush1.msra.mxu0 %v76
  %1318 = vmatprep.subr.mxu0 0.0
  %1319 = vmatpush1.msra.mxu0 %v75
  %1320 = vmatprep.subr.mxu0 0.0
  %1321 = vmatpush1.msra.mxu0 %v74
  %1322 = vmatprep.subr.mxu0 0.0
  %1323 = vmatpush1.msra.mxu0 %v73
  %1324 = vmatprep.subr.mxu0 0.0
  %1325 = vmatpush1.msra.mxu0 %v72
  %1326 = vmatprep.subr.mxu0 0.0
  %1327 = vmatpush1.msra.mxu0 %v71
  %1328 = vmatprep.subr.mxu0 0.0
  %1329 = vmatpush1.msra.mxu0 %v70
  %1330 = vmatprep.subr.mxu0 0.0
  %1331 = vmatpush1.msra.mxu0 %v69
  %1332 = vmatprep.subr.mxu0 0.0
  %1333 = vmatpush1.msra.mxu0 %v68
  %1334 = vmatprep.subr.mxu0 0.0
  %1335 = vmatpush2.msra.mxu0 0.0
  %1336 = vmatprep.subr.mxu0 0.0
  %1337 = vmatpush2.msra.mxu0 0.0
  %1338 = vmatprep.subr.mxu0 0.0
  %1339 = vmatpush2.msra.mxu0 0.0
  %1340 = vmatprep.subr.mxu0 0.0
  %1341 = vmatpush2.msra.mxu0 0.0
  %1342 = vmatprep.subr.mxu0 0.0
  %1343 = vmatpush2.msra.mxu0 0.0
  %1344 = vmatprep.subr.mxu0 0.0
  %1345 = vmatpush2.msra.mxu0 0.0
  %1346 = vmatprep.subr.mxu0 0.0
  %1347 = vmatpush2.msra.mxu0 0.0
  %1348 = vmatprep.subr.mxu0 0.0
  %1349 = vmatpush2.msra.mxu0 0.0
  %1350 = vmatprep.subr.mxu0 0.0
  %1351 = vmatpush2.msra.mxu0 0.0
  %1352 = vmatprep.subr.mxu0 0.0
  %1353 = vmatpush2.msra.mxu0 0.0
  %1354 = vmatprep.subr.mxu0 0.0
  %1355 = vmatpush2.msra.mxu0 0.0
  %1356 = vmatprep.subr.mxu0 0.0
  %1357 = vmatpush2.msra.mxu0 0.0
  %1358 = vmatprep.subr.mxu0 0.0
  %1359 = vmatpush2.msra.mxu0 0.0
  %1360 = vmatprep.subr.mxu0 0.0
  %1361 = vmatpush2.msra.mxu0 0.0
  %1362 = vmatprep.subr.mxu0 0.0
  %1363 = vmatpush2.msra.mxu0 0.0
  %1364 = vmatprep.subr.mxu0 0.0
  %1365 = vmatpush2.msra.mxu0 0.0
  %1366 = vmatprep.mubr.f32.mxu0 0.0
  %1367 = vmatmul.mubr.f32.gmra.mxu0 %v1300
  %v1368 = vpop.f32.mrf.mxu0
  %v1369 = vadd.f32 %v262, %v1368
  %v1370 = vpop.f32.mrf.mxu0
  %1371 = vmatprep.mubr.f32.mxu0 0.0
  %1372 = vmatmul.mubr.f32.gmra.mxu0 %v1301
  %v1373 = vpop.f32.mrf.mxu0
  %v1374 = vadd.f32 %v262, %v1373
  %v1375 = vpop.f32.mrf.mxu0
  %1376 = vdwg.mxu0
  %s1377 = scalar_lea.vmem %s3, 32
  %v1378 = vld [vmem:[%s1377] sm:$0xff]
  %v1379 = vlaneseq
  %v1380 = vshrl.u32 %v1379, 7
  %v1381 = vsub.s32 0, %v1380
  %v1382 = vrot.slane %v1378, %v1381
  %v1383 = vmul.f32 %v1382, %v1136
  %v1384 = vmul.f32 %v1382, %v1137
  %v1385 = vlaneseq
  %v1386 = vshrl.u32 %v1385, 7
  %v1387 = vsub.s32 1, %v1386
  %v1388 = vrot.slane %v1378, %v1387
  %v1389 = vmul.f32 %v1388, %v1369
  %v1390 = vmul.f32 %v1388, %v1374
  %v1391 = vsub.f32 %v1383, %v1389
  %v1392 = vsub.f32 %v1384, %v1390
  %s1393 = scalar_lea.vmem %s4, 64
  %v1394 = vld [vmem:[%s1393] sm:$0xff]
  %v1395 = vld [vmem:[%s1393 + $0x8] sm:$0xff]
  %v1396 = vadd.f32 %v1391, %v1394
  %v1397 = vadd.f32 %v1392, %v1395
  %1398 = vmatprep.subr.mxu0 0.0
  %1399 = vmatpush1.msra.mxu0 %v50
  %1400 = vmatprep.subr.mxu0 0.0
  %1401 = vmatpush1.msra.mxu0 %v49
  %1402 = vmatprep.subr.mxu0 0.0
  %1403 = vmatpush1.msra.mxu0 %v48
  %1404 = vmatprep.subr.mxu0 0.0
  %1405 = vmatpush1.msra.mxu0 %v47
  %1406 = vmatprep.subr.mxu0 0.0
  %1407 = vmatpush1.msra.mxu0 %v46
  %1408 = vmatprep.subr.mxu0 0.0
  %1409 = vmatpush1.msra.mxu0 %v45
  %1410 = vmatprep.subr.mxu0 0.0
  %1411 = vmatpush1.msra.mxu0 %v44
  %1412 = vmatprep.subr.mxu0 0.0
  %1413 = vmatpush1.msra.mxu0 %v43
  %1414 = vmatprep.subr.mxu0 0.0
  %1415 = vmatpush1.msra.mxu0 %v42
  %1416 = vmatprep.subr.mxu0 0.0
  %1417 = vmatpush1.msra.mxu0 %v41
  %1418 = vmatprep.subr.mxu0 0.0
  %1419 = vmatpush1.msra.mxu0 %v40
  %1420 = vmatprep.subr.mxu0 0.0
  %1421 = vmatpush1.msra.mxu0 %v39
  %1422 = vmatprep.subr.mxu0 0.0
  %1423 = vmatpush1.msra.mxu0 %v38
  %1424 = vmatprep.subr.mxu0 0.0
  %1425 = vmatpush1.msra.mxu0 %v37
  %1426 = vmatprep.subr.mxu0 0.0
  %1427 = vmatpush1.msra.mxu0 %v36
  %1428 = vmatprep.subr.mxu0 0.0
  %1429 = vmatpush1.msra.mxu0 %v35
  %1430 = vmatprep.subr.mxu0 0.0
  %1431 = vmatpush2.msra.mxu0 0.0
  %1432 = vmatprep.subr.mxu0 0.0
  %1433 = vmatpush2.msra.mxu0 0.0
  %1434 = vmatprep.subr.mxu0 0.0
  %1435 = vmatpush2.msra.mxu0 0.0
  %1436 = vmatprep.subr.mxu0 0.0
  %1437 = vmatpush2.msra.mxu0 0.0
  %1438 = vmatprep.subr.mxu0 0.0
  %1439 = vmatpush2.msra.mxu0 0.0
  %1440 = vmatprep.subr.mxu0 0.0
  %1441 = vmatpush2.msra.mxu0 0.0
  %1442 = vmatprep.subr.mxu0 0.0
  %1443 = vmatpush2.msra.mxu0 0.0
  %1444 = vmatprep.subr.mxu0 0.0
  %1445 = vmatpush2.msra.mxu0 0.0
  %1446 = vmatprep.subr.mxu0 0.0
  %1447 = vmatpush2.msra.mxu0 0.0
  %1448 = vmatprep.subr.mxu0 0.0
  %1449 = vmatpush2.msra.mxu0 0.0
  %1450 = vmatprep.subr.mxu0 0.0
  %1451 = vmatpush2.msra.mxu0 0.0
  %1452 = vmatprep.subr.mxu0 0.0
  %1453 = vmatpush2.msra.mxu0 0.0
  %1454 = vmatprep.subr.mxu0 0.0
  %1455 = vmatpush2.msra.mxu0 0.0
  %1456 = vmatprep.subr.mxu0 0.0
  %1457 = vmatpush2.msra.mxu0 0.0
  %1458 = vmatprep.subr.mxu0 0.0
  %1459 = vmatpush2.msra.mxu0 0.0
  %1460 = vmatprep.subr.mxu0 0.0
  %1461 = vmatpush2.msra.mxu0 0.0
  %1462 = vmatprep.mubr.f32.mxu0 0.0
  %1463 = vmatmul.mubr.f32.gmra.mxu0 %v1396
  %v1464 = vpop.f32.mrf.mxu0
  %v1465 = vadd.f32 %v85, %v1464
  %v1466 = vpop.f32.mrf.mxu0
  %1467 = vmatprep.mubr.f32.mxu0 0.0
  %1468 = vmatmul.mubr.f32.gmra.mxu0 %v1397
  %v1469 = vpop.f32.mrf.mxu0
  %v1470 = vadd.f32 %v86, %v1469
  %v1471 = vpop.f32.mrf.mxu0
  %1472 = vdwg.mxu0
  %s1473 = scalar_lea.vmem %s2, 5
  %v1474 = vld [vmem:[%s1473] sm:$0x1]
  %v1476 = vlaneseq
  %v1477 = vshrl.u32 %v1476, 7
  %v1478 = vsub.s32 0, %v1477
  %v1479 = vrot.slane %v1474, %v1478
  %v1481 = vadd.f32 %v1465, %v1479
  %v1482 = vadd.f32 %v1470, %v1479
  %v1483 = vmax.f32 %v1481, 0.0
  %v1484 = vmax.f32 %v1482, 0.0
  %1485 = vmatprep.subr.mxu0 0.0
  %1486 = vmatpush1.msra.mxu0 %v66
  %1487 = vmatprep.subr.mxu0 0.0
  %1488 = vmatpush1.msra.mxu0 %v65
  %1489 = vmatprep.subr.mxu0 0.0
  %1490 = vmatpush1.msra.mxu0 %v64
  %1491 = vmatprep.subr.mxu0 0.0
  %1492 = vmatpush1.msra.mxu0 %v63
  %1493 = vmatprep.subr.mxu0 0.0
  %1494 = vmatpush1.msra.mxu0 %v62
  %1495 = vmatprep.subr.mxu0 0.0
  %1496 = vmatpush1.msra.mxu0 %v61
  %1497 = vmatprep.subr.mxu0 0.0
  %1498 = vmatpush1.msra.mxu0 %v60
  %1499 = vmatprep.subr.mxu0 0.0
  %1500 = vmatpush1.msra.mxu0 %v59
  %1501 = vmatprep.subr.mxu0 0.0
  %1502 = vmatpush1.msra.mxu0 %v58
  %1503 = vmatprep.subr.mxu0 0.0
  %1504 = vmatpush1.msra.mxu0 %v57
  %1505 = vmatprep.subr.mxu0 0.0
  %1506 = vmatpush1.msra.mxu0 %v56
  %1507 = vmatprep.subr.mxu0 0.0
  %1508 = vmatpush1.msra.mxu0 %v55
  %1509 = vmatprep.subr.mxu0 0.0
  %1510 = vmatpush1.msra.mxu0 %v54
  %1511 = vmatprep.subr.mxu0 0.0
  %1512 = vmatpush1.msra.mxu0 %v53
  %1513 = vmatprep.subr.mxu0 0.0
  %1514 = vmatpush1.msra.mxu0 %v52
  %1515 = vmatprep.subr.mxu0 0.0
  %1516 = vmatpush1.msra.mxu0 %v51
  %1517 = vmatprep.subr.mxu0 0.0
  %1518 = vmatpush2.msra.mxu0 0.0
  %1519 = vmatprep.subr.mxu0 0.0
  %1520 = vmatpush2.msra.mxu0 0.0
  %1521 = vmatprep.subr.mxu0 0.0
  %1522 = vmatpush2.msra.mxu0 0.0
  %1523 = vmatprep.subr.mxu0 0.0
  %1524 = vmatpush2.msra.mxu0 0.0
  %1525 = vmatprep.subr.mxu0 0.0
  %1526 = vmatpush2.msra.mxu0 0.0
  %1527 = vmatprep.subr.mxu0 0.0
  %1528 = vmatpush2.msra.mxu0 0.0
  %1529 = vmatprep.subr.mxu0 0.0
  %1530 = vmatpush2.msra.mxu0 0.0
  %1531 = vmatprep.subr.mxu0 0.0
  %1532 = vmatpush2.msra.mxu0 0.0
  %1533 = vmatprep.subr.mxu0 0.0
  %1534 = vmatpush2.msra.mxu0 0.0
  %1535 = vmatprep.subr.mxu0 0.0
  %1536 = vmatpush2.msra.mxu0 0.0
  %1537 = vmatprep.subr.mxu0 0.0
  %1538 = vmatpush2.msra.mxu0 0.0
  %1539 = vmatprep.subr.mxu0 0.0
  %1540 = vmatpush2.msra.mxu0 0.0
  %1541 = vmatprep.subr.mxu0 0.0
  %1542 = vmatpush2.msra.mxu0 0.0
  %1543 = vmatprep.subr.mxu0 0.0
  %1544 = vmatpush2.msra.mxu0 0.0
  %1545 = vmatprep.subr.mxu0 0.0
  %1546 = vmatpush2.msra.mxu0 0.0
  %1547 = vmatprep.subr.mxu0 0.0
  %1548 = vmatpush2.msra.mxu0 0.0
  %1549 = vmatprep.mubr.f32.mxu0 0.0
  %1550 = vmatmul.mubr.f32.gmra.mxu0 %v1483
  %v1551 = vpop.f32.mrf.mxu0
  %v1552 = vadd.f32 %v179, %v1551
  %v1553 = vpop.f32.mrf.mxu0
  %1554 = vmatprep.mubr.f32.mxu0 0.0
  %1555 = vmatmul.mubr.f32.gmra.mxu0 %v1484
  %v1556 = vpop.f32.mrf.mxu0
  %v1557 = vadd.f32 %v179, %v1556
  %v1558 = vpop.f32.mrf.mxu0
  %1559 = vdwg.mxu0
  %v1560 = vmax.f32 %v1552, 0.0
  %v1561 = vmax.f32 %v1557, 0.0
  %1562 = vmatprep.subr.mxu0 0.0
  %1563 = vmatpush1.msra.mxu0 %v83
  %1564 = vmatprep.subr.mxu0 0.0
  %1565 = vmatpush1.msra.mxu0 %v82
  %1566 = vmatprep.subr.mxu0 0.0
  %1567 = vmatpush1.msra.mxu0 %v81
  %1568 = vmatprep.subr.mxu0 0.0
  %1569 = vmatpush1.msra.mxu0 %v80
  %1570 = vmatprep.subr.mxu0 0.0
  %1571 = vmatpush1.msra.mxu0 %v79
  %1572 = vmatprep.subr.mxu0 0.0
  %1573 = vmatpush1.msra.mxu0 %v78
  %1574 = vmatprep.subr.mxu0 0.0
  %1575 = vmatpush1.msra.mxu0 %v77
  %1576 = vmatprep.subr.mxu0 0.0
  %1577 = vmatpush1.msra.mxu0 %v76
  %1578 = vmatprep.subr.mxu0 0.0
  %1579 = vmatpush1.msra.mxu0 %v75
  %1580 = vmatprep.subr.mxu0 0.0
  %1581 = vmatpush1.msra.mxu0 %v74
  %1582 = vmatprep.subr.mxu0 0.0
  %1583 = vmatpush1.msra.mxu0 %v73
  %1584 = vmatprep.subr.mxu0 0.0
  %1585 = vmatpush1.msra.mxu0 %v72
  %1586 = vmatprep.subr.mxu0 0.0
  %1587 = vmatpush1.msra.mxu0 %v71
  %1588 = vmatprep.subr.mxu0 0.0
  %1589 = vmatpush1.msra.mxu0 %v70
  %1590 = vmatprep.subr.mxu0 0.0
  %1591 = vmatpush1.msra.mxu0 %v69
  %1592 = vmatprep.subr.mxu0 0.0
  %1593 = vmatpush1.msra.mxu0 %v68
  %1594 = vmatprep.subr.mxu0 0.0
  %1595 = vmatpush2.msra.mxu0 0.0
  %1596 = vmatprep.subr.mxu0 0.0
  %1597 = vmatpush2.msra.mxu0 0.0
  %1598 = vmatprep.subr.mxu0 0.0
  %1599 = vmatpush2.msra.mxu0 0.0
  %1600 = vmatprep.subr.mxu0 0.0
  %1601 = vmatpush2.msra.mxu0 0.0
  %1602 = vmatprep.subr.mxu0 0.0
  %1603 = vmatpush2.msra.mxu0 0.0
  %1604 = vmatprep.subr.mxu0 0.0
  %1605 = vmatpush2.msra.mxu0 0.0
  %1606 = vmatprep.subr.mxu0 0.0
  %1607 = vmatpush2.msra.mxu0 0.0
  %1608 = vmatprep.subr.mxu0 0.0
  %1609 = vmatpush2.msra.mxu0 0.0
  %1610 = vmatprep.subr.mxu0 0.0
  %1611 = vmatpush2.msra.mxu0 0.0
  %1612 = vmatprep.subr.mxu0 0.0
  %1613 = vmatpush2.msra.mxu0 0.0
  %1614 = vmatprep.subr.mxu0 0.0
  %1615 = vmatpush2.msra.mxu0 0.0
  %1616 = vmatprep.subr.mxu0 0.0
  %1617 = vmatpush2.msra.mxu0 0.0
  %1618 = vmatprep.subr.mxu0 0.0
  %1619 = vmatpush2.msra.mxu0 0.0
  %1620 = vmatprep.subr.mxu0 0.0
  %1621 = vmatpush2.msra.mxu0 0.0
  %1622 = vmatprep.subr.mxu0 0.0
  %1623 = vmatpush2.msra.mxu0 0.0
  %1624 = vmatprep.subr.mxu0 0.0
  %1625 = vmatpush2.msra.mxu0 0.0
  %1626 = vmatprep.mubr.f32.mxu0 0.0
  %1627 = vmatmul.mubr.f32.gmra.mxu0 %v1560
  %v1628 = vpop.f32.mrf.mxu0
  %v1629 = vadd.f32 %v262, %v1628
  %v1630 = vpop.f32.mrf.mxu0
  %1631 = vmatprep.mubr.f32.mxu0 0.0
  %1632 = vmatmul.mubr.f32.gmra.mxu0 %v1561
  %v1633 = vpop.f32.mrf.mxu0
  %v1634 = vadd.f32 %v262, %v1633
  %v1635 = vpop.f32.mrf.mxu0
  %1636 = vdwg.mxu0
  %s1637 = scalar_lea.vmem %s3, 40
  %v1638 = vld [vmem:[%s1637] sm:$0xff]
  %v1639 = vlaneseq
  %v1640 = vshrl.u32 %v1639, 7
  %v1641 = vsub.s32 0, %v1640
  %v1642 = vrot.slane %v1638, %v1641
  %v1643 = vmul.f32 %v1642, %v1396
  %v1644 = vmul.f32 %v1642, %v1397
  %v1645 = vlaneseq
  %v1646 = vshrl.u32 %v1645, 7
  %v1647 = vsub.s32 1, %v1646
  %v1648 = vrot.slane %v1638, %v1647
  %v1649 = vmul.f32 %v1648, %v1629
  %v1650 = vmul.f32 %v1648, %v1634
  %v1651 = vsub.f32 %v1643, %v1649
  %v1652 = vsub.f32 %v1644, %v1650
  %s1653 = scalar_lea.vmem %s4, 80
  %v1654 = vld [vmem:[%s1653] sm:$0xff]
  %v1655 = vld [vmem:[%s1653 + $0x8] sm:$0xff]
  %v1656 = vadd.f32 %v1651, %v1654
  %v1657 = vadd.f32 %v1652, %v1655
  %1658 = vmatprep.subr.mxu0 0.0
  %1659 = vmatpush1.msra.mxu0 %v50
  %1660 = vmatprep.subr.mxu0 0.0
  %1661 = vmatpush1.msra.mxu0 %v49
  %1662 = vmatprep.subr.mxu0 0.0
  %1663 = vmatpush1.msra.mxu0 %v48
  %1664 = vmatprep.subr.mxu0 0.0
  %1665 = vmatpush1.msra.mxu0 %v47
  %1666 = vmatprep.subr.mxu0 0.0
  %1667 = vmatpush1.msra.mxu0 %v46
  %1668 = vmatprep.subr.mxu0 0.0
  %1669 = vmatpush1.msra.mxu0 %v45
  %1670 = vmatprep.subr.mxu0 0.0
  %1671 = vmatpush1.msra.mxu0 %v44
  %1672 = vmatprep.subr.mxu0 0.0
  %1673 = vmatpush1.msra.mxu0 %v43
  %1674 = vmatprep.subr.mxu0 0.0
  %1675 = vmatpush1.msra.mxu0 %v42
  %1676 = vmatprep.subr.mxu0 0.0
  %1677 = vmatpush1.msra.mxu0 %v41
  %1678 = vmatprep.subr.mxu0 0.0
  %1679 = vmatpush1.msra.mxu0 %v40
  %1680 = vmatprep.subr.mxu0 0.0
  %1681 = vmatpush1.msra.mxu0 %v39
  %1682 = vmatprep.subr.mxu0 0.0
  %1683 = vmatpush1.msra.mxu0 %v38
  %1684 = vmatprep.subr.mxu0 0.0
  %1685 = vmatpush1.msra.mxu0 %v37
  %1686 = vmatprep.subr.mxu0 0.0
  %1687 = vmatpush1.msra.mxu0 %v36
  %1688 = vmatprep.subr.mxu0 0.0
  %1689 = vmatpush1.msra.mxu0 %v35
  %1690 = vmatprep.subr.mxu0 0.0
  %1691 = vmatpush2.msra.mxu0 0.0
  %1692 = vmatprep.subr.mxu0 0.0
  %1693 = vmatpush2.msra.mxu0 0.0
  %1694 = vmatprep.subr.mxu0 0.0
  %1695 = vmatpush2.msra.mxu0 0.0
  %1696 = vmatprep.subr.mxu0 0.0
  %1697 = vmatpush2.msra.mxu0 0.0
  %1698 = vmatprep.subr.mxu0 0.0
  %1699 = vmatpush2.msra.mxu0 0.0
  %1700 = vmatprep.subr.mxu0 0.0
  %1701 = vmatpush2.msra.mxu0 0.0
  %1702 = vmatprep.subr.mxu0 0.0
  %1703 = vmatpush2.msra.mxu0 0.0
  %1704 = vmatprep.subr.mxu0 0.0
  %1705 = vmatpush2.msra.mxu0 0.0
  %1706 = vmatprep.subr.mxu0 0.0
  %1707 = vmatpush2.msra.mxu0 0.0
  %1708 = vmatprep.subr.mxu0 0.0
  %1709 = vmatpush2.msra.mxu0 0.0
  %1710 = vmatprep.subr.mxu0 0.0
  %1711 = vmatpush2.msra.mxu0 0.0
  %1712 = vmatprep.subr.mxu0 0.0
  %1713 = vmatpush2.msra.mxu0 0.0
  %1714 = vmatprep.subr.mxu0 0.0
  %1715 = vmatpush2.msra.mxu0 0.0
  %1716 = vmatprep.subr.mxu0 0.0
  %1717 = vmatpush2.msra.mxu0 0.0
  %1718 = vmatprep.subr.mxu0 0.0
  %1719 = vmatpush2.msra.mxu0 0.0
  %1720 = vmatprep.subr.mxu0 0.0
  %1721 = vmatpush2.msra.mxu0 0.0
  %1722 = vmatprep.mubr.f32.mxu0 0.0
  %1723 = vmatmul.mubr.f32.gmra.mxu0 %v1656
  %v1724 = vpop.f32.mrf.mxu0
  %v1725 = vadd.f32 %v85, %v1724
  %v1726 = vpop.f32.mrf.mxu0
  %1727 = vmatprep.mubr.f32.mxu0 0.0
  %1728 = vmatmul.mubr.f32.gmra.mxu0 %v1657
  %v1729 = vpop.f32.mrf.mxu0
  %v1730 = vadd.f32 %v86, %v1729
  %v1731 = vpop.f32.mrf.mxu0
  %1732 = vdwg.mxu0
  %s1733 = scalar_lea.vmem %s2, 6
  %v1734 = vld [vmem:[%s1733] sm:$0x1]
  %v1736 = vlaneseq
  %v1737 = vshrl.u32 %v1736, 7
  %v1738 = vsub.s32 0, %v1737
  %v1739 = vrot.slane %v1734, %v1738
  %v1741 = vadd.f32 %v1725, %v1739
  %v1742 = vadd.f32 %v1730, %v1739
  %v1743 = vmax.f32 %v1741, 0.0
  %v1744 = vmax.f32 %v1742, 0.0
  %1745 = vmatprep.subr.mxu0 0.0
  %1746 = vmatpush1.msra.mxu0 %v66
  %1747 = vmatprep.subr.mxu0 0.0
  %1748 = vmatpush1.msra.mxu0 %v65
  %1749 = vmatprep.subr.mxu0 0.0
  %1750 = vmatpush1.msra.mxu0 %v64
  %1751 = vmatprep.subr.mxu0 0.0
  %1752 = vmatpush1.msra.mxu0 %v63
  %1753 = vmatprep.subr.mxu0 0.0
  %1754 = vmatpush1.msra.mxu0 %v62
  %1755 = vmatprep.subr.mxu0 0.0
  %1756 = vmatpush1.msra.mxu0 %v61
  %1757 = vmatprep.subr.mxu0 0.0
  %1758 = vmatpush1.msra.mxu0 %v60
  %1759 = vmatprep.subr.mxu0 0.0
  %1760 = vmatpush1.msra.mxu0 %v59
  %1761 = vmatprep.subr.mxu0 0.0
  %1762 = vmatpush1.msra.mxu0 %v58
  %1763 = vmatprep.subr.mxu0 0.0
  %1764 = vmatpush1.msra.mxu0 %v57
  %1765 = vmatprep.subr.mxu0 0.0
  %1766 = vmatpush1.msra.mxu0 %v56
  %1767 = vmatprep.subr.mxu0 0.0
  %1768 = vmatpush1.msra.mxu0 %v55
  %1769 = vmatprep.subr.mxu0 0.0
  %1770 = vmatpush1.msra.mxu0 %v54
  %1771 = vmatprep.subr.mxu0 0.0
  %1772 = vmatpush1.msra.mxu0 %v53
  %1773 = vmatprep.subr.mxu0 0.0
  %1774 = vmatpush1.msra.mxu0 %v52
  %1775 = vmatprep.subr.mxu0 0.0
  %1776 = vmatpush1.msra.mxu0 %v51
  %1777 = vmatprep.subr.mxu0 0.0
  %1778 = vmatpush2.msra.mxu0 0.0
  %1779 = vmatprep.subr.mxu0 0.0
  %1780 = vmatpush2.msra.mxu0 0.0
  %1781 = vmatprep.subr.mxu0 0.0
  %1782 = vmatpush2.msra.mxu0 0.0
  %1783 = vmatprep.subr.mxu0 0.0
  %1784 = vmatpush2.msra.mxu0 0.0
  %1785 = vmatprep.subr.mxu0 0.0
  %1786 = vmatpush2.msra.mxu0 0.0
  %1787 = vmatprep.subr.mxu0 0.0
  %1788 = vmatpush2.msra.mxu0 0.0
  %1789 = vmatprep.subr.mxu0 0.0
  %1790 = vmatpush2.msra.mxu0 0.0
  %1791 = vmatprep.subr.mxu0 0.0
  %1792 = vmatpush2.msra.mxu0 0.0
  %1793 = vmatprep.subr.mxu0 0.0
  %1794 = vmatpush2.msra.mxu0 0.0
  %1795 = vmatprep.subr.mxu0 0.0
  %1796 = vmatpush2.msra.mxu0 0.0
  %1797 = vmatprep.subr.mxu0 0.0
  %1798 = vmatpush2.msra.mxu0 0.0
  %1799 = vmatprep.subr.mxu0 0.0
  %1800 = vmatpush2.msra.mxu0 0.0
  %1801 = vmatprep.subr.mxu0 0.0
  %1802 = vmatpush2.msra.mxu0 0.0
  %1803 = vmatprep.subr.mxu0 0.0
  %1804 = vmatpush2.msra.mxu0 0.0
  %1805 = vmatprep.subr.mxu0 0.0
  %1806 = vmatpush2.msra.mxu0 0.0
  %1807 = vmatprep.subr.mxu0 0.0
  %1808 = vmatpush2.msra.mxu0 0.0
  %1809 = vmatprep.mubr.f32.mxu0 0.0
  %1810 = vmatmul.mubr.f32.gmra.mxu0 %v1743
  %v1811 = vpop.f32.mrf.mxu0
  %v1812 = vadd.f32 %v179, %v1811
  %v1813 = vpop.f32.mrf.mxu0
  %1814 = vmatprep.mubr.f32.mxu0 0.0
  %1815 = vmatmul.mubr.f32.gmra.mxu0 %v1744
  %v1816 = vpop.f32.mrf.mxu0
  %v1817 = vadd.f32 %v179, %v1816
  %v1818 = vpop.f32.mrf.mxu0
  %1819 = vdwg.mxu0
  %v1820 = vmax.f32 %v1812, 0.0
  %v1821 = vmax.f32 %v1817, 0.0
  %1822 = vmatprep.subr.mxu0 0.0
  %1823 = vmatpush1.msra.mxu0 %v83
  %1824 = vmatprep.subr.mxu0 0.0
  %1825 = vmatpush1.msra.mxu0 %v82
  %1826 = vmatprep.subr.mxu0 0.0
  %1827 = vmatpush1.msra.mxu0 %v81
  %1828 = vmatprep.subr.mxu0 0.0
  %1829 = vmatpush1.msra.mxu0 %v80
  %1830 = vmatprep.subr.mxu0 0.0
  %1831 = vmatpush1.msra.mxu0 %v79
  %1832 = vmatprep.subr.mxu0 0.0
  %1833 = vmatpush1.msra.mxu0 %v78
  %1834 = vmatprep.subr.mxu0 0.0
  %1835 = vmatpush1.msra.mxu0 %v77
  %1836 = vmatprep.subr.mxu0 0.0
  %1837 = vmatpush1.msra.mxu0 %v76
  %1838 = vmatprep.subr.mxu0 0.0
  %1839 = vmatpush1.msra.mxu0 %v75
  %1840 = vmatprep.subr.mxu0 0.0
  %1841 = vmatpush1.msra.mxu0 %v74
  %1842 = vmatprep.subr.mxu0 0.0
  %1843 = vmatpush1.msra.mxu0 %v73
  %1844 = vmatprep.subr.mxu0 0.0
  %1845 = vmatpush1.msra.mxu0 %v72
  %1846 = vmatprep.subr.mxu0 0.0
  %1847 = vmatpush1.msra.mxu0 %v71
  %1848 = vmatprep.subr.mxu0 0.0
  %1849 = vmatpush1.msra.mxu0 %v70
  %1850 = vmatprep.subr.mxu0 0.0
  %1851 = vmatpush1.msra.mxu0 %v69
  %1852 = vmatprep.subr.mxu0 0.0
  %1853 = vmatpush1.msra.mxu0 %v68
  %1854 = vmatprep.subr.mxu0 0.0
  %1855 = vmatpush2.msra.mxu0 0.0
  %1856 = vmatprep.subr.mxu0 0.0
  %1857 = vmatpush2.msra.mxu0 0.0
  %1858 = vmatprep.subr.mxu0 0.0
  %1859 = vmatpush2.msra.mxu0 0.0
  %1860 = vmatprep.subr.mxu0 0.0
  %1861 = vmatpush2.msra.mxu0 0.0
  %1862 = vmatprep.subr.mxu0 0.0
  %1863 = vmatpush2.msra.mxu0 0.0
  %1864 = vmatprep.subr.mxu0 0.0
  %1865 = vmatpush2.msra.mxu0 0.0
  %1866 = vmatprep.subr.mxu0 0.0
  %1867 = vmatpush2.msra.mxu0 0.0
  %1868 = vmatprep.subr.mxu0 0.0
  %1869 = vmatpush2.msra.mxu0 0.0
  %1870 = vmatprep.subr.mxu0 0.0
  %1871 = vmatpush2.msra.mxu0 0.0
  %1872 = vmatprep.subr.mxu0 0.0
  %1873 = vmatpush2.msra.mxu0 0.0
  %1874 = vmatprep.subr.mxu0 0.0
  %1875 = vmatpush2.msra.mxu0 0.0
  %1876 = vmatprep.subr.mxu0 0.0
  %1877 = vmatpush2.msra.mxu0 0.0
  %1878 = vmatprep.subr.mxu0 0.0
  %1879 = vmatpush2.msra.mxu0 0.0
  %1880 = vmatprep.subr.mxu0 0.0
  %1881 = vmatpush2.msra.mxu0 0.0
  %1882 = vmatprep.subr.mxu0 0.0
  %1883 = vmatpush2.msra.mxu0 0.0
  %1884 = vmatprep.subr.mxu0 0.0
  %1885 = vmatpush2.msra.mxu0 0.0
  %1886 = vmatprep.mubr.f32.mxu0 0.0
  %1887 = vmatmul.mubr.f32.gmra.mxu0 %v1820
  %v1888 = vpop.f32.mrf.mxu0
  %v1889 = vadd.f32 %v262, %v1888
  %v1890 = vpop.f32.mrf.mxu0
  %1891 = vmatprep.mubr.f32.mxu0 0.0
  %1892 = vmatmul.mubr.f32.gmra.mxu0 %v1821
  %v1893 = vpop.f32.mrf.mxu0
  %v1894 = vadd.f32 %v262, %v1893
  %v1895 = vpop.f32.mrf.mxu0
  %1896 = vdwg.mxu0
  %s1897 = scalar_lea.vmem %s3, 48
  %v1898 = vld [vmem:[%s1897] sm:$0xff]
  %v1899 = vlaneseq
  %v1900 = vshrl.u32 %v1899, 7
  %v1901 = vsub.s32 0, %v1900
  %v1902 = vrot.slane %v1898, %v1901
  %v1903 = vmul.f32 %v1902, %v1656
  %v1904 = vmul.f32 %v1902, %v1657
  %v1905 = vlaneseq
  %v1906 = vshrl.u32 %v1905, 7
  %v1907 = vsub.s32 1, %v1906
  %v1908 = vrot.slane %v1898, %v1907
  %v1909 = vmul.f32 %v1908, %v1889
  %v1910 = vmul.f32 %v1908, %v1894
  %v1911 = vsub.f32 %v1903, %v1909
  %v1912 = vsub.f32 %v1904, %v1910
  %s1913 = scalar_lea.vmem %s4, 96
  %v1914 = vld [vmem:[%s1913] sm:$0xff]
  %v1915 = vld [vmem:[%s1913 + $0x8] sm:$0xff]
  %v1916 = vadd.f32 %v1911, %v1914
  %v1917 = vadd.f32 %v1912, %v1915
  %1918 = vmatprep.subr.mxu0 0.0
  %1919 = vmatpush1.msra.mxu0 %v50
  %1920 = vmatprep.subr.mxu0 0.0
  %1921 = vmatpush1.msra.mxu0 %v49
  %1922 = vmatprep.subr.mxu0 0.0
  %1923 = vmatpush1.msra.mxu0 %v48
  %1924 = vmatprep.subr.mxu0 0.0
  %1925 = vmatpush1.msra.mxu0 %v47
  %1926 = vmatprep.subr.mxu0 0.0
  %1927 = vmatpush1.msra.mxu0 %v46
  %1928 = vmatprep.subr.mxu0 0.0
  %1929 = vmatpush1.msra.mxu0 %v45
  %1930 = vmatprep.subr.mxu0 0.0
  %1931 = vmatpush1.msra.mxu0 %v44
  %1932 = vmatprep.subr.mxu0 0.0
  %1933 = vmatpush1.msra.mxu0 %v43
  %1934 = vmatprep.subr.mxu0 0.0
  %1935 = vmatpush1.msra.mxu0 %v42
  %1936 = vmatprep.subr.mxu0 0.0
  %1937 = vmatpush1.msra.mxu0 %v41
  %1938 = vmatprep.subr.mxu0 0.0
  %1939 = vmatpush1.msra.mxu0 %v40
  %1940 = vmatprep.subr.mxu0 0.0
  %1941 = vmatpush1.msra.mxu0 %v39
  %1942 = vmatprep.subr.mxu0 0.0
  %1943 = vmatpush1.msra.mxu0 %v38
  %1944 = vmatprep.subr.mxu0 0.0
  %1945 = vmatpush1.msra.mxu0 %v37
  %1946 = vmatprep.subr.mxu0 0.0
  %1947 = vmatpush1.msra.mxu0 %v36
  %1948 = vmatprep.subr.mxu0 0.0
  %1949 = vmatpush1.msra.mxu0 %v35
  %1950 = vmatprep.subr.mxu0 0.0
  %1951 = vmatpush2.msra.mxu0 0.0
  %1952 = vmatprep.subr.mxu0 0.0
  %1953 = vmatpush2.msra.mxu0 0.0
  %1954 = vmatprep.subr.mxu0 0.0
  %1955 = vmatpush2.msra.mxu0 0.0
  %1956 = vmatprep.subr.mxu0 0.0
  %1957 = vmatpush2.msra.mxu0 0.0
  %1958 = vmatprep.subr.mxu0 0.0
  %1959 = vmatpush2.msra.mxu0 0.0
  %1960 = vmatprep.subr.mxu0 0.0
  %1961 = vmatpush2.msra.mxu0 0.0
  %1962 = vmatprep.subr.mxu0 0.0
  %1963 = vmatpush2.msra.mxu0 0.0
  %1964 = vmatprep.subr.mxu0 0.0
  %1965 = vmatpush2.msra.mxu0 0.0
  %1966 = vmatprep.subr.mxu0 0.0
  %1967 = vmatpush2.msra.mxu0 0.0
  %1968 = vmatprep.subr.mxu0 0.0
  %1969 = vmatpush2.msra.mxu0 0.0
  %1970 = vmatprep.subr.mxu0 0.0
  %1971 = vmatpush2.msra.mxu0 0.0
  %1972 = vmatprep.subr.mxu0 0.0
  %1973 = vmatpush2.msra.mxu0 0.0
  %1974 = vmatprep.subr.mxu0 0.0
  %1975 = vmatpush2.msra.mxu0 0.0
  %1976 = vmatprep.subr.mxu0 0.0
  %1977 = vmatpush2.msra.mxu0 0.0
  %1978 = vmatprep.subr.mxu0 0.0
  %1979 = vmatpush2.msra.mxu0 0.0
  %1980 = vmatprep.subr.mxu0 0.0
  %1981 = vmatpush2.msra.mxu0 0.0
  %1982 = vmatprep.mubr.f32.mxu0 0.0
  %1983 = vmatmul.mubr.f32.gmra.mxu0 %v1916
  %v1984 = vpop.f32.mrf.mxu0
  %v1985 = vadd.f32 %v85, %v1984
  %v1986 = vpop.f32.mrf.mxu0
  %1987 = vmatprep.mubr.f32.mxu0 0.0
  %1988 = vmatmul.mubr.f32.gmra.mxu0 %v1917
  %v1989 = vpop.f32.mrf.mxu0
  %v1990 = vadd.f32 %v86, %v1989
  %v1991 = vpop.f32.mrf.mxu0
  %1992 = vdwg.mxu0
  %s1993 = scalar_lea.vmem %s2, 7
  %v1994 = vld [vmem:[%s1993] sm:$0x1]
  %v1996 = vlaneseq
  %v1997 = vshrl.u32 %v1996, 7
  %v1998 = vsub.s32 0, %v1997
  %v1999 = vrot.slane %v1994, %v1998
  %v2001 = vadd.f32 %v1985, %v1999
  %v2002 = vadd.f32 %v1990, %v1999
  %v2003 = vmax.f32 %v2001, 0.0
  %v2004 = vmax.f32 %v2002, 0.0
  %2005 = vmatprep.subr.mxu0 0.0
  %2006 = vmatpush1.msra.mxu0 %v66
  %2007 = vmatprep.subr.mxu0 0.0
  %2008 = vmatpush1.msra.mxu0 %v65
  %2009 = vmatprep.subr.mxu0 0.0
  %2010 = vmatpush1.msra.mxu0 %v64
  %2011 = vmatprep.subr.mxu0 0.0
  %2012 = vmatpush1.msra.mxu0 %v63
  %2013 = vmatprep.subr.mxu0 0.0
  %2014 = vmatpush1.msra.mxu0 %v62
  %2015 = vmatprep.subr.mxu0 0.0
  %2016 = vmatpush1.msra.mxu0 %v61
  %2017 = vmatprep.subr.mxu0 0.0
  %2018 = vmatpush1.msra.mxu0 %v60
  %2019 = vmatprep.subr.mxu0 0.0
  %2020 = vmatpush1.msra.mxu0 %v59
  %2021 = vmatprep.subr.mxu0 0.0
  %2022 = vmatpush1.msra.mxu0 %v58
  %2023 = vmatprep.subr.mxu0 0.0
  %2024 = vmatpush1.msra.mxu0 %v57
  %2025 = vmatprep.subr.mxu0 0.0
  %2026 = vmatpush1.msra.mxu0 %v56
  %2027 = vmatprep.subr.mxu0 0.0
  %2028 = vmatpush1.msra.mxu0 %v55
  %2029 = vmatprep.subr.mxu0 0.0
  %2030 = vmatpush1.msra.mxu0 %v54
  %2031 = vmatprep.subr.mxu0 0.0
  %2032 = vmatpush1.msra.mxu0 %v53
  %2033 = vmatprep.subr.mxu0 0.0
  %2034 = vmatpush1.msra.mxu0 %v52
  %2035 = vmatprep.subr.mxu0 0.0
  %2036 = vmatpush1.msra.mxu0 %v51
  %2037 = vmatprep.subr.mxu0 0.0
  %2038 = vmatpush2.msra.mxu0 0.0
  %2039 = vmatprep.subr.mxu0 0.0
  %2040 = vmatpush2.msra.mxu0 0.0
  %2041 = vmatprep.subr.mxu0 0.0
  %2042 = vmatpush2.msra.mxu0 0.0
  %2043 = vmatprep.subr.mxu0 0.0
  %2044 = vmatpush2.msra.mxu0 0.0
  %2045 = vmatprep.subr.mxu0 0.0
  %2046 = vmatpush2.msra.mxu0 0.0
  %2047 = vmatprep.subr.mxu0 0.0
  %2048 = vmatpush2.msra.mxu0 0.0
  %2049 = vmatprep.subr.mxu0 0.0
  %2050 = vmatpush2.msra.mxu0 0.0
  %2051 = vmatprep.subr.mxu0 0.0
  %2052 = vmatpush2.msra.mxu0 0.0
  %2053 = vmatprep.subr.mxu0 0.0
  %2054 = vmatpush2.msra.mxu0 0.0
  %2055 = vmatprep.subr.mxu0 0.0
  %2056 = vmatpush2.msra.mxu0 0.0
  %2057 = vmatprep.subr.mxu0 0.0
  %2058 = vmatpush2.msra.mxu0 0.0
  %2059 = vmatprep.subr.mxu0 0.0
  %2060 = vmatpush2.msra.mxu0 0.0
  %2061 = vmatprep.subr.mxu0 0.0
  %2062 = vmatpush2.msra.mxu0 0.0
  %2063 = vmatprep.subr.mxu0 0.0
  %2064 = vmatpush2.msra.mxu0 0.0
  %2065 = vmatprep.subr.mxu0 0.0
  %2066 = vmatpush2.msra.mxu0 0.0
  %2067 = vmatprep.subr.mxu0 0.0
  %2068 = vmatpush2.msra.mxu0 0.0
  %2069 = vmatprep.mubr.f32.mxu0 0.0
  %2070 = vmatmul.mubr.f32.gmra.mxu0 %v2003
  %v2071 = vpop.f32.mrf.mxu0
  %v2072 = vadd.f32 %v179, %v2071
  %v2073 = vpop.f32.mrf.mxu0
  %2074 = vmatprep.mubr.f32.mxu0 0.0
  %2075 = vmatmul.mubr.f32.gmra.mxu0 %v2004
  %v2076 = vpop.f32.mrf.mxu0
  %v2077 = vadd.f32 %v179, %v2076
  %v2078 = vpop.f32.mrf.mxu0
  %2079 = vdwg.mxu0
  %v2080 = vmax.f32 %v2072, 0.0
  %v2081 = vmax.f32 %v2077, 0.0
  %2082 = vmatprep.subr.mxu0 0.0
  %2083 = vmatpush1.msra.mxu0 %v83
  %2084 = vmatprep.subr.mxu0 0.0
  %2085 = vmatpush1.msra.mxu0 %v82
  %2086 = vmatprep.subr.mxu0 0.0
  %2087 = vmatpush1.msra.mxu0 %v81
  %2088 = vmatprep.subr.mxu0 0.0
  %2089 = vmatpush1.msra.mxu0 %v80
  %2090 = vmatprep.subr.mxu0 0.0
  %2091 = vmatpush1.msra.mxu0 %v79
  %2092 = vmatprep.subr.mxu0 0.0
  %2093 = vmatpush1.msra.mxu0 %v78
  %2094 = vmatprep.subr.mxu0 0.0
  %2095 = vmatpush1.msra.mxu0 %v77
  %2096 = vmatprep.subr.mxu0 0.0
  %2097 = vmatpush1.msra.mxu0 %v76
  %2098 = vmatprep.subr.mxu0 0.0
  %2099 = vmatpush1.msra.mxu0 %v75
  %2100 = vmatprep.subr.mxu0 0.0
  %2101 = vmatpush1.msra.mxu0 %v74
  %2102 = vmatprep.subr.mxu0 0.0
  %2103 = vmatpush1.msra.mxu0 %v73
  %2104 = vmatprep.subr.mxu0 0.0
  %2105 = vmatpush1.msra.mxu0 %v72
  %2106 = vmatprep.subr.mxu0 0.0
  %2107 = vmatpush1.msra.mxu0 %v71
  %2108 = vmatprep.subr.mxu0 0.0
  %2109 = vmatpush1.msra.mxu0 %v70
  %2110 = vmatprep.subr.mxu0 0.0
  %2111 = vmatpush1.msra.mxu0 %v69
  %2112 = vmatprep.subr.mxu0 0.0
  %2113 = vmatpush1.msra.mxu0 %v68
  %2114 = vmatprep.subr.mxu0 0.0
  %2115 = vmatpush2.msra.mxu0 0.0
  %2116 = vmatprep.subr.mxu0 0.0
  %2117 = vmatpush2.msra.mxu0 0.0
  %2118 = vmatprep.subr.mxu0 0.0
  %2119 = vmatpush2.msra.mxu0 0.0
  %2120 = vmatprep.subr.mxu0 0.0
  %2121 = vmatpush2.msra.mxu0 0.0
  %2122 = vmatprep.subr.mxu0 0.0
  %2123 = vmatpush2.msra.mxu0 0.0
  %2124 = vmatprep.subr.mxu0 0.0
  %2125 = vmatpush2.msra.mxu0 0.0
  %2126 = vmatprep.subr.mxu0 0.0
  %2127 = vmatpush2.msra.mxu0 0.0
  %2128 = vmatprep.subr.mxu0 0.0
  %2129 = vmatpush2.msra.mxu0 0.0
  %2130 = vmatprep.subr.mxu0 0.0
  %2131 = vmatpush2.msra.mxu0 0.0
  %2132 = vmatprep.subr.mxu0 0.0
  %2133 = vmatpush2.msra.mxu0 0.0
  %2134 = vmatprep.subr.mxu0 0.0
  %2135 = vmatpush2.msra.mxu0 0.0
  %2136 = vmatprep.subr.mxu0 0.0
  %2137 = vmatpush2.msra.mxu0 0.0
  %2138 = vmatprep.subr.mxu0 0.0
  %2139 = vmatpush2.msra.mxu0 0.0
  %2140 = vmatprep.subr.mxu0 0.0
  %2141 = vmatpush2.msra.mxu0 0.0
  %2142 = vmatprep.subr.mxu0 0.0
  %2143 = vmatpush2.msra.mxu0 0.0
  %2144 = vmatprep.subr.mxu0 0.0
  %2145 = vmatpush2.msra.mxu0 0.0
  %2146 = vmatprep.mubr.f32.mxu0 0.0
  %2147 = vmatmul.mubr.f32.gmra.mxu0 %v2080
  %v2148 = vpop.f32.mrf.mxu0
  %v2149 = vadd.f32 %v262, %v2148
  %v2150 = vpop.f32.mrf.mxu0
  %2151 = vmatprep.mubr.f32.mxu0 0.0
  %2152 = vmatmul.mubr.f32.gmra.mxu0 %v2081
  %v2153 = vpop.f32.mrf.mxu0
  %v2154 = vadd.f32 %v262, %v2153
  %v2155 = vpop.f32.mrf.mxu0
  %2156 = vdwg.mxu0
  %s2157 = scalar_lea.vmem %s3, 56
  %v2158 = vld [vmem:[%s2157] sm:$0xff]
  %v2159 = vlaneseq
  %v2160 = vshrl.u32 %v2159, 7
  %v2161 = vsub.s32 0, %v2160
  %v2162 = vrot.slane %v2158, %v2161
  %v2163 = vmul.f32 %v2162, %v1916
  %v2164 = vmul.f32 %v2162, %v1917
  %v2165 = vlaneseq
  %v2166 = vshrl.u32 %v2165, 7
  %v2167 = vsub.s32 1, %v2166
  %v2168 = vrot.slane %v2158, %v2167
  %v2169 = vmul.f32 %v2168, %v2149
  %v2170 = vmul.f32 %v2168, %v2154
  %v2171 = vsub.f32 %v2163, %v2169
  %v2172 = vsub.f32 %v2164, %v2170
  %s2173 = scalar_lea.vmem %s4, 112
  %v2174 = vld [vmem:[%s2173] sm:$0xff]
  %v2175 = vld [vmem:[%s2173 + $0x8] sm:$0xff]
  %v2176 = vadd.f32 %v2171, %v2174
  %v2177 = vadd.f32 %v2172, %v2175
  %2178 = vmatprep.subr.mxu0 0.0
  %2179 = vmatpush1.msra.mxu0 %v50
  %2180 = vmatprep.subr.mxu0 0.0
  %2181 = vmatpush1.msra.mxu0 %v49
  %2182 = vmatprep.subr.mxu0 0.0
  %2183 = vmatpush1.msra.mxu0 %v48
  %2184 = vmatprep.subr.mxu0 0.0
  %2185 = vmatpush1.msra.mxu0 %v47
  %2186 = vmatprep.subr.mxu0 0.0
  %2187 = vmatpush1.msra.mxu0 %v46
  %2188 = vmatprep.subr.mxu0 0.0
  %2189 = vmatpush1.msra.mxu0 %v45
  %2190 = vmatprep.subr.mxu0 0.0
  %2191 = vmatpush1.msra.mxu0 %v44
  %2192 = vmatprep.subr.mxu0 0.0
  %2193 = vmatpush1.msra.mxu0 %v43
  %2194 = vmatprep.subr.mxu0 0.0
  %2195 = vmatpush1.msra.mxu0 %v42
  %2196 = vmatprep.subr.mxu0 0.0
  %2197 = vmatpush1.msra.mxu0 %v41
  %2198 = vmatprep.subr.mxu0 0.0
  %2199 = vmatpush1.msra.mxu0 %v40
  %2200 = vmatprep.subr.mxu0 0.0
  %2201 = vmatpush1.msra.mxu0 %v39
  %2202 = vmatprep.subr.mxu0 0.0
  %2203 = vmatpush1.msra.mxu0 %v38
  %2204 = vmatprep.subr.mxu0 0.0
  %2205 = vmatpush1.msra.mxu0 %v37
  %2206 = vmatprep.subr.mxu0 0.0
  %2207 = vmatpush1.msra.mxu0 %v36
  %2208 = vmatprep.subr.mxu0 0.0
  %2209 = vmatpush1.msra.mxu0 %v35
  %2210 = vmatprep.subr.mxu0 0.0
  %2211 = vmatpush2.msra.mxu0 0.0
  %2212 = vmatprep.subr.mxu0 0.0
  %2213 = vmatpush2.msra.mxu0 0.0
  %2214 = vmatprep.subr.mxu0 0.0
  %2215 = vmatpush2.msra.mxu0 0.0
  %2216 = vmatprep.subr.mxu0 0.0
  %2217 = vmatpush2.msra.mxu0 0.0
  %2218 = vmatprep.subr.mxu0 0.0
  %2219 = vmatpush2.msra.mxu0 0.0
  %2220 = vmatprep.subr.mxu0 0.0
  %2221 = vmatpush2.msra.mxu0 0.0
  %2222 = vmatprep.subr.mxu0 0.0
  %2223 = vmatpush2.msra.mxu0 0.0
  %2224 = vmatprep.subr.mxu0 0.0
  %2225 = vmatpush2.msra.mxu0 0.0
  %2226 = vmatprep.subr.mxu0 0.0
  %2227 = vmatpush2.msra.mxu0 0.0
  %2228 = vmatprep.subr.mxu0 0.0
  %2229 = vmatpush2.msra.mxu0 0.0
  %2230 = vmatprep.subr.mxu0 0.0
  %2231 = vmatpush2.msra.mxu0 0.0
  %2232 = vmatprep.subr.mxu0 0.0
  %2233 = vmatpush2.msra.mxu0 0.0
  %2234 = vmatprep.subr.mxu0 0.0
  %2235 = vmatpush2.msra.mxu0 0.0
  %2236 = vmatprep.subr.mxu0 0.0
  %2237 = vmatpush2.msra.mxu0 0.0
  %2238 = vmatprep.subr.mxu0 0.0
  %2239 = vmatpush2.msra.mxu0 0.0
  %2240 = vmatprep.subr.mxu0 0.0
  %2241 = vmatpush2.msra.mxu0 0.0
  %2242 = vmatprep.mubr.f32.mxu0 0.0
  %2243 = vmatmul.mubr.f32.gmra.mxu0 %v2176
  %v2244 = vpop.f32.mrf.mxu0
  %v2245 = vadd.f32 %v85, %v2244
  %v2246 = vpop.f32.mrf.mxu0
  %2247 = vmatprep.mubr.f32.mxu0 0.0
  %2248 = vmatmul.mubr.f32.gmra.mxu0 %v2177
  %v2249 = vpop.f32.mrf.mxu0
  %v2250 = vadd.f32 %v86, %v2249
  %v2251 = vpop.f32.mrf.mxu0
  %2252 = vdwg.mxu0
  %s2253 = scalar_lea.vmem %s2, 8
  %v2254 = vld [vmem:[%s2253] sm:$0x1]
  %v2256 = vlaneseq
  %v2257 = vshrl.u32 %v2256, 7
  %v2258 = vsub.s32 0, %v2257
  %v2259 = vrot.slane %v2254, %v2258
  %v2261 = vadd.f32 %v2245, %v2259
  %v2262 = vadd.f32 %v2250, %v2259
  %v2263 = vmax.f32 %v2261, 0.0
  %v2264 = vmax.f32 %v2262, 0.0
  %2265 = vmatprep.subr.mxu0 0.0
  %2266 = vmatpush1.msra.mxu0 %v66
  %2267 = vmatprep.subr.mxu0 0.0
  %2268 = vmatpush1.msra.mxu0 %v65
  %2269 = vmatprep.subr.mxu0 0.0
  %2270 = vmatpush1.msra.mxu0 %v64
  %2271 = vmatprep.subr.mxu0 0.0
  %2272 = vmatpush1.msra.mxu0 %v63
  %2273 = vmatprep.subr.mxu0 0.0
  %2274 = vmatpush1.msra.mxu0 %v62
  %2275 = vmatprep.subr.mxu0 0.0
  %2276 = vmatpush1.msra.mxu0 %v61
  %2277 = vmatprep.subr.mxu0 0.0
  %2278 = vmatpush1.msra.mxu0 %v60
  %2279 = vmatprep.subr.mxu0 0.0
  %2280 = vmatpush1.msra.mxu0 %v59
  %2281 = vmatprep.subr.mxu0 0.0
  %2282 = vmatpush1.msra.mxu0 %v58
  %2283 = vmatprep.subr.mxu0 0.0
  %2284 = vmatpush1.msra.mxu0 %v57
  %2285 = vmatprep.subr.mxu0 0.0
  %2286 = vmatpush1.msra.mxu0 %v56
  %2287 = vmatprep.subr.mxu0 0.0
  %2288 = vmatpush1.msra.mxu0 %v55
  %2289 = vmatprep.subr.mxu0 0.0
  %2290 = vmatpush1.msra.mxu0 %v54
  %2291 = vmatprep.subr.mxu0 0.0
  %2292 = vmatpush1.msra.mxu0 %v53
  %2293 = vmatprep.subr.mxu0 0.0
  %2294 = vmatpush1.msra.mxu0 %v52
  %2295 = vmatprep.subr.mxu0 0.0
  %2296 = vmatpush1.msra.mxu0 %v51
  %2297 = vmatprep.subr.mxu0 0.0
  %2298 = vmatpush2.msra.mxu0 0.0
  %2299 = vmatprep.subr.mxu0 0.0
  %2300 = vmatpush2.msra.mxu0 0.0
  %2301 = vmatprep.subr.mxu0 0.0
  %2302 = vmatpush2.msra.mxu0 0.0
  %2303 = vmatprep.subr.mxu0 0.0
  %2304 = vmatpush2.msra.mxu0 0.0
  %2305 = vmatprep.subr.mxu0 0.0
  %2306 = vmatpush2.msra.mxu0 0.0
  %2307 = vmatprep.subr.mxu0 0.0
  %2308 = vmatpush2.msra.mxu0 0.0
  %2309 = vmatprep.subr.mxu0 0.0
  %2310 = vmatpush2.msra.mxu0 0.0
  %2311 = vmatprep.subr.mxu0 0.0
  %2312 = vmatpush2.msra.mxu0 0.0
  %2313 = vmatprep.subr.mxu0 0.0
  %2314 = vmatpush2.msra.mxu0 0.0
  %2315 = vmatprep.subr.mxu0 0.0
  %2316 = vmatpush2.msra.mxu0 0.0
  %2317 = vmatprep.subr.mxu0 0.0
  %2318 = vmatpush2.msra.mxu0 0.0
  %2319 = vmatprep.subr.mxu0 0.0
  %2320 = vmatpush2.msra.mxu0 0.0
  %2321 = vmatprep.subr.mxu0 0.0
  %2322 = vmatpush2.msra.mxu0 0.0
  %2323 = vmatprep.subr.mxu0 0.0
  %2324 = vmatpush2.msra.mxu0 0.0
  %2325 = vmatprep.subr.mxu0 0.0
  %2326 = vmatpush2.msra.mxu0 0.0
  %2327 = vmatprep.subr.mxu0 0.0
  %2328 = vmatpush2.msra.mxu0 0.0
  %2329 = vmatprep.mubr.f32.mxu0 0.0
  %2330 = vmatmul.mubr.f32.gmra.mxu0 %v2263
  %v2331 = vpop.f32.mrf.mxu0
  %v2332 = vadd.f32 %v179, %v2331
  %v2333 = vpop.f32.mrf.mxu0
  %2334 = vmatprep.mubr.f32.mxu0 0.0
  %2335 = vmatmul.mubr.f32.gmra.mxu0 %v2264
  %v2336 = vpop.f32.mrf.mxu0
  %v2337 = vadd.f32 %v179, %v2336
  %v2338 = vpop.f32.mrf.mxu0
  %2339 = vdwg.mxu0
  %v2340 = vmax.f32 %v2332, 0.0
  %v2341 = vmax.f32 %v2337, 0.0
  %2342 = vmatprep.subr.mxu0 0.0
  %2343 = vmatpush1.msra.mxu0 %v83
  %2344 = vmatprep.subr.mxu0 0.0
  %2345 = vmatpush1.msra.mxu0 %v82
  %2346 = vmatprep.subr.mxu0 0.0
  %2347 = vmatpush1.msra.mxu0 %v81
  %2348 = vmatprep.subr.mxu0 0.0
  %2349 = vmatpush1.msra.mxu0 %v80
  %2350 = vmatprep.subr.mxu0 0.0
  %2351 = vmatpush1.msra.mxu0 %v79
  %2352 = vmatprep.subr.mxu0 0.0
  %2353 = vmatpush1.msra.mxu0 %v78
  %2354 = vmatprep.subr.mxu0 0.0
  %2355 = vmatpush1.msra.mxu0 %v77
  %2356 = vmatprep.subr.mxu0 0.0
  %2357 = vmatpush1.msra.mxu0 %v76
  %2358 = vmatprep.subr.mxu0 0.0
  %2359 = vmatpush1.msra.mxu0 %v75
  %2360 = vmatprep.subr.mxu0 0.0
  %2361 = vmatpush1.msra.mxu0 %v74
  %2362 = vmatprep.subr.mxu0 0.0
  %2363 = vmatpush1.msra.mxu0 %v73
  %2364 = vmatprep.subr.mxu0 0.0
  %2365 = vmatpush1.msra.mxu0 %v72
  %2366 = vmatprep.subr.mxu0 0.0
  %2367 = vmatpush1.msra.mxu0 %v71
  %2368 = vmatprep.subr.mxu0 0.0
  %2369 = vmatpush1.msra.mxu0 %v70
  %2370 = vmatprep.subr.mxu0 0.0
  %2371 = vmatpush1.msra.mxu0 %v69
  %2372 = vmatprep.subr.mxu0 0.0
  %2373 = vmatpush1.msra.mxu0 %v68
  %2374 = vmatprep.subr.mxu0 0.0
  %2375 = vmatpush2.msra.mxu0 0.0
  %2376 = vmatprep.subr.mxu0 0.0
  %2377 = vmatpush2.msra.mxu0 0.0
  %2378 = vmatprep.subr.mxu0 0.0
  %2379 = vmatpush2.msra.mxu0 0.0
  %2380 = vmatprep.subr.mxu0 0.0
  %2381 = vmatpush2.msra.mxu0 0.0
  %2382 = vmatprep.subr.mxu0 0.0
  %2383 = vmatpush2.msra.mxu0 0.0
  %2384 = vmatprep.subr.mxu0 0.0
  %2385 = vmatpush2.msra.mxu0 0.0
  %2386 = vmatprep.subr.mxu0 0.0
  %2387 = vmatpush2.msra.mxu0 0.0
  %2388 = vmatprep.subr.mxu0 0.0
  %2389 = vmatpush2.msra.mxu0 0.0
  %2390 = vmatprep.subr.mxu0 0.0
  %2391 = vmatpush2.msra.mxu0 0.0
  %2392 = vmatprep.subr.mxu0 0.0
  %2393 = vmatpush2.msra.mxu0 0.0
  %2394 = vmatprep.subr.mxu0 0.0
  %2395 = vmatpush2.msra.mxu0 0.0
  %2396 = vmatprep.subr.mxu0 0.0
  %2397 = vmatpush2.msra.mxu0 0.0
  %2398 = vmatprep.subr.mxu0 0.0
  %2399 = vmatpush2.msra.mxu0 0.0
  %2400 = vmatprep.subr.mxu0 0.0
  %2401 = vmatpush2.msra.mxu0 0.0
  %2402 = vmatprep.subr.mxu0 0.0
  %2403 = vmatpush2.msra.mxu0 0.0
  %2404 = vmatprep.subr.mxu0 0.0
  %2405 = vmatpush2.msra.mxu0 0.0
  %2406 = vmatprep.mubr.f32.mxu0 0.0
  %2407 = vmatmul.mubr.f32.gmra.mxu0 %v2340
  %v2408 = vpop.f32.mrf.mxu0
  %v2409 = vadd.f32 %v262, %v2408
  %v2410 = vpop.f32.mrf.mxu0
  %2411 = vmatprep.mubr.f32.mxu0 0.0
  %2412 = vmatmul.mubr.f32.gmra.mxu0 %v2341
  %v2413 = vpop.f32.mrf.mxu0
  %v2414 = vadd.f32 %v262, %v2413
  %v2415 = vpop.f32.mrf.mxu0
  %2416 = vdwg.mxu0
  %s2417 = scalar_lea.vmem %s3, 64
  %v2418 = vld [vmem:[%s2417] sm:$0xff]
  %v2419 = vlaneseq
  %v2420 = vshrl.u32 %v2419, 7
  %v2421 = vsub.s32 0, %v2420
  %v2422 = vrot.slane %v2418, %v2421
  %v2423 = vmul.f32 %v2422, %v2176
  %v2424 = vmul.f32 %v2422, %v2177
  %v2425 = vlaneseq
  %v2426 = vshrl.u32 %v2425, 7
  %v2427 = vsub.s32 1, %v2426
  %v2428 = vrot.slane %v2418, %v2427
  %v2429 = vmul.f32 %v2428, %v2409
  %v2430 = vmul.f32 %v2428, %v2414
  %v2431 = vsub.f32 %v2423, %v2429
  %v2432 = vsub.f32 %v2424, %v2430
  %s2433 = scalar_lea.vmem %s4, 128
  %v2434 = vld [vmem:[%s2433] sm:$0xff]
  %v2435 = vld [vmem:[%s2433 + $0x8] sm:$0xff]
  %v2436 = vadd.f32 %v2431, %v2434
  %v2437 = vadd.f32 %v2432, %v2435
  %2438 = vmatprep.subr.mxu0 0.0
  %2439 = vmatpush1.msra.mxu0 %v50
  %2440 = vmatprep.subr.mxu0 0.0
  %2441 = vmatpush1.msra.mxu0 %v49
  %2442 = vmatprep.subr.mxu0 0.0
  %2443 = vmatpush1.msra.mxu0 %v48
  %2444 = vmatprep.subr.mxu0 0.0
  %2445 = vmatpush1.msra.mxu0 %v47
  %2446 = vmatprep.subr.mxu0 0.0
  %2447 = vmatpush1.msra.mxu0 %v46
  %2448 = vmatprep.subr.mxu0 0.0
  %2449 = vmatpush1.msra.mxu0 %v45
  %2450 = vmatprep.subr.mxu0 0.0
  %2451 = vmatpush1.msra.mxu0 %v44
  %2452 = vmatprep.subr.mxu0 0.0
  %2453 = vmatpush1.msra.mxu0 %v43
  %2454 = vmatprep.subr.mxu0 0.0
  %2455 = vmatpush1.msra.mxu0 %v42
  %2456 = vmatprep.subr.mxu0 0.0
  %2457 = vmatpush1.msra.mxu0 %v41
  %2458 = vmatprep.subr.mxu0 0.0
  %2459 = vmatpush1.msra.mxu0 %v40
  %2460 = vmatprep.subr.mxu0 0.0
  %2461 = vmatpush1.msra.mxu0 %v39
  %2462 = vmatprep.subr.mxu0 0.0
  %2463 = vmatpush1.msra.mxu0 %v38
  %2464 = vmatprep.subr.mxu0 0.0
  %2465 = vmatpush1.msra.mxu0 %v37
  %2466 = vmatprep.subr.mxu0 0.0
  %2467 = vmatpush1.msra.mxu0 %v36
  %2468 = vmatprep.subr.mxu0 0.0
  %2469 = vmatpush1.msra.mxu0 %v35
  %2470 = vmatprep.subr.mxu0 0.0
  %2471 = vmatpush2.msra.mxu0 0.0
  %2472 = vmatprep.subr.mxu0 0.0
  %2473 = vmatpush2.msra.mxu0 0.0
  %2474 = vmatprep.subr.mxu0 0.0
  %2475 = vmatpush2.msra.mxu0 0.0
  %2476 = vmatprep.subr.mxu0 0.0
  %2477 = vmatpush2.msra.mxu0 0.0
  %2478 = vmatprep.subr.mxu0 0.0
  %2479 = vmatpush2.msra.mxu0 0.0
  %2480 = vmatprep.subr.mxu0 0.0
  %2481 = vmatpush2.msra.mxu0 0.0
  %2482 = vmatprep.subr.mxu0 0.0
  %2483 = vmatpush2.msra.mxu0 0.0
  %2484 = vmatprep.subr.mxu0 0.0
  %2485 = vmatpush2.msra.mxu0 0.0
  %2486 = vmatprep.subr.mxu0 0.0
  %2487 = vmatpush2.msra.mxu0 0.0
  %2488 = vmatprep.subr.mxu0 0.0
  %2489 = vmatpush2.msra.mxu0 0.0
  %2490 = vmatprep.subr.mxu0 0.0
  %2491 = vmatpush2.msra.mxu0 0.0
  %2492 = vmatprep.subr.mxu0 0.0
  %2493 = vmatpush2.msra.mxu0 0.0
  %2494 = vmatprep.subr.mxu0 0.0
  %2495 = vmatpush2.msra.mxu0 0.0
  %2496 = vmatprep.subr.mxu0 0.0
  %2497 = vmatpush2.msra.mxu0 0.0
  %2498 = vmatprep.subr.mxu0 0.0
  %2499 = vmatpush2.msra.mxu0 0.0
  %2500 = vmatprep.subr.mxu0 0.0
  %2501 = vmatpush2.msra.mxu0 0.0
  %2502 = vmatprep.mubr.f32.mxu0 0.0
  %2503 = vmatmul.mubr.f32.gmra.mxu0 %v2436
  %v2504 = vpop.f32.mrf.mxu0
  %v2505 = vadd.f32 %v85, %v2504
  %v2506 = vpop.f32.mrf.mxu0
  %2507 = vmatprep.mubr.f32.mxu0 0.0
  %2508 = vmatmul.mubr.f32.gmra.mxu0 %v2437
  %v2509 = vpop.f32.mrf.mxu0
  %v2510 = vadd.f32 %v86, %v2509
  %v2511 = vpop.f32.mrf.mxu0
  %2512 = vdwg.mxu0
  %s2513 = scalar_lea.vmem %s2, 9
  %v2514 = vld [vmem:[%s2513] sm:$0x1]
  %v2516 = vlaneseq
  %v2517 = vshrl.u32 %v2516, 7
  %v2518 = vsub.s32 0, %v2517
  %v2519 = vrot.slane %v2514, %v2518
  %v2521 = vadd.f32 %v2505, %v2519
  %v2522 = vadd.f32 %v2510, %v2519
  %v2523 = vmax.f32 %v2521, 0.0
  %v2524 = vmax.f32 %v2522, 0.0
  %2525 = vmatprep.subr.mxu0 0.0
  %2526 = vmatpush1.msra.mxu0 %v66
  %2527 = vmatprep.subr.mxu0 0.0
  %2528 = vmatpush1.msra.mxu0 %v65
  %2529 = vmatprep.subr.mxu0 0.0
  %2530 = vmatpush1.msra.mxu0 %v64
  %2531 = vmatprep.subr.mxu0 0.0
  %2532 = vmatpush1.msra.mxu0 %v63
  %2533 = vmatprep.subr.mxu0 0.0
  %2534 = vmatpush1.msra.mxu0 %v62
  %2535 = vmatprep.subr.mxu0 0.0
  %2536 = vmatpush1.msra.mxu0 %v61
  %2537 = vmatprep.subr.mxu0 0.0
  %2538 = vmatpush1.msra.mxu0 %v60
  %2539 = vmatprep.subr.mxu0 0.0
  %2540 = vmatpush1.msra.mxu0 %v59
  %2541 = vmatprep.subr.mxu0 0.0
  %2542 = vmatpush1.msra.mxu0 %v58
  %2543 = vmatprep.subr.mxu0 0.0
  %2544 = vmatpush1.msra.mxu0 %v57
  %2545 = vmatprep.subr.mxu0 0.0
  %2546 = vmatpush1.msra.mxu0 %v56
  %2547 = vmatprep.subr.mxu0 0.0
  %2548 = vmatpush1.msra.mxu0 %v55
  %2549 = vmatprep.subr.mxu0 0.0
  %2550 = vmatpush1.msra.mxu0 %v54
  %2551 = vmatprep.subr.mxu0 0.0
  %2552 = vmatpush1.msra.mxu0 %v53
  %2553 = vmatprep.subr.mxu0 0.0
  %2554 = vmatpush1.msra.mxu0 %v52
  %2555 = vmatprep.subr.mxu0 0.0
  %2556 = vmatpush1.msra.mxu0 %v51
  %2557 = vmatprep.subr.mxu0 0.0
  %2558 = vmatpush2.msra.mxu0 0.0
  %2559 = vmatprep.subr.mxu0 0.0
  %2560 = vmatpush2.msra.mxu0 0.0
  %2561 = vmatprep.subr.mxu0 0.0
  %2562 = vmatpush2.msra.mxu0 0.0
  %2563 = vmatprep.subr.mxu0 0.0
  %2564 = vmatpush2.msra.mxu0 0.0
  %2565 = vmatprep.subr.mxu0 0.0
  %2566 = vmatpush2.msra.mxu0 0.0
  %2567 = vmatprep.subr.mxu0 0.0
  %2568 = vmatpush2.msra.mxu0 0.0
  %2569 = vmatprep.subr.mxu0 0.0
  %2570 = vmatpush2.msra.mxu0 0.0
  %2571 = vmatprep.subr.mxu0 0.0
  %2572 = vmatpush2.msra.mxu0 0.0
  %2573 = vmatprep.subr.mxu0 0.0
  %2574 = vmatpush2.msra.mxu0 0.0
  %2575 = vmatprep.subr.mxu0 0.0
  %2576 = vmatpush2.msra.mxu0 0.0
  %2577 = vmatprep.subr.mxu0 0.0
  %2578 = vmatpush2.msra.mxu0 0.0
  %2579 = vmatprep.subr.mxu0 0.0
  %2580 = vmatpush2.msra.mxu0 0.0
  %2581 = vmatprep.subr.mxu0 0.0
  %2582 = vmatpush2.msra.mxu0 0.0
  %2583 = vmatprep.subr.mxu0 0.0
  %2584 = vmatpush2.msra.mxu0 0.0
  %2585 = vmatprep.subr.mxu0 0.0
  %2586 = vmatpush2.msra.mxu0 0.0
  %2587 = vmatprep.subr.mxu0 0.0
  %2588 = vmatpush2.msra.mxu0 0.0
  %2589 = vmatprep.mubr.f32.mxu0 0.0
  %2590 = vmatmul.mubr.f32.gmra.mxu0 %v2523
  %v2591 = vpop.f32.mrf.mxu0
  %v2592 = vadd.f32 %v179, %v2591
  %v2593 = vpop.f32.mrf.mxu0
  %2594 = vmatprep.mubr.f32.mxu0 0.0
  %2595 = vmatmul.mubr.f32.gmra.mxu0 %v2524
  %v2596 = vpop.f32.mrf.mxu0
  %v2597 = vadd.f32 %v179, %v2596
  %v2598 = vpop.f32.mrf.mxu0
  %2599 = vdwg.mxu0
  %v2600 = vmax.f32 %v2592, 0.0
  %v2601 = vmax.f32 %v2597, 0.0
  %2602 = vmatprep.subr.mxu0 0.0
  %2603 = vmatpush1.msra.mxu0 %v83
  %2604 = vmatprep.subr.mxu0 0.0
  %2605 = vmatpush1.msra.mxu0 %v82
  %2606 = vmatprep.subr.mxu0 0.0
  %2607 = vmatpush1.msra.mxu0 %v81
  %2608 = vmatprep.subr.mxu0 0.0
  %2609 = vmatpush1.msra.mxu0 %v80
  %2610 = vmatprep.subr.mxu0 0.0
  %2611 = vmatpush1.msra.mxu0 %v79
  %2612 = vmatprep.subr.mxu0 0.0
  %2613 = vmatpush1.msra.mxu0 %v78
  %2614 = vmatprep.subr.mxu0 0.0
  %2615 = vmatpush1.msra.mxu0 %v77
  %2616 = vmatprep.subr.mxu0 0.0
  %2617 = vmatpush1.msra.mxu0 %v76
  %2618 = vmatprep.subr.mxu0 0.0
  %2619 = vmatpush1.msra.mxu0 %v75
  %2620 = vmatprep.subr.mxu0 0.0
  %2621 = vmatpush1.msra.mxu0 %v74
  %2622 = vmatprep.subr.mxu0 0.0
  %2623 = vmatpush1.msra.mxu0 %v73
  %2624 = vmatprep.subr.mxu0 0.0
  %2625 = vmatpush1.msra.mxu0 %v72
  %2626 = vmatprep.subr.mxu0 0.0
  %2627 = vmatpush1.msra.mxu0 %v71
  %2628 = vmatprep.subr.mxu0 0.0
  %2629 = vmatpush1.msra.mxu0 %v70
  %2630 = vmatprep.subr.mxu0 0.0
  %2631 = vmatpush1.msra.mxu0 %v69
  %2632 = vmatprep.subr.mxu0 0.0
  %2633 = vmatpush1.msra.mxu0 %v68
  %2634 = vmatprep.subr.mxu0 0.0
  %2635 = vmatpush2.msra.mxu0 0.0
  %2636 = vmatprep.subr.mxu0 0.0
  %2637 = vmatpush2.msra.mxu0 0.0
  %2638 = vmatprep.subr.mxu0 0.0
  %2639 = vmatpush2.msra.mxu0 0.0
  %2640 = vmatprep.subr.mxu0 0.0
  %2641 = vmatpush2.msra.mxu0 0.0
  %2642 = vmatprep.subr.mxu0 0.0
  %2643 = vmatpush2.msra.mxu0 0.0
  %2644 = vmatprep.subr.mxu0 0.0
  %2645 = vmatpush2.msra.mxu0 0.0
  %2646 = vmatprep.subr.mxu0 0.0
  %2647 = vmatpush2.msra.mxu0 0.0
  %2648 = vmatprep.subr.mxu0 0.0
  %2649 = vmatpush2.msra.mxu0 0.0
  %2650 = vmatprep.subr.mxu0 0.0
  %2651 = vmatpush2.msra.mxu0 0.0
  %2652 = vmatprep.subr.mxu0 0.0
  %2653 = vmatpush2.msra.mxu0 0.0
  %2654 = vmatprep.subr.mxu0 0.0
  %2655 = vmatpush2.msra.mxu0 0.0
  %2656 = vmatprep.subr.mxu0 0.0
  %2657 = vmatpush2.msra.mxu0 0.0
  %2658 = vmatprep.subr.mxu0 0.0
  %2659 = vmatpush2.msra.mxu0 0.0
  %2660 = vmatprep.subr.mxu0 0.0
  %2661 = vmatpush2.msra.mxu0 0.0
  %2662 = vmatprep.subr.mxu0 0.0
  %2663 = vmatpush2.msra.mxu0 0.0
  %2664 = vmatprep.subr.mxu0 0.0
  %2665 = vmatpush2.msra.mxu0 0.0
  %2666 = vmatprep.mubr.f32.mxu0 0.0
  %2667 = vmatmul.mubr.f32.gmra.mxu0 %v2600
  %v2668 = vpop.f32.mrf.mxu0
  %v2669 = vadd.f32 %v262, %v2668
  %v2670 = vpop.f32.mrf.mxu0
  %2671 = vmatprep.mubr.f32.mxu0 0.0
  %2672 = vmatmul.mubr.f32.gmra.mxu0 %v2601
  %v2673 = vpop.f32.mrf.mxu0
  %v2674 = vadd.f32 %v262, %v2673
  %v2675 = vpop.f32.mrf.mxu0
  %2676 = vdwg.mxu0
  %s2677 = scalar_lea.vmem %s3, 72
  %v2678 = vld [vmem:[%s2677] sm:$0xff]
  %v2679 = vlaneseq
  %v2680 = vshrl.u32 %v2679, 7
  %v2681 = vsub.s32 0, %v2680
  %v2682 = vrot.slane %v2678, %v2681
  %v2683 = vmul.f32 %v2682, %v2436
  %v2684 = vmul.f32 %v2682, %v2437
  %v2685 = vlaneseq
  %v2686 = vshrl.u32 %v2685, 7
  %v2687 = vsub.s32 1, %v2686
  %v2688 = vrot.slane %v2678, %v2687
  %v2689 = vmul.f32 %v2688, %v2669
  %v2690 = vmul.f32 %v2688, %v2674
  %v2691 = vsub.f32 %v2683, %v2689
  %v2692 = vsub.f32 %v2684, %v2690
  %s2693 = scalar_lea.vmem %s4, 144
  %v2694 = vld [vmem:[%s2693] sm:$0xff]
  %v2695 = vld [vmem:[%s2693 + $0x8] sm:$0xff]
  %v2696 = vadd.f32 %v2691, %v2694
  %v2697 = vadd.f32 %v2692, %v2695
  %2698 = vst [vmem:[%s10] sm:$0xff] %v2696
  %2699 = vst [vmem:[%s10 + $0x8] sm:$0xff] %v2697
  // Predicated region
  $region42: #{sample_pallas.1} parent=0 // pred_check
    _
  $region43: #{sample_pallas.1} parent=0 // pred_check_branch
    %2701 = sbr.rel (0) target = $region45
  $region44: #{sample_pallas.1} parent=0 // pred_region
    _
  $region45: #{sample_pallas.1} parent=0 // pred_fallthru
    _
  // Predicated region
  $region46: #{sample_pallas.1} parent=0 // pred_check
    _
  $region47: #{sample_pallas.1} parent=0 // pred_check_branch
    %2703 = sbr.rel (0) target = $region49
  $region48: #{sample_pallas.1} parent=0 // pred_region
    _
  $region49: #{sample_pallas.1} parent=0 // pred_fallthru
    _

</llo_original>
